<compile_context>
chip_gen: v7x
topology: tpu7x:2x2x1
jax: 0.10.0
libtpu: 0.0.40
codegen_flags: <defaults>
</compile_context>

<pallas_src>
import functools
import math

import jax
import jax.numpy as jnp
from jax.experimental import pallas as pl
from jax.experimental.pallas import tpu as pltpu

EPS = 1e-5  # PyTorch LayerNorm default eps
_F32 = jnp.float32
_BF16 = jnp.bfloat16


def _layernorm(x, w, b):
    mu = jnp.mean(x, axis=-1, keepdims=True)
    var = jnp.mean(jnp.square(x - mu), axis=-1, keepdims=True)
    return (x - mu) * jax.lax.rsqrt(var + EPS) * w + b


def context_decoder_kernel(
    text_ref, visual_ref,
    mem_ln1_w, mem_ln1_b, mem_lin_w, mem_lin_b, mem_ln2_w, mem_ln2_b,
    txt_ln_w, txt_ln_b, txt_lin_w, txt_lin_b,
    in_proj_w, in_proj_b, attn_out_w, attn_out_b,
    out_ln_w, out_ln_b, out_lin_w, out_lin_b,
    out_ref, attn_scr, *, num_heads,
):
    Bb, T, C = text_ref.shape
    _, N, _ = visual_ref.shape
    W = mem_lin_w.shape[1]
    Dh = W // num_heads
    scale = 1.0 / math.sqrt(Dh)
    Rt = Bb * T
    Rm = Bb * N

    # Flatten (batch_block, seq) -> rows so the projections run on big slabs
    # that fill the MXU M dimension.
    txt = text_ref[...].reshape(Rt, C).astype(_F32)
    vis = visual_ref[...].reshape(Rm, C).astype(_F32)

    # memory_proj: LN(C) -> Linear(C, W) -> LN(W); result kept bf16.
    mem = _layernorm(vis, mem_ln1_w[0], mem_ln1_b[0])
    mem = jnp.dot(mem.astype(_BF16), mem_lin_w[...],
                  preferred_element_type=_F32) + mem_lin_b[0]
    mem = _layernorm(mem, mem_ln2_w[0], mem_ln2_b[0]).astype(_BF16)

    # text_proj: LN(C) -> Linear(C, W); result kept bf16.
    x = _layernorm(txt, txt_ln_w[0], txt_ln_b[0])
    x = (jnp.dot(x.astype(_BF16), txt_lin_w[...],
                 preferred_element_type=_F32) + txt_lin_b[0]).astype(_BF16)

    # MHA in-projections: q from text (scaled like PyTorch, after the bias);
    # fused k/v projection from memory (one MXU pass over W -> 2W columns).
    q = (jnp.dot(x, in_proj_w[:, 0:W],
                 preferred_element_type=_F32) + in_proj_b[0, 0:W]) * scale
    kv = (jnp.dot(mem, in_proj_w[:, W:3 * W],
                  preferred_element_type=_F32) + in_proj_b[0, W:3 * W]).astype(_BF16)

    q3 = q.astype(_BF16).reshape(Bb, T, W)
    k3 = kv[:, 0:W].reshape(Bb, N, W)
    v3 = kv[:, W:2 * W].reshape(Bb, N, W)

    # Per-head attention. Each head's result dies at the VMEM store below, so
    # the statically-unrolled loop keeps no cross-head live f32 accumulator.
    # TODO(synk): when N < 128 the softmax only uses N of 128 lanes per vreg;
    # lane-packing several heads' scores would lift VPU/EUP utilization.
    for h in range(num_heads):
        lo, hi = h * Dh, (h + 1) * Dh
        qh = q3[:, :, lo:hi]                                    # (Bb, T, Dh) bf16
        kh = k3[:, :, lo:hi]                                    # (Bb, N, Dh) bf16
        vh = v3[:, :, lo:hi]                                    # (Bb, N, Dh) bf16
        s = jnp.einsum("btd,bnd->btn", qh, kh,
                       preferred_element_type=_F32)             # (Bb, T, N) f32
        s = s - jnp.max(s, axis=-1, keepdims=True)
        p = jnp.exp(s)
        p = p / jnp.sum(p, axis=-1, keepdims=True)              # exact softmax
        oh = jnp.einsum("btn,bnd->btd", p.astype(_BF16), vh,
                        preferred_element_type=_F32)            # (Bb, T, Dh) f32
        attn_scr[:, :, lo:hi] = oh.astype(_BF16)                # flush to VMEM slab

    # Single MHA output projection over the full (Rt, W) slab (K = W, not Dh).
    o = attn_scr[...].reshape(Rt, W)
    y = jnp.dot(o, attn_out_w[...],
                preferred_element_type=_F32) + attn_out_b[0]

    # out_proj: LN(W) -> Linear(W, C)
    y = _layernorm(y, out_ln_w[0], out_ln_b[0])
    out = jnp.dot(y.astype(_BF16), out_lin_w[...],
                  preferred_element_type=_F32) + out_lin_b[0]

    out_ref[...] = out.reshape(Bb, T, C).astype(out_ref.dtype)


PARAM_ORDER = [
    "mem_ln1_w", "mem_ln1_b", "mem_lin_w", "mem_lin_b", "mem_ln2_w", "mem_ln2_b",
    "txt_ln_w", "txt_ln_b", "txt_lin_w", "txt_lin_b",
    "in_proj_w", "in_proj_b", "attn_out_w", "attn_out_b",
    "out_ln_w", "out_ln_b", "out_lin_w", "out_lin_b",
]


def _vmem_budget_bytes():
    """Scoped-VMEM limit derived from the chip: ~75% of physical VMEM.

    v5e/v6e (128 MiB) -> 96 MiB, v7x (64 MiB per TensorCore) -> 48 MiB.
    Falls back to a conservative 48 MiB if the hardware query is unavailable.
    """
    phys = 64 * 1024 * 1024
    try:
        phys = int(pltpu.get_tpu_info().vmem_capacity_bytes)
    except Exception:
        pass
    return min((phys * 3) // 4, 112 * 1024 * 1024)


def _act_vmem_bytes(bb, T, N, C, W, num_heads):
    """Rough upper bound on live per-grid-step activation bytes."""
    del num_heads  # only one head's scores are live at a time
    rt, rm = bb * T, bb * N
    f32, bf16 = 4, 2
    return int(
        2 * f32 * (2 * rt * C + rm * C)            # pipelined text/visual/out blocks (x2 buffers)
        + f32 * (rt * C + rm * C)                  # f32 LayerNorm working slabs
        + bf16 * (rt * W + rm * W)                 # x, mem
        + (f32 + bf16) * (rt * W + rm * 2 * W)     # q and fused kv (f32 epilogue + bf16 copy)
        + 2 * f32 * bb * T * N                     # one head's scores + probs
        + bf16 * rt * W                            # attention-output VMEM scratch
        + f32 * (rt * W + rt * C)                  # y, out
    )


def _pick_batch_block(B, T, N, C, W, num_heads, weight_bytes, vmem_budget,
                      target_rows=512):
    """Pick Bb (divisor of B): fill the MXU M dim, keep grid >= 2, fit VMEM."""
    rows = max(T, N, 1)                              # visual tokens usually dominate
    bb = max(1, min(B, max(1, target_rows // rows)))
    if B > 1:
        bb = min(bb, max(1, B // 2))                 # grid >= 2 -> both v7x TensorCores get work
    while B % bb:
        bb -= 1
    # Shrink until the (single-buffered weights + activations) estimate fits.
    while bb > 1 and weight_bytes + _act_vmem_bytes(bb, T, N, C, W, num_heads) > vmem_budget:
        bb -= 1
        while B % bb:
            bb -= 1
    # NOTE: prime/awkward B can land at bb=1 (Rt == T rows) — still correct,
    # but the MXU M dimension is then under-filled.
    return bb


def context_decoder(text, visual, params, *, num_heads, batch_block=None):
    B, T, C = text.shape
    Bv, N, Cv = visual.shape
    assert Bv == B and Cv == C
    W = params["mem_lin_w"].shape[1]
    assert W % num_heads == 0, "transformer_width must be divisible by num_heads"
    plist = [params[k] for k in PARAM_ORDER]

    vmem_budget = _vmem_budget_bytes()
    weight_bytes = sum(int(p.size) * p.dtype.itemsize for p in plist)
    target_rows = 1024 if vmem_budget >= (80 << 20) else 512   # bigger slabs on v5e/v6e

    Bb = (batch_block if batch_block is not None
          else _pick_batch_block(B, T, N, C, W, num_heads,
                                 weight_bytes, vmem_budget, target_rows))
    assert B % Bb == 0
    grid = (B // Bb,)

    in_specs = [
        pl.BlockSpec((Bb, T, C), lambda b: (b, 0, 0)),   # text block per grid step
        pl.BlockSpec((Bb, N, C), lambda b: (b, 0, 0)),   # visual block per grid step
    ] + [
        # Constant weights: full array, same block index every grid step, and
        # single-buffered (double buffering a never-changing block only doubles
        # its VMEM footprint).
        pl.BlockSpec(p.shape, lambda b, nd=p.ndim: (0,) * nd,
                     pipeline_mode=pl.Buffered(1))
        for p in plist
    ]

    kernel = functools.partial(context_decoder_kernel, num_heads=num_heads)
    return pl.pallas_call(
        kernel,
        out_shape=jax.ShapeDtypeStruct((B, T, C), text.dtype),
        grid_spec=pltpu.PrefetchScalarGridSpec(
            num_scalar_prefetch=0,
            grid=grid,
            in_specs=in_specs,
            out_specs=pl.BlockSpec((Bb, T, C), lambda b: (b, 0, 0)),
            scratch_shapes=[pltpu.VMEM((Bb, T, W), _BF16)],   # per-head output slab
        ),
        compiler_params=pltpu.CompilerParams(
            dimension_semantics=("parallel",),   # batches independent -> dual TC on v7x
            vmem_limit_bytes=int(vmem_budget),
        ),
    )(text, visual, *plist)


def reference_forward(text, visual, params, *, num_heads):
    """Pure-JAX reference mirroring the PyTorch forward (same bf16 matmul casts)."""
    W = params["mem_lin_w"].shape[1]
    Dh = W // num_heads
    scale = 1.0 / math.sqrt(Dh)

    def ln(x, w, b):
        mu = jnp.mean(x, axis=-1, keepdims=True)
        var = jnp.mean(jnp.square(x - mu), axis=-1, keepdims=True)
        return (x - mu) * jax.lax.rsqrt(var + EPS) * w + b

    def mm(a, w):
        return jnp.dot(a.astype(_BF16), w.astype(_BF16),
                       preferred_element_type=_F32)

    mem = ln(visual, params["mem_ln1_w"][0], params["mem_ln1_b"][0])
    mem = mm(mem, params["mem_lin_w"]) + params["mem_lin_b"][0]
    mem = ln(mem, params["mem_ln2_w"][0], params["mem_ln2_b"][0])

    x = ln(text, params["txt_ln_w"][0], params["txt_ln_b"][0])
    x = mm(x, params["txt_lin_w"]) + params["txt_lin_b"][0]

    ipw, ipb = params["in_proj_w"], params["in_proj_b"][0]
    q = (mm(x, ipw[:, 0 * W:1 * W]) + ipb[0 * W:1 * W]) * scale   # scale q, like PyTorch
    k = mm(mem, ipw[:, 1 * W:2 * W]) + ipb[1 * W:2 * W]
    v = mm(mem, ipw[:, 2 * W:3 * W]) + ipb[2 * W:3 * W]

    B, T, _ = q.shape
    N = k.shape[1]
    qh = q.reshape(B, T, num_heads, Dh).transpose(0, 2, 1, 3)
    kh = k.reshape(B, N, num_heads, Dh).transpose(0, 2, 1, 3)
    vh = v.reshape(B, N, num_heads, Dh).transpose(0, 2, 1, 3)
    s = jnp.einsum("bhtd,bhnd->bhtn", qh.astype(_BF16), kh.astype(_BF16),
                   preferred_element_type=_F32)
    p = jax.nn.softmax(s, axis=-1)
    o = jnp.einsum("bhtn,bhnd->bhtd", p.astype(_BF16), vh.astype(_BF16),
                   preferred_element_type=_F32)
    o = o.transpose(0, 2, 1, 3).reshape(B, T, W)

    y = mm(o, params["attn_out_w"]) + params["attn_out_b"][0]
    y = ln(y, params["out_ln_w"][0], params["out_ln_b"][0])
    return mm(y, params["out_lin_w"]) + params["out_lin_b"][0]


def make_params(key, visual_dim, width):
    ks = jax.random.split(key, 5)
    std = 0.02

    def w(k, shape):  # matmul weights stored bf16 (fed straight to the MXU)
        return (std * jax.random.normal(k, shape, _F32)).astype(_BF16)

    return {
        # memory_proj
        "mem_ln1_w": jnp.ones((1, visual_dim), _F32),
        "mem_ln1_b": jnp.zeros((1, visual_dim), _F32),
        "mem_lin_w": w(ks[0], (visual_dim, width)),
        "mem_lin_b": jnp.zeros((1, width), _F32),
        "mem_ln2_w": jnp.ones((1, width), _F32),
        "mem_ln2_b": jnp.zeros((1, width), _F32),
        # text_proj
        "txt_ln_w": jnp.ones((1, visual_dim), _F32),
        "txt_ln_b": jnp.zeros((1, visual_dim), _F32),
        "txt_lin_w": w(ks[1], (visual_dim, width)),
        "txt_lin_b": jnp.zeros((1, width), _F32),
        # MultiheadAttention (packed qkv in-proj + output proj)
        "in_proj_w": w(ks[2], (width, 3 * width)),
        "in_proj_b": jnp.zeros((1, 3 * width), _F32),
        "attn_out_w": w(ks[3], (width, width)),
        "attn_out_b": jnp.zeros((1, width), _F32),
        # out_proj
        "out_ln_w": jnp.ones((1, width), _F32),
        "out_ln_b": jnp.zeros((1, width), _F32),
        "out_lin_w": w(ks[4], (width, visual_dim)),
        "out_lin_b": jnp.zeros((1, visual_dim), _F32),
    }


if __name__ == "__main__":
    # Small but lane-dense shapes (feature dims multiples of 128).
    B, T, N = 2, 16, 32
    visual_dim, width, heads = 128, 128, 8   # Dh = 16, same ratio as the module default

    key = jax.random.PRNGKey(0)
    k_txt, k_vis, k_par = jax.random.split(key, 3)
    text = jax.random.normal(k_txt, (B, T, visual_dim), _F32)
    visual = jax.random.normal(k_vis, (B, N, visual_dim), _F32)
    params = make_params(k_par, visual_dim, width)

    out = context_decoder(text, visual, params, num_heads=heads)
    out = jax.block_until_ready(out)
    assert out.shape == (B, T, visual_dim)

    ref = reference_forward(text, visual, params, num_heads=heads)
    max_diff = float(jnp.max(jnp.abs(out - ref)))
    assert jnp.allclose(out, ref, atol=1e-2, rtol=1e-2), (
        "mismatch vs JAX reference, max abs diff = %g" % max_diff)

    print("KERNEL_OK")
</pallas_src>

<mosaic_0001>
module attributes {stable_mosaic.version = 11 : i64} {
  func.func @context_decoder_kernel(%arg0: i32, %arg1: memref<1x16x128xf32, #tpu.memory_space<vmem>>, %arg2: memref<1x32x128xf32, #tpu.memory_space<vmem>>, %arg3: memref<1x128xf32, #tpu.memory_space<vmem>>, %arg4: memref<1x128xf32, #tpu.memory_space<vmem>>, %arg5: memref<128x128xbf16, #tpu.memory_space<vmem>>, %arg6: memref<1x128xf32, #tpu.memory_space<vmem>>, %arg7: memref<1x128xf32, #tpu.memory_space<vmem>>, %arg8: memref<1x128xf32, #tpu.memory_space<vmem>>, %arg9: memref<1x128xf32, #tpu.memory_space<vmem>>, %arg10: memref<1x128xf32, #tpu.memory_space<vmem>>, %arg11: memref<128x128xbf16, #tpu.memory_space<vmem>>, %arg12: memref<1x128xf32, #tpu.memory_space<vmem>>, %arg13: memref<128x384xbf16, #tpu.memory_space<vmem>>, %arg14: memref<1x384xf32, #tpu.memory_space<vmem>>, %arg15: memref<128x128xbf16, #tpu.memory_space<vmem>>, %arg16: memref<1x128xf32, #tpu.memory_space<vmem>>, %arg17: memref<1x128xf32, #tpu.memory_space<vmem>>, %arg18: memref<1x128xf32, #tpu.memory_space<vmem>>, %arg19: memref<128x128xbf16, #tpu.memory_space<vmem>>, %arg20: memref<1x128xf32, #tpu.memory_space<vmem>>, %arg21: memref<1x16x128xf32, #tpu.memory_space<vmem>>, %arg22: memref<1x16x128xbf16, #tpu.memory_space<vmem>>) attributes {dimension_semantics = [#tpu.dimension_semantics<parallel>], iteration_bounds = array<i64: 2>, scalar_prefetch = 0 : i64, scratch_operands = 1 : i64, tpu.core_type = #tpu.core_type<tc>, window_params = [{transform_indices = @transform_0, window_bounds = array<i64: 1, 16, 128>}, {transform_indices = @transform_1, window_bounds = array<i64: 1, 32, 128>}, {pipeline_mode = #tpu.pipeline_mode<synchronous>, transform_indices = @transform_2, window_bounds = array<i64: 1, 128>}, {pipeline_mode = #tpu.pipeline_mode<synchronous>, transform_indices = @transform_3, window_bounds = array<i64: 1, 128>}, {pipeline_mode = #tpu.pipeline_mode<synchronous>, transform_indices = @transform_4, window_bounds = array<i64: 128, 128>}, {pipeline_mode = #tpu.pipeline_mode<synchronous>, transform_indices = @transform_5, window_bounds = array<i64: 1, 128>}, {pipeline_mode = #tpu.pipeline_mode<synchronous>, transform_indices = @transform_6, window_bounds = array<i64: 1, 128>}, {pipeline_mode = #tpu.pipeline_mode<synchronous>, transform_indices = @transform_7, window_bounds = array<i64: 1, 128>}, {pipeline_mode = #tpu.pipeline_mode<synchronous>, transform_indices = @transform_8, window_bounds = array<i64: 1, 128>}, {pipeline_mode = #tpu.pipeline_mode<synchronous>, transform_indices = @transform_9, window_bounds = array<i64: 1, 128>}, {pipeline_mode = #tpu.pipeline_mode<synchronous>, transform_indices = @transform_10, window_bounds = array<i64: 128, 128>}, {pipeline_mode = #tpu.pipeline_mode<synchronous>, transform_indices = @transform_11, window_bounds = array<i64: 1, 128>}, {pipeline_mode = #tpu.pipeline_mode<synchronous>, transform_indices = @transform_12, window_bounds = array<i64: 128, 384>}, {pipeline_mode = #tpu.pipeline_mode<synchronous>, transform_indices = @transform_13, window_bounds = array<i64: 1, 384>}, {pipeline_mode = #tpu.pipeline_mode<synchronous>, transform_indices = @transform_14, window_bounds = array<i64: 128, 128>}, {pipeline_mode = #tpu.pipeline_mode<synchronous>, transform_indices = @transform_15, window_bounds = array<i64: 1, 128>}, {pipeline_mode = #tpu.pipeline_mode<synchronous>, transform_indices = @transform_16, window_bounds = array<i64: 1, 128>}, {pipeline_mode = #tpu.pipeline_mode<synchronous>, transform_indices = @transform_17, window_bounds = array<i64: 1, 128>}, {pipeline_mode = #tpu.pipeline_mode<synchronous>, transform_indices = @transform_18, window_bounds = array<i64: 128, 128>}, {pipeline_mode = #tpu.pipeline_mode<synchronous>, transform_indices = @transform_19, window_bounds = array<i64: 1, 128>}, {transform_indices = @transform_20, window_bounds = array<i64: 1, 16, 128>}]} {
    %c0 = arith.constant 0 : index
    %c0_0 = arith.constant 0 : index
    %c0_1 = arith.constant 0 : index
    %0 = vector.load %arg1[%c0, %c0_0, %c0_1] : memref<1x16x128xf32, #tpu.memory_space<vmem>>, vector<1x16x128xf32>
    %1 = vector.shape_cast %0 : vector<1x16x128xf32> to vector<16x128xf32>
    %c0_2 = arith.constant 0 : index
    %c0_3 = arith.constant 0 : index
    %c0_4 = arith.constant 0 : index
    %2 = vector.load %arg2[%c0_2, %c0_3, %c0_4] : memref<1x32x128xf32, #tpu.memory_space<vmem>>, vector<1x32x128xf32>
    %3 = vector.shape_cast %2 : vector<1x32x128xf32> to vector<32x128xf32>
    %c0_5 = arith.constant 0 : index
    %c0_6 = arith.constant 0 : index
    %4 = vector.load %arg3[%c0_5, %c0_6] : memref<1x128xf32, #tpu.memory_space<vmem>>, vector<1x128xf32>
    %5 = vector.shape_cast %4 : vector<1x128xf32> to vector<128xf32>
    %c0_7 = arith.constant 0 : index
    %c0_8 = arith.constant 0 : index
    %6 = vector.load %arg4[%c0_7, %c0_8] : memref<1x128xf32, #tpu.memory_space<vmem>>, vector<1x128xf32>
    %7 = vector.shape_cast %6 : vector<1x128xf32> to vector<128xf32>
    %cst = arith.constant dense<0.000000e+00> : vector<32xf32>
    %8 = vector.multi_reduction <add>, %3, %cst [1] : vector<32x128xf32> to vector<32xf32>
    %9 = vector.shape_cast %8 : vector<32xf32> to vector<32x1xf32>
    %cst_9 = arith.constant 1.280000e+02 : f32
    %10 = vector.broadcast %cst_9 : f32 to vector<32x1xf32>
    %11 = arith.divf %9, %10 : vector<32x1xf32>
    %12 = vector.broadcast %11 : vector<32x1xf32> to vector<32x128xf32>
    %13 = arith.subf %3, %12 : vector<32x128xf32>
    %14 = arith.mulf %13, %13 : vector<32x128xf32>
    %cst_10 = arith.constant dense<0.000000e+00> : vector<32xf32>
    %15 = vector.multi_reduction <add>, %14, %cst_10 [1] : vector<32x128xf32> to vector<32xf32>
    %16 = vector.shape_cast %15 : vector<32xf32> to vector<32x1xf32>
    %cst_11 = arith.constant 1.280000e+02 : f32
    %17 = vector.broadcast %cst_11 : f32 to vector<32x1xf32>
    %18 = arith.divf %16, %17 : vector<32x1xf32>
    %19 = vector.broadcast %11 : vector<32x1xf32> to vector<32x128xf32>
    %20 = arith.subf %3, %19 : vector<32x128xf32>
    %cst_12 = arith.constant 9.99999974E-6 : f32
    %21 = vector.broadcast %cst_12 : f32 to vector<32x1xf32>
    %22 = arith.addf %18, %21 : vector<32x1xf32>
    %23 = math.rsqrt %22 : vector<32x1xf32>
    %24 = vector.broadcast %23 : vector<32x1xf32> to vector<32x128xf32>
    %25 = arith.mulf %20, %24 : vector<32x128xf32>
    %26 = vector.shape_cast %5 : vector<128xf32> to vector<1x128xf32>
    %27 = vector.broadcast %26 : vector<1x128xf32> to vector<32x128xf32>
    %28 = arith.mulf %25, %27 : vector<32x128xf32>
    %29 = vector.shape_cast %7 : vector<128xf32> to vector<1x128xf32>
    %30 = vector.broadcast %29 : vector<1x128xf32> to vector<32x128xf32>
    %31 = arith.addf %28, %30 : vector<32x128xf32>
    %32 = arith.truncf %31 : vector<32x128xf32> to vector<32x128xbf16>
    %c0_13 = arith.constant 0 : index
    %c0_14 = arith.constant 0 : index
    %33 = vector.load %arg5[%c0_13, %c0_14] : memref<128x128xbf16, #tpu.memory_space<vmem>>, vector<128x128xbf16>
    %cst_15 = arith.constant dense<0.000000e+00> : vector<32x128xf32>
    %34 = tpu.matmul %32, %33, %cst_15 {dimension_numbers = #tpu.dot_dimension_numbers<[1], [0], [0], [1], [0, 0, 1, 1], [], []>} : vector<32x128xbf16>, vector<128x128xbf16>, vector<32x128xf32> -> vector<32x128xf32>
    %c0_16 = arith.constant 0 : index
    %c0_17 = arith.constant 0 : index
    %35 = vector.load %arg6[%c0_16, %c0_17] : memref<1x128xf32, #tpu.memory_space<vmem>>, vector<1x128xf32>
    %36 = vector.shape_cast %35 : vector<1x128xf32> to vector<128xf32>
    %37 = vector.shape_cast %36 : vector<128xf32> to vector<1x128xf32>
    %38 = vector.broadcast %37 : vector<1x128xf32> to vector<32x128xf32>
    %39 = arith.addf %34, %38 : vector<32x128xf32>
    %c0_18 = arith.constant 0 : index
    %c0_19 = arith.constant 0 : index
    %40 = vector.load %arg7[%c0_18, %c0_19] : memref<1x128xf32, #tpu.memory_space<vmem>>, vector<1x128xf32>
    %41 = vector.shape_cast %40 : vector<1x128xf32> to vector<128xf32>
    %c0_20 = arith.constant 0 : index
    %c0_21 = arith.constant 0 : index
    %42 = vector.load %arg8[%c0_20, %c0_21] : memref<1x128xf32, #tpu.memory_space<vmem>>, vector<1x128xf32>
    %43 = vector.shape_cast %42 : vector<1x128xf32> to vector<128xf32>
    %cst_22 = arith.constant dense<0.000000e+00> : vector<32xf32>
    %44 = vector.multi_reduction <add>, %39, %cst_22 [1] : vector<32x128xf32> to vector<32xf32>
    %45 = vector.shape_cast %44 : vector<32xf32> to vector<32x1xf32>
    %cst_23 = arith.constant 1.280000e+02 : f32
    %46 = vector.broadcast %cst_23 : f32 to vector<32x1xf32>
    %47 = arith.divf %45, %46 : vector<32x1xf32>
    %48 = vector.broadcast %47 : vector<32x1xf32> to vector<32x128xf32>
    %49 = arith.subf %39, %48 : vector<32x128xf32>
    %50 = arith.mulf %49, %49 : vector<32x128xf32>
    %cst_24 = arith.constant dense<0.000000e+00> : vector<32xf32>
    %51 = vector.multi_reduction <add>, %50, %cst_24 [1] : vector<32x128xf32> to vector<32xf32>
    %52 = vector.shape_cast %51 : vector<32xf32> to vector<32x1xf32>
    %cst_25 = arith.constant 1.280000e+02 : f32
    %53 = vector.broadcast %cst_25 : f32 to vector<32x1xf32>
    %54 = arith.divf %52, %53 : vector<32x1xf32>
    %55 = vector.broadcast %47 : vector<32x1xf32> to vector<32x128xf32>
    %56 = arith.subf %39, %55 : vector<32x128xf32>
    %cst_26 = arith.constant 9.99999974E-6 : f32
    %57 = vector.broadcast %cst_26 : f32 to vector<32x1xf32>
    %58 = arith.addf %54, %57 : vector<32x1xf32>
    %59 = math.rsqrt %58 : vector<32x1xf32>
    %60 = vector.broadcast %59 : vector<32x1xf32> to vector<32x128xf32>
    %61 = arith.mulf %56, %60 : vector<32x128xf32>
    %62 = vector.shape_cast %41 : vector<128xf32> to vector<1x128xf32>
    %63 = vector.broadcast %62 : vector<1x128xf32> to vector<32x128xf32>
    %64 = arith.mulf %61, %63 : vector<32x128xf32>
    %65 = vector.shape_cast %43 : vector<128xf32> to vector<1x128xf32>
    %66 = vector.broadcast %65 : vector<1x128xf32> to vector<32x128xf32>
    %67 = arith.addf %64, %66 : vector<32x128xf32>
    %68 = arith.truncf %67 : vector<32x128xf32> to vector<32x128xbf16>
    %c0_27 = arith.constant 0 : index
    %c0_28 = arith.constant 0 : index
    %69 = vector.load %arg9[%c0_27, %c0_28] : memref<1x128xf32, #tpu.memory_space<vmem>>, vector<1x128xf32>
    %70 = vector.shape_cast %69 : vector<1x128xf32> to vector<128xf32>
    %c0_29 = arith.constant 0 : index
    %c0_30 = arith.constant 0 : index
    %71 = vector.load %arg10[%c0_29, %c0_30] : memref<1x128xf32, #tpu.memory_space<vmem>>, vector<1x128xf32>
    %72 = vector.shape_cast %71 : vector<1x128xf32> to vector<128xf32>
    %cst_31 = arith.constant dense<0.000000e+00> : vector<16xf32>
    %73 = vector.multi_reduction <add>, %1, %cst_31 [1] : vector<16x128xf32> to vector<16xf32>
    %74 = vector.shape_cast %73 : vector<16xf32> to vector<16x1xf32>
    %cst_32 = arith.constant 1.280000e+02 : f32
    %75 = vector.broadcast %cst_32 : f32 to vector<16x1xf32>
    %76 = arith.divf %74, %75 : vector<16x1xf32>
    %77 = vector.broadcast %76 : vector<16x1xf32> to vector<16x128xf32>
    %78 = arith.subf %1, %77 : vector<16x128xf32>
    %79 = arith.mulf %78, %78 : vector<16x128xf32>
    %cst_33 = arith.constant dense<0.000000e+00> : vector<16xf32>
    %80 = vector.multi_reduction <add>, %79, %cst_33 [1] : vector<16x128xf32> to vector<16xf32>
    %81 = vector.shape_cast %80 : vector<16xf32> to vector<16x1xf32>
    %cst_34 = arith.constant 1.280000e+02 : f32
    %82 = vector.broadcast %cst_34 : f32 to vector<16x1xf32>
    %83 = arith.divf %81, %82 : vector<16x1xf32>
    %84 = vector.broadcast %76 : vector<16x1xf32> to vector<16x128xf32>
    %85 = arith.subf %1, %84 : vector<16x128xf32>
    %cst_35 = arith.constant 9.99999974E-6 : f32
    %86 = vector.broadcast %cst_35 : f32 to vector<16x1xf32>
    %87 = arith.addf %83, %86 : vector<16x1xf32>
    %88 = math.rsqrt %87 : vector<16x1xf32>
    %89 = vector.broadcast %88 : vector<16x1xf32> to vector<16x128xf32>
    %90 = arith.mulf %85, %89 : vector<16x128xf32>
    %91 = vector.shape_cast %70 : vector<128xf32> to vector<1x128xf32>
    %92 = vector.broadcast %91 : vector<1x128xf32> to vector<16x128xf32>
    %93 = arith.mulf %90, %92 : vector<16x128xf32>
    %94 = vector.shape_cast %72 : vector<128xf32> to vector<1x128xf32>
    %95 = vector.broadcast %94 : vector<1x128xf32> to vector<16x128xf32>
    %96 = arith.addf %93, %95 : vector<16x128xf32>
    %97 = arith.truncf %96 : vector<16x128xf32> to vector<16x128xbf16>
    %c0_36 = arith.constant 0 : index
    %c0_37 = arith.constant 0 : index
    %98 = vector.load %arg11[%c0_36, %c0_37] : memref<128x128xbf16, #tpu.memory_space<vmem>>, vector<128x128xbf16>
    %cst_38 = arith.constant dense<0.000000e+00> : vector<16x128xf32>
    %99 = tpu.matmul %97, %98, %cst_38 {dimension_numbers = #tpu.dot_dimension_numbers<[1], [0], [0], [1], [0, 0, 1, 1], [], []>} : vector<16x128xbf16>, vector<128x128xbf16>, vector<16x128xf32> -> vector<16x128xf32>
    %c0_39 = arith.constant 0 : index
    %c0_40 = arith.constant 0 : index
    %100 = vector.load %arg12[%c0_39, %c0_40] : memref<1x128xf32, #tpu.memory_space<vmem>>, vector<1x128xf32>
    %101 = vector.shape_cast %100 : vector<1x128xf32> to vector<128xf32>
    %102 = vector.shape_cast %101 : vector<128xf32> to vector<1x128xf32>
    %103 = vector.broadcast %102 : vector<1x128xf32> to vector<16x128xf32>
    %104 = arith.addf %99, %103 : vector<16x128xf32>
    %105 = arith.truncf %104 : vector<16x128xf32> to vector<16x128xbf16>
    %c0_41 = arith.constant 0 : index
    %c0_42 = arith.constant 0 : index
    %106 = vector.load %arg13[%c0_41, %c0_42] : memref<128x384xbf16, #tpu.memory_space<vmem>>, vector<128x128xbf16>
    %cst_43 = arith.constant dense<0.000000e+00> : vector<16x128xf32>
    %107 = tpu.matmul %105, %106, %cst_43 {dimension_numbers = #tpu.dot_dimension_numbers<[1], [0], [0], [1], [0, 0, 1, 1], [], []>} : vector<16x128xbf16>, vector<128x128xbf16>, vector<16x128xf32> -> vector<16x128xf32>
    %c0_44 = arith.constant 0 : index
    %c0_45 = arith.constant 0 : index
    %108 = vector.load %arg14[%c0_44, %c0_45] : memref<1x384xf32, #tpu.memory_space<vmem>>, vector<1x128xf32>
    %109 = vector.shape_cast %108 : vector<1x128xf32> to vector<128xf32>
    %110 = vector.shape_cast %109 : vector<128xf32> to vector<1x128xf32>
    %111 = vector.broadcast %110 : vector<1x128xf32> to vector<16x128xf32>
    %112 = arith.addf %107, %111 : vector<16x128xf32>
    %cst_46 = arith.constant 2.500000e-01 : f32
    %113 = vector.broadcast %cst_46 : f32 to vector<16x128xf32>
    %114 = arith.mulf %112, %113 : vector<16x128xf32>
    %c0_47 = arith.constant 0 : index
    %c128 = arith.constant 128 : index
    %115 = vector.load %arg13[%c0_47, %c128] : memref<128x384xbf16, #tpu.memory_space<vmem>>, vector<128x256xbf16>
    %cst_48 = arith.constant dense<0.000000e+00> : vector<32x256xf32>
    %116 = tpu.matmul %68, %115, %cst_48 {dimension_numbers = #tpu.dot_dimension_numbers<[1], [0], [0], [1], [0, 0, 1, 1], [], []>} : vector<32x128xbf16>, vector<128x256xbf16>, vector<32x256xf32> -> vector<32x256xf32>
    %c0_49 = arith.constant 0 : index
    %c128_50 = arith.constant 128 : index
    %117 = vector.load %arg14[%c0_49, %c128_50] : memref<1x384xf32, #tpu.memory_space<vmem>>, vector<1x256xf32>
    %118 = vector.shape_cast %117 : vector<1x256xf32> to vector<256xf32>
    %119 = vector.shape_cast %118 : vector<256xf32> to vector<1x256xf32>
    %120 = vector.broadcast %119 : vector<1x256xf32> to vector<32x256xf32>
    %121 = arith.addf %116, %120 : vector<32x256xf32>
    %122 = arith.truncf %121 : vector<32x256xf32> to vector<32x256xbf16>
    %123 = arith.truncf %114 : vector<16x128xf32> to vector<16x128xbf16>
    %124 = vector.shape_cast %123 : vector<16x128xbf16> to vector<1x16x128xbf16>
    %125 = vector.extract_strided_slice %122 {offsets = [0, 0], sizes = [32, 128], strides = [1, 1]} : vector<32x256xbf16> to vector<32x128xbf16>
    %126 = vector.shape_cast %125 : vector<32x128xbf16> to vector<1x32x128xbf16>
    %127 = vector.extract_strided_slice %122 {offsets = [0, 128], sizes = [32, 128], strides = [1, 1]} : vector<32x256xbf16> to vector<32x128xbf16>
    %128 = vector.shape_cast %127 : vector<32x128xbf16> to vector<1x32x128xbf16>
    %129 = vector.extract_strided_slice %124 {offsets = [0, 0, 0], sizes = [1, 16, 16], strides = [1, 1, 1]} : vector<1x16x128xbf16> to vector<1x16x16xbf16>
    %130 = vector.extract_strided_slice %126 {offsets = [0, 0, 0], sizes = [1, 32, 16], strides = [1, 1, 1]} : vector<1x32x128xbf16> to vector<1x32x16xbf16>
    %131 = vector.extract_strided_slice %128 {offsets = [0, 0, 0], sizes = [1, 32, 16], strides = [1, 1, 1]} : vector<1x32x128xbf16> to vector<1x32x16xbf16>
    "tpu.trace_start"() <{level = 10 : i32, message = "btd,bnd->btn"}> : () -> ()
    %cst_51 = arith.constant dense<0.000000e+00> : vector<1x16x32xf32>
    %132 = tpu.matmul %129, %130, %cst_51 {dimension_numbers = #tpu.dot_dimension_numbers<[2], [2], [1], [1], [0, 0, 0, 1, 1, 1], [0], [0]>} : vector<1x16x16xbf16>, vector<1x32x16xbf16>, vector<1x16x32xf32> -> vector<1x16x32xf32>
    "tpu.trace_stop"() : () -> ()
    %cst_52 = arith.constant dense<0xFF800000> : vector<1x16xf32>
    %133 = vector.multi_reduction <maximumf>, %132, %cst_52 [2] : vector<1x16x32xf32> to vector<1x16xf32>
    %134 = vector.shape_cast %133 : vector<1x16xf32> to vector<1x16x1xf32>
    %135 = vector.broadcast %134 : vector<1x16x1xf32> to vector<1x16x32xf32>
    %136 = arith.subf %132, %135 : vector<1x16x32xf32>
    %137 = math.exp %136 : vector<1x16x32xf32>
    %cst_53 = arith.constant dense<0.000000e+00> : vector<1x16xf32>
    %138 = vector.multi_reduction <add>, %137, %cst_53 [2] : vector<1x16x32xf32> to vector<1x16xf32>
    %139 = vector.shape_cast %138 : vector<1x16xf32> to vector<1x16x1xf32>
    %140 = vector.broadcast %139 : vector<1x16x1xf32> to vector<1x16x32xf32>
    %141 = arith.divf %137, %140 : vector<1x16x32xf32>
    %142 = arith.truncf %141 : vector<1x16x32xf32> to vector<1x16x32xbf16>
    "tpu.trace_start"() <{level = 10 : i32, message = "btn,bnd->btd"}> : () -> ()
    %cst_54 = arith.constant dense<0.000000e+00> : vector<1x16x16xf32>
    %143 = tpu.matmul %142, %131, %cst_54 {dimension_numbers = #tpu.dot_dimension_numbers<[2], [1], [1], [2], [0, 0, 0, 1, 1, 2], [0], [0]>} : vector<1x16x32xbf16>, vector<1x32x16xbf16>, vector<1x16x16xf32> -> vector<1x16x16xf32>
    "tpu.trace_stop"() : () -> ()
    %144 = arith.truncf %143 : vector<1x16x16xf32> to vector<1x16x16xbf16>
    %c0_55 = arith.constant 0 : index
    %c0_56 = arith.constant 0 : index
    %c0_57 = arith.constant 0 : index
    %145 = vector.load %arg22[%c0_55, %c0_56, %c0_57] : memref<1x16x128xbf16, #tpu.memory_space<vmem>>, vector<1x16x16xbf16>
    tpu.vector_store %arg22[%c0_55, %c0_56, %c0_57], %144 {strides = array<i32>} : memref<1x16x128xbf16, #tpu.memory_space<vmem>>, vector<1x16x16xbf16>,
    %146 = vector.extract_strided_slice %124 {offsets = [0, 0, 16], sizes = [1, 16, 16], strides = [1, 1, 1]} : vector<1x16x128xbf16> to vector<1x16x16xbf16>
    %147 = vector.extract_strided_slice %126 {offsets = [0, 0, 16], sizes = [1, 32, 16], strides = [1, 1, 1]} : vector<1x32x128xbf16> to vector<1x32x16xbf16>
    %148 = vector.extract_strided_slice %128 {offsets = [0, 0, 16], sizes = [1, 32, 16], strides = [1, 1, 1]} : vector<1x32x128xbf16> to vector<1x32x16xbf16>
    "tpu.trace_start"() <{level = 10 : i32, message = "btd,bnd->btn"}> : () -> ()
    %cst_58 = arith.constant dense<0.000000e+00> : vector<1x16x32xf32>
    %149 = tpu.matmul %146, %147, %cst_58 {dimension_numbers = #tpu.dot_dimension_numbers<[2], [2], [1], [1], [0, 0, 0, 1, 1, 1], [0], [0]>} : vector<1x16x16xbf16>, vector<1x32x16xbf16>, vector<1x16x32xf32> -> vector<1x16x32xf32>
    "tpu.trace_stop"() : () -> ()
    %cst_59 = arith.constant dense<0xFF800000> : vector<1x16xf32>
    %150 = vector.multi_reduction <maximumf>, %149, %cst_59 [2] : vector<1x16x32xf32> to vector<1x16xf32>
    %151 = vector.shape_cast %150 : vector<1x16xf32> to vector<1x16x1xf32>
    %152 = vector.broadcast %151 : vector<1x16x1xf32> to vector<1x16x32xf32>
    %153 = arith.subf %149, %152 : vector<1x16x32xf32>
    %154 = math.exp %153 : vector<1x16x32xf32>
    %cst_60 = arith.constant dense<0.000000e+00> : vector<1x16xf32>
    %155 = vector.multi_reduction <add>, %154, %cst_60 [2] : vector<1x16x32xf32> to vector<1x16xf32>
    %156 = vector.shape_cast %155 : vector<1x16xf32> to vector<1x16x1xf32>
    %157 = vector.broadcast %156 : vector<1x16x1xf32> to vector<1x16x32xf32>
    %158 = arith.divf %154, %157 : vector<1x16x32xf32>
    %159 = arith.truncf %158 : vector<1x16x32xf32> to vector<1x16x32xbf16>
    "tpu.trace_start"() <{level = 10 : i32, message = "btn,bnd->btd"}> : () -> ()
    %cst_61 = arith.constant dense<0.000000e+00> : vector<1x16x16xf32>
    %160 = tpu.matmul %159, %148, %cst_61 {dimension_numbers = #tpu.dot_dimension_numbers<[2], [1], [1], [2], [0, 0, 0, 1, 1, 2], [0], [0]>} : vector<1x16x32xbf16>, vector<1x32x16xbf16>, vector<1x16x16xf32> -> vector<1x16x16xf32>
    "tpu.trace_stop"() : () -> ()
    %161 = arith.truncf %160 : vector<1x16x16xf32> to vector<1x16x16xbf16>
    %c0_62 = arith.constant 0 : index
    %c0_63 = arith.constant 0 : index
    %c16 = arith.constant 16 : index
    %162 = vector.load %arg22[%c0_62, %c0_63, %c16] : memref<1x16x128xbf16, #tpu.memory_space<vmem>>, vector<1x16x16xbf16>
    tpu.vector_store %arg22[%c0_62, %c0_63, %c16], %161 {strides = array<i32>} : memref<1x16x128xbf16, #tpu.memory_space<vmem>>, vector<1x16x16xbf16>,
    %163 = vector.extract_strided_slice %124 {offsets = [0, 0, 32], sizes = [1, 16, 16], strides = [1, 1, 1]} : vector<1x16x128xbf16> to vector<1x16x16xbf16>
    %164 = vector.extract_strided_slice %126 {offsets = [0, 0, 32], sizes = [1, 32, 16], strides = [1, 1, 1]} : vector<1x32x128xbf16> to vector<1x32x16xbf16>
    %165 = vector.extract_strided_slice %128 {offsets = [0, 0, 32], sizes = [1, 32, 16], strides = [1, 1, 1]} : vector<1x32x128xbf16> to vector<1x32x16xbf16>
    "tpu.trace_start"() <{level = 10 : i32, message = "btd,bnd->btn"}> : () -> ()
    %cst_64 = arith.constant dense<0.000000e+00> : vector<1x16x32xf32>
    %166 = tpu.matmul %163, %164, %cst_64 {dimension_numbers = #tpu.dot_dimension_numbers<[2], [2], [1], [1], [0, 0, 0, 1, 1, 1], [0], [0]>} : vector<1x16x16xbf16>, vector<1x32x16xbf16>, vector<1x16x32xf32> -> vector<1x16x32xf32>
    "tpu.trace_stop"() : () -> ()
    %cst_65 = arith.constant dense<0xFF800000> : vector<1x16xf32>
    %167 = vector.multi_reduction <maximumf>, %166, %cst_65 [2] : vector<1x16x32xf32> to vector<1x16xf32>
    %168 = vector.shape_cast %167 : vector<1x16xf32> to vector<1x16x1xf32>
    %169 = vector.broadcast %168 : vector<1x16x1xf32> to vector<1x16x32xf32>
    %170 = arith.subf %166, %169 : vector<1x16x32xf32>
    %171 = math.exp %170 : vector<1x16x32xf32>
    %cst_66 = arith.constant dense<0.000000e+00> : vector<1x16xf32>
    %172 = vector.multi_reduction <add>, %171, %cst_66 [2] : vector<1x16x32xf32> to vector<1x16xf32>
    %173 = vector.shape_cast %172 : vector<1x16xf32> to vector<1x16x1xf32>
    %174 = vector.broadcast %173 : vector<1x16x1xf32> to vector<1x16x32xf32>
    %175 = arith.divf %171, %174 : vector<1x16x32xf32>
    %176 = arith.truncf %175 : vector<1x16x32xf32> to vector<1x16x32xbf16>
    "tpu.trace_start"() <{level = 10 : i32, message = "btn,bnd->btd"}> : () -> ()
    %cst_67 = arith.constant dense<0.000000e+00> : vector<1x16x16xf32>
    %177 = tpu.matmul %176, %165, %cst_67 {dimension_numbers = #tpu.dot_dimension_numbers<[2], [1], [1], [2], [0, 0, 0, 1, 1, 2], [0], [0]>} : vector<1x16x32xbf16>, vector<1x32x16xbf16>, vector<1x16x16xf32> -> vector<1x16x16xf32>
    "tpu.trace_stop"() : () -> ()
    %178 = arith.truncf %177 : vector<1x16x16xf32> to vector<1x16x16xbf16>
    %c0_68 = arith.constant 0 : index
    %c0_69 = arith.constant 0 : index
    %c32 = arith.constant 32 : index
    %179 = vector.load %arg22[%c0_68, %c0_69, %c32] : memref<1x16x128xbf16, #tpu.memory_space<vmem>>, vector<1x16x16xbf16>
    tpu.vector_store %arg22[%c0_68, %c0_69, %c32], %178 {strides = array<i32>} : memref<1x16x128xbf16, #tpu.memory_space<vmem>>, vector<1x16x16xbf16>,
    %180 = vector.extract_strided_slice %124 {offsets = [0, 0, 48], sizes = [1, 16, 16], strides = [1, 1, 1]} : vector<1x16x128xbf16> to vector<1x16x16xbf16>
    %181 = vector.extract_strided_slice %126 {offsets = [0, 0, 48], sizes = [1, 32, 16], strides = [1, 1, 1]} : vector<1x32x128xbf16> to vector<1x32x16xbf16>
    %182 = vector.extract_strided_slice %128 {offsets = [0, 0, 48], sizes = [1, 32, 16], strides = [1, 1, 1]} : vector<1x32x128xbf16> to vector<1x32x16xbf16>
    "tpu.trace_start"() <{level = 10 : i32, message = "btd,bnd->btn"}> : () -> ()
    %cst_70 = arith.constant dense<0.000000e+00> : vector<1x16x32xf32>
    %183 = tpu.matmul %180, %181, %cst_70 {dimension_numbers = #tpu.dot_dimension_numbers<[2], [2], [1], [1], [0, 0, 0, 1, 1, 1], [0], [0]>} : vector<1x16x16xbf16>, vector<1x32x16xbf16>, vector<1x16x32xf32> -> vector<1x16x32xf32>
    "tpu.trace_stop"() : () -> ()
    %cst_71 = arith.constant dense<0xFF800000> : vector<1x16xf32>
    %184 = vector.multi_reduction <maximumf>, %183, %cst_71 [2] : vector<1x16x32xf32> to vector<1x16xf32>
    %185 = vector.shape_cast %184 : vector<1x16xf32> to vector<1x16x1xf32>
    %186 = vector.broadcast %185 : vector<1x16x1xf32> to vector<1x16x32xf32>
    %187 = arith.subf %183, %186 : vector<1x16x32xf32>
    %188 = math.exp %187 : vector<1x16x32xf32>
    %cst_72 = arith.constant dense<0.000000e+00> : vector<1x16xf32>
    %189 = vector.multi_reduction <add>, %188, %cst_72 [2] : vector<1x16x32xf32> to vector<1x16xf32>
    %190 = vector.shape_cast %189 : vector<1x16xf32> to vector<1x16x1xf32>
    %191 = vector.broadcast %190 : vector<1x16x1xf32> to vector<1x16x32xf32>
    %192 = arith.divf %188, %191 : vector<1x16x32xf32>
    %193 = arith.truncf %192 : vector<1x16x32xf32> to vector<1x16x32xbf16>
    "tpu.trace_start"() <{level = 10 : i32, message = "btn,bnd->btd"}> : () -> ()
    %cst_73 = arith.constant dense<0.000000e+00> : vector<1x16x16xf32>
    %194 = tpu.matmul %193, %182, %cst_73 {dimension_numbers = #tpu.dot_dimension_numbers<[2], [1], [1], [2], [0, 0, 0, 1, 1, 2], [0], [0]>} : vector<1x16x32xbf16>, vector<1x32x16xbf16>, vector<1x16x16xf32> -> vector<1x16x16xf32>
    "tpu.trace_stop"() : () -> ()
    %195 = arith.truncf %194 : vector<1x16x16xf32> to vector<1x16x16xbf16>
    %c0_74 = arith.constant 0 : index
    %c0_75 = arith.constant 0 : index
    %c48 = arith.constant 48 : index
    %196 = vector.load %arg22[%c0_74, %c0_75, %c48] : memref<1x16x128xbf16, #tpu.memory_space<vmem>>, vector<1x16x16xbf16>
    tpu.vector_store %arg22[%c0_74, %c0_75, %c48], %195 {strides = array<i32>} : memref<1x16x128xbf16, #tpu.memory_space<vmem>>, vector<1x16x16xbf16>,
    %197 = vector.extract_strided_slice %124 {offsets = [0, 0, 64], sizes = [1, 16, 16], strides = [1, 1, 1]} : vector<1x16x128xbf16> to vector<1x16x16xbf16>
    %198 = vector.extract_strided_slice %126 {offsets = [0, 0, 64], sizes = [1, 32, 16], strides = [1, 1, 1]} : vector<1x32x128xbf16> to vector<1x32x16xbf16>
    %199 = vector.extract_strided_slice %128 {offsets = [0, 0, 64], sizes = [1, 32, 16], strides = [1, 1, 1]} : vector<1x32x128xbf16> to vector<1x32x16xbf16>
    "tpu.trace_start"() <{level = 10 : i32, message = "btd,bnd->btn"}> : () -> ()
    %cst_76 = arith.constant dense<0.000000e+00> : vector<1x16x32xf32>
    %200 = tpu.matmul %197, %198, %cst_76 {dimension_numbers = #tpu.dot_dimension_numbers<[2], [2], [1], [1], [0, 0, 0, 1, 1, 1], [0], [0]>} : vector<1x16x16xbf16>, vector<1x32x16xbf16>, vector<1x16x32xf32> -> vector<1x16x32xf32>
    "tpu.trace_stop"() : () -> ()
    %cst_77 = arith.constant dense<0xFF800000> : vector<1x16xf32>
    %201 = vector.multi_reduction <maximumf>, %200, %cst_77 [2] : vector<1x16x32xf32> to vector<1x16xf32>
    %202 = vector.shape_cast %201 : vector<1x16xf32> to vector<1x16x1xf32>
    %203 = vector.broadcast %202 : vector<1x16x1xf32> to vector<1x16x32xf32>
    %204 = arith.subf %200, %203 : vector<1x16x32xf32>
    %205 = math.exp %204 : vector<1x16x32xf32>
    %cst_78 = arith.constant dense<0.000000e+00> : vector<1x16xf32>
    %206 = vector.multi_reduction <add>, %205, %cst_78 [2] : vector<1x16x32xf32> to vector<1x16xf32>
    %207 = vector.shape_cast %206 : vector<1x16xf32> to vector<1x16x1xf32>
    %208 = vector.broadcast %207 : vector<1x16x1xf32> to vector<1x16x32xf32>
    %209 = arith.divf %205, %208 : vector<1x16x32xf32>
    %210 = arith.truncf %209 : vector<1x16x32xf32> to vector<1x16x32xbf16>
    "tpu.trace_start"() <{level = 10 : i32, message = "btn,bnd->btd"}> : () -> ()
    %cst_79 = arith.constant dense<0.000000e+00> : vector<1x16x16xf32>
    %211 = tpu.matmul %210, %199, %cst_79 {dimension_numbers = #tpu.dot_dimension_numbers<[2], [1], [1], [2], [0, 0, 0, 1, 1, 2], [0], [0]>} : vector<1x16x32xbf16>, vector<1x32x16xbf16>, vector<1x16x16xf32> -> vector<1x16x16xf32>
    "tpu.trace_stop"() : () -> ()
    %212 = arith.truncf %211 : vector<1x16x16xf32> to vector<1x16x16xbf16>
    %c0_80 = arith.constant 0 : index
    %c0_81 = arith.constant 0 : index
    %c64 = arith.constant 64 : index
    %213 = vector.load %arg22[%c0_80, %c0_81, %c64] : memref<1x16x128xbf16, #tpu.memory_space<vmem>>, vector<1x16x16xbf16>
    tpu.vector_store %arg22[%c0_80, %c0_81, %c64], %212 {strides = array<i32>} : memref<1x16x128xbf16, #tpu.memory_space<vmem>>, vector<1x16x16xbf16>,
    %214 = vector.extract_strided_slice %124 {offsets = [0, 0, 80], sizes = [1, 16, 16], strides = [1, 1, 1]} : vector<1x16x128xbf16> to vector<1x16x16xbf16>
    %215 = vector.extract_strided_slice %126 {offsets = [0, 0, 80], sizes = [1, 32, 16], strides = [1, 1, 1]} : vector<1x32x128xbf16> to vector<1x32x16xbf16>
    %216 = vector.extract_strided_slice %128 {offsets = [0, 0, 80], sizes = [1, 32, 16], strides = [1, 1, 1]} : vector<1x32x128xbf16> to vector<1x32x16xbf16>
    "tpu.trace_start"() <{level = 10 : i32, message = "btd,bnd->btn"}> : () -> ()
    %cst_82 = arith.constant dense<0.000000e+00> : vector<1x16x32xf32>
    %217 = tpu.matmul %214, %215, %cst_82 {dimension_numbers = #tpu.dot_dimension_numbers<[2], [2], [1], [1], [0, 0, 0, 1, 1, 1], [0], [0]>} : vector<1x16x16xbf16>, vector<1x32x16xbf16>, vector<1x16x32xf32> -> vector<1x16x32xf32>
    "tpu.trace_stop"() : () -> ()
    %cst_83 = arith.constant dense<0xFF800000> : vector<1x16xf32>
    %218 = vector.multi_reduction <maximumf>, %217, %cst_83 [2] : vector<1x16x32xf32> to vector<1x16xf32>
    %219 = vector.shape_cast %218 : vector<1x16xf32> to vector<1x16x1xf32>
    %220 = vector.broadcast %219 : vector<1x16x1xf32> to vector<1x16x32xf32>
    %221 = arith.subf %217, %220 : vector<1x16x32xf32>
    %222 = math.exp %221 : vector<1x16x32xf32>
    %cst_84 = arith.constant dense<0.000000e+00> : vector<1x16xf32>
    %223 = vector.multi_reduction <add>, %222, %cst_84 [2] : vector<1x16x32xf32> to vector<1x16xf32>
    %224 = vector.shape_cast %223 : vector<1x16xf32> to vector<1x16x1xf32>
    %225 = vector.broadcast %224 : vector<1x16x1xf32> to vector<1x16x32xf32>
    %226 = arith.divf %222, %225 : vector<1x16x32xf32>
    %227 = arith.truncf %226 : vector<1x16x32xf32> to vector<1x16x32xbf16>
    "tpu.trace_start"() <{level = 10 : i32, message = "btn,bnd->btd"}> : () -> ()
    %cst_85 = arith.constant dense<0.000000e+00> : vector<1x16x16xf32>
    %228 = tpu.matmul %227, %216, %cst_85 {dimension_numbers = #tpu.dot_dimension_numbers<[2], [1], [1], [2], [0, 0, 0, 1, 1, 2], [0], [0]>} : vector<1x16x32xbf16>, vector<1x32x16xbf16>, vector<1x16x16xf32> -> vector<1x16x16xf32>
    "tpu.trace_stop"() : () -> ()
    %229 = arith.truncf %228 : vector<1x16x16xf32> to vector<1x16x16xbf16>
    %c0_86 = arith.constant 0 : index
    %c0_87 = arith.constant 0 : index
    %c80 = arith.constant 80 : index
    %230 = vector.load %arg22[%c0_86, %c0_87, %c80] : memref<1x16x128xbf16, #tpu.memory_space<vmem>>, vector<1x16x16xbf16>
    tpu.vector_store %arg22[%c0_86, %c0_87, %c80], %229 {strides = array<i32>} : memref<1x16x128xbf16, #tpu.memory_space<vmem>>, vector<1x16x16xbf16>,
    %231 = vector.extract_strided_slice %124 {offsets = [0, 0, 96], sizes = [1, 16, 16], strides = [1, 1, 1]} : vector<1x16x128xbf16> to vector<1x16x16xbf16>
    %232 = vector.extract_strided_slice %126 {offsets = [0, 0, 96], sizes = [1, 32, 16], strides = [1, 1, 1]} : vector<1x32x128xbf16> to vector<1x32x16xbf16>
    %233 = vector.extract_strided_slice %128 {offsets = [0, 0, 96], sizes = [1, 32, 16], strides = [1, 1, 1]} : vector<1x32x128xbf16> to vector<1x32x16xbf16>
    "tpu.trace_start"() <{level = 10 : i32, message = "btd,bnd->btn"}> : () -> ()
    %cst_88 = arith.constant dense<0.000000e+00> : vector<1x16x32xf32>
    %234 = tpu.matmul %231, %232, %cst_88 {dimension_numbers = #tpu.dot_dimension_numbers<[2], [2], [1], [1], [0, 0, 0, 1, 1, 1], [0], [0]>} : vector<1x16x16xbf16>, vector<1x32x16xbf16>, vector<1x16x32xf32> -> vector<1x16x32xf32>
    "tpu.trace_stop"() : () -> ()
    %cst_89 = arith.constant dense<0xFF800000> : vector<1x16xf32>
    %235 = vector.multi_reduction <maximumf>, %234, %cst_89 [2] : vector<1x16x32xf32> to vector<1x16xf32>
    %236 = vector.shape_cast %235 : vector<1x16xf32> to vector<1x16x1xf32>
    %237 = vector.broadcast %236 : vector<1x16x1xf32> to vector<1x16x32xf32>
    %238 = arith.subf %234, %237 : vector<1x16x32xf32>
    %239 = math.exp %238 : vector<1x16x32xf32>
    %cst_90 = arith.constant dense<0.000000e+00> : vector<1x16xf32>
    %240 = vector.multi_reduction <add>, %239, %cst_90 [2] : vector<1x16x32xf32> to vector<1x16xf32>
    %241 = vector.shape_cast %240 : vector<1x16xf32> to vector<1x16x1xf32>
    %242 = vector.broadcast %241 : vector<1x16x1xf32> to vector<1x16x32xf32>
    %243 = arith.divf %239, %242 : vector<1x16x32xf32>
    %244 = arith.truncf %243 : vector<1x16x32xf32> to vector<1x16x32xbf16>
    "tpu.trace_start"() <{level = 10 : i32, message = "btn,bnd->btd"}> : () -> ()
    %cst_91 = arith.constant dense<0.000000e+00> : vector<1x16x16xf32>
    %245 = tpu.matmul %244, %233, %cst_91 {dimension_numbers = #tpu.dot_dimension_numbers<[2], [1], [1], [2], [0, 0, 0, 1, 1, 2], [0], [0]>} : vector<1x16x32xbf16>, vector<1x32x16xbf16>, vector<1x16x16xf32> -> vector<1x16x16xf32>
    "tpu.trace_stop"() : () -> ()
    %246 = arith.truncf %245 : vector<1x16x16xf32> to vector<1x16x16xbf16>
    %c0_92 = arith.constant 0 : index
    %c0_93 = arith.constant 0 : index
    %c96 = arith.constant 96 : index
    %247 = vector.load %arg22[%c0_92, %c0_93, %c96] : memref<1x16x128xbf16, #tpu.memory_space<vmem>>, vector<1x16x16xbf16>
    tpu.vector_store %arg22[%c0_92, %c0_93, %c96], %246 {strides = array<i32>} : memref<1x16x128xbf16, #tpu.memory_space<vmem>>, vector<1x16x16xbf16>,
    %248 = vector.extract_strided_slice %124 {offsets = [0, 0, 112], sizes = [1, 16, 16], strides = [1, 1, 1]} : vector<1x16x128xbf16> to vector<1x16x16xbf16>
    %249 = vector.extract_strided_slice %126 {offsets = [0, 0, 112], sizes = [1, 32, 16], strides = [1, 1, 1]} : vector<1x32x128xbf16> to vector<1x32x16xbf16>
    %250 = vector.extract_strided_slice %128 {offsets = [0, 0, 112], sizes = [1, 32, 16], strides = [1, 1, 1]} : vector<1x32x128xbf16> to vector<1x32x16xbf16>
    "tpu.trace_start"() <{level = 10 : i32, message = "btd,bnd->btn"}> : () -> ()
    %cst_94 = arith.constant dense<0.000000e+00> : vector<1x16x32xf32>
    %251 = tpu.matmul %248, %249, %cst_94 {dimension_numbers = #tpu.dot_dimension_numbers<[2], [2], [1], [1], [0, 0, 0, 1, 1, 1], [0], [0]>} : vector<1x16x16xbf16>, vector<1x32x16xbf16>, vector<1x16x32xf32> -> vector<1x16x32xf32>
    "tpu.trace_stop"() : () -> ()
    %cst_95 = arith.constant dense<0xFF800000> : vector<1x16xf32>
    %252 = vector.multi_reduction <maximumf>, %251, %cst_95 [2] : vector<1x16x32xf32> to vector<1x16xf32>
    %253 = vector.shape_cast %252 : vector<1x16xf32> to vector<1x16x1xf32>
    %254 = vector.broadcast %253 : vector<1x16x1xf32> to vector<1x16x32xf32>
    %255 = arith.subf %251, %254 : vector<1x16x32xf32>
    %256 = math.exp %255 : vector<1x16x32xf32>
    %cst_96 = arith.constant dense<0.000000e+00> : vector<1x16xf32>
    %257 = vector.multi_reduction <add>, %256, %cst_96 [2] : vector<1x16x32xf32> to vector<1x16xf32>
    %258 = vector.shape_cast %257 : vector<1x16xf32> to vector<1x16x1xf32>
    %259 = vector.broadcast %258 : vector<1x16x1xf32> to vector<1x16x32xf32>
    %260 = arith.divf %256, %259 : vector<1x16x32xf32>
    %261 = arith.truncf %260 : vector<1x16x32xf32> to vector<1x16x32xbf16>
    "tpu.trace_start"() <{level = 10 : i32, message = "btn,bnd->btd"}> : () -> ()
    %cst_97 = arith.constant dense<0.000000e+00> : vector<1x16x16xf32>
    %262 = tpu.matmul %261, %250, %cst_97 {dimension_numbers = #tpu.dot_dimension_numbers<[2], [1], [1], [2], [0, 0, 0, 1, 1, 2], [0], [0]>} : vector<1x16x32xbf16>, vector<1x32x16xbf16>, vector<1x16x16xf32> -> vector<1x16x16xf32>
    "tpu.trace_stop"() : () -> ()
    %263 = arith.truncf %262 : vector<1x16x16xf32> to vector<1x16x16xbf16>
    %c0_98 = arith.constant 0 : index
    %c0_99 = arith.constant 0 : index
    %c112 = arith.constant 112 : index
    %264 = vector.load %arg22[%c0_98, %c0_99, %c112] : memref<1x16x128xbf16, #tpu.memory_space<vmem>>, vector<1x16x16xbf16>
    tpu.vector_store %arg22[%c0_98, %c0_99, %c112], %263 {strides = array<i32>} : memref<1x16x128xbf16, #tpu.memory_space<vmem>>, vector<1x16x16xbf16>,
    %c0_100 = arith.constant 0 : index
    %c0_101 = arith.constant 0 : index
    %c0_102 = arith.constant 0 : index
    %265 = vector.load %arg22[%c0_100, %c0_101, %c0_102] : memref<1x16x128xbf16, #tpu.memory_space<vmem>>, vector<1x16x128xbf16>
    %266 = vector.shape_cast %265 : vector<1x16x128xbf16> to vector<16x128xbf16>
    %c0_103 = arith.constant 0 : index
    %c0_104 = arith.constant 0 : index
    %267 = vector.load %arg15[%c0_103, %c0_104] : memref<128x128xbf16, #tpu.memory_space<vmem>>, vector<128x128xbf16>
    %cst_105 = arith.constant dense<0.000000e+00> : vector<16x128xf32>
    %268 = tpu.matmul %266, %267, %cst_105 {dimension_numbers = #tpu.dot_dimension_numbers<[1], [0], [0], [1], [0, 0, 1, 1], [], []>} : vector<16x128xbf16>, vector<128x128xbf16>, vector<16x128xf32> -> vector<16x128xf32>
    %c0_106 = arith.constant 0 : index
    %c0_107 = arith.constant 0 : index
    %269 = vector.load %arg16[%c0_106, %c0_107] : memref<1x128xf32, #tpu.memory_space<vmem>>, vector<1x128xf32>
    %270 = vector.shape_cast %269 : vector<1x128xf32> to vector<128xf32>
    %271 = vector.shape_cast %270 : vector<128xf32> to vector<1x128xf32>
    %272 = vector.broadcast %271 : vector<1x128xf32> to vector<16x128xf32>
    %273 = arith.addf %268, %272 : vector<16x128xf32>
    %c0_108 = arith.constant 0 : index
    %c0_109 = arith.constant 0 : index
    %274 = vector.load %arg17[%c0_108, %c0_109] : memref<1x128xf32, #tpu.memory_space<vmem>>, vector<1x128xf32>
    %275 = vector.shape_cast %274 : vector<1x128xf32> to vector<128xf32>
    %c0_110 = arith.constant 0 : index
    %c0_111 = arith.constant 0 : index
    %276 = vector.load %arg18[%c0_110, %c0_111] : memref<1x128xf32, #tpu.memory_space<vmem>>, vector<1x128xf32>
    %277 = vector.shape_cast %276 : vector<1x128xf32> to vector<128xf32>
    %cst_112 = arith.constant dense<0.000000e+00> : vector<16xf32>
    %278 = vector.multi_reduction <add>, %273, %cst_112 [1] : vector<16x128xf32> to vector<16xf32>
    %279 = vector.shape_cast %278 : vector<16xf32> to vector<16x1xf32>
    %cst_113 = arith.constant 1.280000e+02 : f32
    %280 = vector.broadcast %cst_113 : f32 to vector<16x1xf32>
    %281 = arith.divf %279, %280 : vector<16x1xf32>
    %282 = vector.broadcast %281 : vector<16x1xf32> to vector<16x128xf32>
    %283 = arith.subf %273, %282 : vector<16x128xf32>
    %284 = arith.mulf %283, %283 : vector<16x128xf32>
    %cst_114 = arith.constant dense<0.000000e+00> : vector<16xf32>
    %285 = vector.multi_reduction <add>, %284, %cst_114 [1] : vector<16x128xf32> to vector<16xf32>
    %286 = vector.shape_cast %285 : vector<16xf32> to vector<16x1xf32>
    %cst_115 = arith.constant 1.280000e+02 : f32
    %287 = vector.broadcast %cst_115 : f32 to vector<16x1xf32>
    %288 = arith.divf %286, %287 : vector<16x1xf32>
    %289 = vector.broadcast %281 : vector<16x1xf32> to vector<16x128xf32>
    %290 = arith.subf %273, %289 : vector<16x128xf32>
    %cst_116 = arith.constant 9.99999974E-6 : f32
    %291 = vector.broadcast %cst_116 : f32 to vector<16x1xf32>
    %292 = arith.addf %288, %291 : vector<16x1xf32>
    %293 = math.rsqrt %292 : vector<16x1xf32>
    %294 = vector.broadcast %293 : vector<16x1xf32> to vector<16x128xf32>
    %295 = arith.mulf %290, %294 : vector<16x128xf32>
    %296 = vector.shape_cast %275 : vector<128xf32> to vector<1x128xf32>
    %297 = vector.broadcast %296 : vector<1x128xf32> to vector<16x128xf32>
    %298 = arith.mulf %295, %297 : vector<16x128xf32>
    %299 = vector.shape_cast %277 : vector<128xf32> to vector<1x128xf32>
    %300 = vector.broadcast %299 : vector<1x128xf32> to vector<16x128xf32>
    %301 = arith.addf %298, %300 : vector<16x128xf32>
    %302 = arith.truncf %301 : vector<16x128xf32> to vector<16x128xbf16>
    %c0_117 = arith.constant 0 : index
    %c0_118 = arith.constant 0 : index
    %303 = vector.load %arg19[%c0_117, %c0_118] : memref<128x128xbf16, #tpu.memory_space<vmem>>, vector<128x128xbf16>
    %cst_119 = arith.constant dense<0.000000e+00> : vector<16x128xf32>
    %304 = tpu.matmul %302, %303, %cst_119 {dimension_numbers = #tpu.dot_dimension_numbers<[1], [0], [0], [1], [0, 0, 1, 1], [], []>} : vector<16x128xbf16>, vector<128x128xbf16>, vector<16x128xf32> -> vector<16x128xf32>
    %c0_120 = arith.constant 0 : index
    %c0_121 = arith.constant 0 : index
    %305 = vector.load %arg20[%c0_120, %c0_121] : memref<1x128xf32, #tpu.memory_space<vmem>>, vector<1x128xf32>
    %306 = vector.shape_cast %305 : vector<1x128xf32> to vector<128xf32>
    %307 = vector.shape_cast %306 : vector<128xf32> to vector<1x128xf32>
    %308 = vector.broadcast %307 : vector<1x128xf32> to vector<16x128xf32>
    %309 = arith.addf %304, %308 : vector<16x128xf32>
    %310 = vector.shape_cast %309 : vector<16x128xf32> to vector<1x16x128xf32>
    %c0_122 = arith.constant 0 : index
    %c0_123 = arith.constant 0 : index
    %c0_124 = arith.constant 0 : index
    %311 = vector.load %arg21[%c0_122, %c0_123, %c0_124] : memref<1x16x128xf32, #tpu.memory_space<vmem>>, vector<1x16x128xf32>
    tpu.vector_store %arg21[%c0_122, %c0_123, %c0_124], %310 {strides = array<i32>} : memref<1x16x128xf32, #tpu.memory_space<vmem>>, vector<1x16x128xf32>,
    return
  }
  func.func @transform_0(%arg0: i32) -> (i32, i32, i32) {
    %c0_i32 = arith.constant 0 : i32
    %c0_i32_0 = arith.constant 0 : i32
    %c0_i32_1 = arith.constant 0 : i32
    return %arg0, %c0_i32, %c0_i32_0 : i32, i32, i32
  }
  func.func @transform_1(%arg0: i32) -> (i32, i32, i32) {
    %c0_i32 = arith.constant 0 : i32
    %c0_i32_0 = arith.constant 0 : i32
    %c0_i32_1 = arith.constant 0 : i32
    return %arg0, %c0_i32, %c0_i32_0 : i32, i32, i32
  }
  func.func @transform_2(%arg0: i32) -> (i32, i32) {
    %c0_i32 = arith.constant 0 : i32
    %c0_i32_0 = arith.constant 0 : i32
    %c0_i32_1 = arith.constant 0 : i32
    return %c0_i32, %c0_i32_0 : i32, i32
  }
  func.func @transform_3(%arg0: i32) -> (i32, i32) {
    %c0_i32 = arith.constant 0 : i32
    %c0_i32_0 = arith.constant 0 : i32
    %c0_i32_1 = arith.constant 0 : i32
    return %c0_i32, %c0_i32_0 : i32, i32
  }
  func.func @transform_4(%arg0: i32) -> (i32, i32) {
    %c0_i32 = arith.constant 0 : i32
    %c0_i32_0 = arith.constant 0 : i32
    %c0_i32_1 = arith.constant 0 : i32
    return %c0_i32, %c0_i32_0 : i32, i32
  }
  func.func @transform_5(%arg0: i32) -> (i32, i32) {
    %c0_i32 = arith.constant 0 : i32
    %c0_i32_0 = arith.constant 0 : i32
    %c0_i32_1 = arith.constant 0 : i32
    return %c0_i32, %c0_i32_0 : i32, i32
  }
  func.func @transform_6(%arg0: i32) -> (i32, i32) {
    %c0_i32 = arith.constant 0 : i32
    %c0_i32_0 = arith.constant 0 : i32
    %c0_i32_1 = arith.constant 0 : i32
    return %c0_i32, %c0_i32_0 : i32, i32
  }
  func.func @transform_7(%arg0: i32) -> (i32, i32) {
    %c0_i32 = arith.constant 0 : i32
    %c0_i32_0 = arith.constant 0 : i32
    %c0_i32_1 = arith.constant 0 : i32
    return %c0_i32, %c0_i32_0 : i32, i32
  }
  func.func @transform_8(%arg0: i32) -> (i32, i32) {
    %c0_i32 = arith.constant 0 : i32
    %c0_i32_0 = arith.constant 0 : i32
    %c0_i32_1 = arith.constant 0 : i32
    return %c0_i32, %c0_i32_0 : i32, i32
  }
  func.func @transform_9(%arg0: i32) -> (i32, i32) {
    %c0_i32 = arith.constant 0 : i32
    %c0_i32_0 = arith.constant 0 : i32
    %c0_i32_1 = arith.constant 0 : i32
    return %c0_i32, %c0_i32_0 : i32, i32
  }
  func.func @transform_10(%arg0: i32) -> (i32, i32) {
    %c0_i32 = arith.constant 0 : i32
    %c0_i32_0 = arith.constant 0 : i32
    %c0_i32_1 = arith.constant 0 : i32
    return %c0_i32, %c0_i32_0 : i32, i32
  }
  func.func @transform_11(%arg0: i32) -> (i32, i32) {
    %c0_i32 = arith.constant 0 : i32
    %c0_i32_0 = arith.constant 0 : i32
    %c0_i32_1 = arith.constant 0 : i32
    return %c0_i32, %c0_i32_0 : i32, i32
  }
  func.func @transform_12(%arg0: i32) -> (i32, i32) {
    %c0_i32 = arith.constant 0 : i32
    %c0_i32_0 = arith.constant 0 : i32
    %c0_i32_1 = arith.constant 0 : i32
    return %c0_i32, %c0_i32_0 : i32, i32
  }
  func.func @transform_13(%arg0: i32) -> (i32, i32) {
    %c0_i32 = arith.constant 0 : i32
    %c0_i32_0 = arith.constant 0 : i32
    %c0_i32_1 = arith.constant 0 : i32
    return %c0_i32, %c0_i32_0 : i32, i32
  }
  func.func @transform_14(%arg0: i32) -> (i32, i32) {
    %c0_i32 = arith.constant 0 : i32
    %c0_i32_0 = arith.constant 0 : i32
    %c0_i32_1 = arith.constant 0 : i32
    return %c0_i32, %c0_i32_0 : i32, i32
  }
  func.func @transform_15(%arg0: i32) -> (i32, i32) {
    %c0_i32 = arith.constant 0 : i32
    %c0_i32_0 = arith.constant 0 : i32
    %c0_i32_1 = arith.constant 0 : i32
    return %c0_i32, %c0_i32_0 : i32, i32
  }
  func.func @transform_16(%arg0: i32) -> (i32, i32) {
    %c0_i32 = arith.constant 0 : i32
    %c0_i32_0 = arith.constant 0 : i32
    %c0_i32_1 = arith.constant 0 : i32
    return %c0_i32, %c0_i32_0 : i32, i32
  }
  func.func @transform_17(%arg0: i32) -> (i32, i32) {
    %c0_i32 = arith.constant 0 : i32
    %c0_i32_0 = arith.constant 0 : i32
    %c0_i32_1 = arith.constant 0 : i32
    return %c0_i32, %c0_i32_0 : i32, i32
  }
  func.func @transform_18(%arg0: i32) -> (i32, i32) {
    %c0_i32 = arith.constant 0 : i32
    %c0_i32_0 = arith.constant 0 : i32
    %c0_i32_1 = arith.constant 0 : i32
    return %c0_i32, %c0_i32_0 : i32, i32
  }
  func.func @transform_19(%arg0: i32) -> (i32, i32) {
    %c0_i32 = arith.constant 0 : i32
    %c0_i32_0 = arith.constant 0 : i32
    %c0_i32_1 = arith.constant 0 : i32
    return %c0_i32, %c0_i32_0 : i32, i32
  }
  func.func @transform_20(%arg0: i32) -> (i32, i32, i32) {
    %c0_i32 = arith.constant 0 : i32
    %c0_i32_0 = arith.constant 0 : i32
    %c0_i32_1 = arith.constant 0 : i32
    return %arg0, %c0_i32, %c0_i32_0 : i32, i32, i32
  }
}

</mosaic_0001>

<llo_original>
// kernel: tpu_custom_call.1
$region0: #{tpu_custom_call.1}
  #allocation0 [shape = 'u32[]', space=smem, size = 0x4, offset = 0x4, fixed_abs, tag = 'smem constant byte address 0x4 - core index']
  #allocation1 [shape = 'u32[144,128]{1,0:T(1,128)}', space=vmem, size = 0x12000, scoped, tag = 'internal scratch']
  #allocation2 [shape = 'bf16[1,16,128]{2,1,0:T(16,128)(2,1)}', space=vmem, size = 0x1000, scoped, tag = 'scratch operand']
  %s0 = inlined_call_operand.hbm [shape: f32[2,16,128], index: 0, kind: input, shape index: {}]
  %s1 = inlined_call_operand.hbm [shape: f32[2,32,128], index: 1, kind: input, shape index: {}]
  %s2 = inlined_call_operand.vmem [shape: f32[1,128], index: 2, kind: input, shape index: {}]
  %s3 = inlined_call_operand.hbm [shape: f32[1,128], index: 3, kind: input, shape index: {}]
  %s4 = inlined_call_operand.hbm [shape: bf16[128,128], index: 4, kind: input, shape index: {}]
  %s5 = inlined_call_operand.hbm [shape: f32[1,128], index: 5, kind: input, shape index: {}]
  %s6 = inlined_call_operand.hbm [shape: f32[1,128], index: 6, kind: input, shape index: {}]
  %s7 = inlined_call_operand.hbm [shape: f32[1,128], index: 7, kind: input, shape index: {}]
  %s8 = inlined_call_operand.hbm [shape: f32[1,128], index: 8, kind: input, shape index: {}]
  %s9 = inlined_call_operand.hbm [shape: f32[1,128], index: 9, kind: input, shape index: {}]
  %s10 = inlined_call_operand.hbm [shape: bf16[128,128], index: 10, kind: input, shape index: {}]
  %s11 = inlined_call_operand.hbm [shape: f32[1,128], index: 11, kind: input, shape index: {}]
  %s12 = inlined_call_operand.hbm [shape: bf16[128,384], index: 12, kind: input, shape index: {}]
  %s13 = inlined_call_operand.vmem [shape: f32[1,384], index: 13, kind: input, shape index: {}]
  %s14 = inlined_call_operand.hbm [shape: bf16[128,128], index: 14, kind: input, shape index: {}]
  %s15 = inlined_call_operand.hbm [shape: f32[1,128], index: 15, kind: input, shape index: {}]
  %s16 = inlined_call_operand.hbm [shape: f32[1,128], index: 16, kind: input, shape index: {}]
  %s17 = inlined_call_operand.hbm [shape: f32[1,128], index: 17, kind: input, shape index: {}]
  %s18 = inlined_call_operand.vmem [shape: bf16[128,128], index: 18, kind: input, shape index: {}]
  %s19 = inlined_call_operand.vmem [shape: f32[1,128], index: 19, kind: input, shape index: {}]
  %s20 = inlined_call_operand.hbm [shape: f32[2,16,128], index: 20, kind: output, shape index: {}]
  %s21 = sld [smem:[#allocation0]]
  $region177: #{tpu_custom_call.1} parent=0
    _
  %s23 = ssub.s32 1, %s21
  %s24 = scalar_select 0, %s23, %s21
  $region1: #{tpu_custom_call.1} parent=0
    #allocation3 [shape = 'u8[16384]{0}', space=vmem, size = 0x4000, scoped, tag = 'input window, operand 0']
    #allocation4 [shape = 's32[2]{0}', space=sflag, size = 0x8, scoped, tag = 'scoped memory for tpu_custom_call.1']
    #allocation5 [shape = 's32[2]{0}', space=sflag, size = 0x8, scoped, tag = 'scoped memory for tpu_custom_call.1']
    #allocation6 [shape = 'u8[32768]{0}', space=vmem, size = 0x8000, scoped, tag = 'input window, operand 1']
    #allocation7 [shape = 's32[2]{0}', space=sflag, size = 0x8, scoped, tag = 'scoped memory for tpu_custom_call.1']
    #allocation8 [shape = 'u8[512]{0}', space=vmem, size = 0x400, scoped, tag = 'input window, operand 3, single buffered']
    #allocation9 [shape = 'u8[32768]{0}', space=vmem, size = 0x8000, scoped, tag = 'input window, operand 4, single buffered']
    #allocation10 [shape = 's32[1]{0}', space=sflag, size = 0x4, scoped, tag = 'scoped memory for tpu_custom_call.1']
    #allocation11 [shape = 'u8[512]{0}', space=vmem, size = 0x400, scoped, tag = 'input window, operand 5, single buffered']
    #allocation12 [shape = 'u8[512]{0}', space=vmem, size = 0x400, scoped, tag = 'input window, operand 6, single buffered']
    #allocation13 [shape = 's32[1]{0}', space=sflag, size = 0x4, scoped, tag = 'scoped memory for tpu_custom_call.1']
    #allocation14 [shape = 'u8[512]{0}', space=vmem, size = 0x400, scoped, tag = 'input window, operand 7, single buffered']
    #allocation15 [shape = 'u8[512]{0}', space=vmem, size = 0x400, scoped, tag = 'input window, operand 8, single buffered']
    #allocation16 [shape = 's32[1]{0}', space=sflag, size = 0x4, scoped, tag = 'scoped memory for tpu_custom_call.1']
    #allocation17 [shape = 'u8[512]{0}', space=vmem, size = 0x400, scoped, tag = 'input window, operand 9, single buffered']
    #allocation18 [shape = 'u8[32768]{0}', space=vmem, size = 0x8000, scoped, tag = 'input window, operand 10, single buffered']
    #allocation19 [shape = 's32[1]{0}', space=sflag, size = 0x4, scoped, tag = 'scoped memory for tpu_custom_call.1']
    #allocation20 [shape = 'u8[512]{0}', space=vmem, size = 0x400, scoped, tag = 'input window, operand 11, single buffered']
    #allocation21 [shape = 'u8[98304]{0}', space=vmem, size = 0x18000, scoped, tag = 'input window, operand 12, single buffered']
    #allocation22 [shape = 's32[1]{0}', space=sflag, size = 0x4, scoped, tag = 'scoped memory for tpu_custom_call.1']
    #allocation23 [shape = 'u8[32768]{0}', space=vmem, size = 0x8000, scoped, tag = 'input window, operand 14, single buffered']
    #allocation24 [shape = 'u8[512]{0}', space=vmem, size = 0x400, scoped, tag = 'input window, operand 15, single buffered']
    #allocation25 [shape = 's32[1]{0}', space=sflag, size = 0x4, scoped, tag = 'scoped memory for tpu_custom_call.1']
    #allocation26 [shape = 'u8[512]{0}', space=vmem, size = 0x400, scoped, tag = 'input window, operand 16, single buffered']
    #allocation27 [shape = 'u8[512]{0}', space=vmem, size = 0x400, scoped, tag = 'input window, operand 17, single buffered']
    #allocation28 [shape = 's32[1]{0}', space=sflag, size = 0x4, scoped, tag = 'scoped memory for tpu_custom_call.1']
    #allocation29 [shape = 'u8[16384]{0}', space=vmem, size = 0x4000, scoped, tag = 'output window, operand 0']
    %25 = vsyncpa [#allocation4], 0
    %s26 = scalar_lea.sflag [#allocation4], 1
    %27 = vsyncpa %s26, 0
    %28 = vsyncpa [#allocation7], 0
    %s29 = scalar_lea.sflag [#allocation7], 1
    %30 = vsyncpa %s29, 0
    %31 = vsyncpa [#allocation10], 0
    %32 = vsyncpa [#allocation13], 0
    %33 = vsyncpa [#allocation16], 0
    %34 = vsyncpa [#allocation19], 0
    %35 = vsyncpa [#allocation22], 0
    %36 = vsyncpa [#allocation25], 0
    %37 = vsyncpa [#allocation28], 0
    %38 = vsyncpa [#allocation5], 0
    %s39 = scalar_lea.sflag [#allocation5], 1
    %40 = vsyncpa %s39, 0
    loop: start=0, step=1, limit=4
    $region2: #{tpu_custom_call.1} parent=1 // loop_pre_header
      _
    $region3: #{tpu_custom_call.1} parent=1 // loop_header
      %s42 = sphi 0, %s46
      %p43 = scmp.ge.s32.totalorder %s42, 4
      %s52 = sphi 0, %s54
      %s55 = sphi 0, %s52
      %s56 = sphi 0, %s55
      %s72 = sphi 0, %s56
      %s78 = sphi 0, %s80
      %s81 = sphi 0, %s78
      %s82 = sphi 0, %s81
      %s98 = sphi 0, %s82
      %s102 = sphi 0, %s102
      %s104 = sphi 0, %s102
      %s105 = sphi 0, %s104
      %s119 = sphi 0, %s105
      %s123 = sphi 0, %s123
      %s125 = sphi 0, %s123
      %s126 = sphi 0, %s125
      %s140 = sphi 0, %s126
      %s144 = sphi 0, %s144
      %s146 = sphi 0, %s144
      %s147 = sphi 0, %s146
      %s161 = sphi 0, %s147
      %s165 = sphi 0, %s165
      %s167 = sphi 0, %s165
      %s168 = sphi 0, %s167
      %s182 = sphi 0, %s168
      %s186 = sphi 0, %s186
      %s188 = sphi 0, %s186
      %s189 = sphi 0, %s188
      %s203 = sphi 0, %s189
      %s207 = sphi 0, %s207
      %s209 = sphi 0, %s207
      %s210 = sphi 0, %s209
      %s224 = sphi 0, %s210
      %s228 = sphi 0, %s228
      %s230 = sphi 0, %s228
      %s231 = sphi 0, %s230
      %s245 = sphi 0, %s231
      %s249 = sphi 0, %s249
      %s251 = sphi 0, %s249
      %s252 = sphi 0, %s251
      %s266 = sphi 0, %s252
      %s270 = sphi 0, %s270
      %s272 = sphi 0, %s270
      %s273 = sphi 0, %s272
      %s287 = sphi 0, %s273
      %s291 = sphi 0, %s291
      %s293 = sphi 0, %s291
      %s294 = sphi 0, %s293
      %s308 = sphi 0, %s294
      %s312 = sphi 0, %s312
      %s314 = sphi 0, %s312
      %s315 = sphi 0, %s314
      %s329 = sphi 0, %s315
      %s333 = sphi 0, %s333
      %s335 = sphi 0, %s333
      %s336 = sphi 0, %s335
      %s350 = sphi 0, %s336
      %s354 = sphi 0, %s354
      %s356 = sphi 0, %s354
      %s357 = sphi 0, %s356
      %s371 = sphi 0, %s357
      %s375 = sphi 0, %s375
      %s377 = sphi 0, %s375
      %s378 = sphi 0, %s377
      %s392 = sphi 0, %s378
      %s396 = sphi 0, %s396
      %s398 = sphi 0, %s396
      %s399 = sphi 0, %s398
      %s413 = sphi 0, %s399
      %s417 = sphi 0, %s417
      %s419 = sphi 0, %s417
      %s420 = sphi 0, %s419
      %s434 = sphi 0, %s420
      %s438 = sphi 0, %s438
      %s440 = sphi 0, %s438
      %s441 = sphi 0, %s440
      %s455 = sphi 0, %s441
      %s459 = sphi 0, %s459
      %s461 = sphi 0, %s459
      %s462 = sphi 0, %s461
      %s476 = sphi 0, %s462
      %s482 = sphi 0, %s484
      %s485 = sphi 0, %s482
      %s486 = sphi 0, %s485
      %s502 = sphi 0, %s486
    $region4: #{tpu_custom_call.1} parent=1 // loop_header_branch
      %45 = sbr.rel (%p43) target = $region8
    $region5: #{tpu_custom_call.1} parent=1 // loop_body
      %s47 = ssub.s32 %s42, 1
      %s48 = ssub.s32 %s42, 2
      %s49 = sadd.s32 %s42, 1
      %s50 = ssub.s32 %s42, %s49
      %p51 = scmp.eq.s32.totalorder %s50, 0
      %s53 = sadd.s32 %s52, 1
      %s54 = scalar_select %p51, %s52, %s53
      %p57 = pneg %p51
      %p58 = scmp.eq.s32.totalorder %s42, 1
      %p59 = por %p57, %p58
      %p60 = scmp.ne.s32.totalorder %s52, %s55
      %p61 = scmp.eq.s32.totalorder %s42, 0
      %p62 = por %p60, %p61
      %p63 = scmp.ne.s32.totalorder %s52, %s55
      %p64 = scmp.eq.s32.totalorder %s47, 1
      %p65 = por %p63, %p64
      %p66 = scmp.ne.s32.totalorder %s55, %s56
      %p67 = scmp.eq.s32.totalorder %s47, 0
      %p68 = por %p66, %p67
      %p69 = scmp.ne.s32.totalorder %s55, %s56
      %p70 = scmp.eq.s32.totalorder %s48, 1
      %p71 = por %p69, %p70
      %p73 = scmp.ne.s32.totalorder %s56, %s72
      %p74 = scmp.eq.s32.totalorder %s48, 0
      %p75 = por %p73, %p74
      %s76 = ssub.s32 %s42, %s49
      %p77 = scmp.eq.s32.totalorder %s76, 0
      %s79 = sadd.s32 %s78, 1
      %s80 = scalar_select %p77, %s78, %s79
      %p83 = pneg %p77
      %p84 = scmp.eq.s32.totalorder %s42, 1
      %p85 = por %p83, %p84
      %p86 = scmp.ne.s32.totalorder %s78, %s81
      %p87 = scmp.eq.s32.totalorder %s42, 0
      %p88 = por %p86, %p87
      %p89 = scmp.ne.s32.totalorder %s78, %s81
      %p90 = scmp.eq.s32.totalorder %s47, 1
      %p91 = por %p89, %p90
      %p92 = scmp.ne.s32.totalorder %s81, %s82
      %p93 = scmp.eq.s32.totalorder %s47, 0
      %p94 = por %p92, %p93
      %p95 = scmp.ne.s32.totalorder %s81, %s82
      %p96 = scmp.eq.s32.totalorder %s48, 1
      %p97 = por %p95, %p96
      %p99 = scmp.ne.s32.totalorder %s82, %s98
      %p100 = scmp.eq.s32.totalorder %s48, 0
      %p101 = por %p99, %p100
      %s103 = sadd.s32 %s102, 1
      %p106 = scmp.eq.s32.totalorder %s42, 1
      %p107 = scmp.ne.s32.totalorder %s102, %s104
      %p108 = scmp.eq.s32.totalorder %s42, 0
      %p109 = por %p107, %p108
      %p110 = scmp.ne.s32.totalorder %s102, %s104
      %p111 = scmp.eq.s32.totalorder %s47, 1
      %p112 = por %p110, %p111
      %p113 = scmp.ne.s32.totalorder %s104, %s105
      %p114 = scmp.eq.s32.totalorder %s47, 0
      %p115 = por %p113, %p114
      %p116 = scmp.ne.s32.totalorder %s104, %s105
      %p117 = scmp.eq.s32.totalorder %s48, 1
      %p118 = por %p116, %p117
      %p120 = scmp.ne.s32.totalorder %s105, %s119
      %p121 = scmp.eq.s32.totalorder %s48, 0
      %p122 = por %p120, %p121
      %s124 = sadd.s32 %s123, 1
      %p127 = scmp.eq.s32.totalorder %s42, 1
      %p128 = scmp.ne.s32.totalorder %s123, %s125
      %p129 = scmp.eq.s32.totalorder %s42, 0
      %p130 = por %p128, %p129
      %p131 = scmp.ne.s32.totalorder %s123, %s125
      %p132 = scmp.eq.s32.totalorder %s47, 1
      %p133 = por %p131, %p132
      %p134 = scmp.ne.s32.totalorder %s125, %s126
      %p135 = scmp.eq.s32.totalorder %s47, 0
      %p136 = por %p134, %p135
      %p137 = scmp.ne.s32.totalorder %s125, %s126
      %p138 = scmp.eq.s32.totalorder %s48, 1
      %p139 = por %p137, %p138
      %p141 = scmp.ne.s32.totalorder %s126, %s140
      %p142 = scmp.eq.s32.totalorder %s48, 0
      %p143 = por %p141, %p142
      %s145 = sadd.s32 %s144, 1
      %p148 = scmp.eq.s32.totalorder %s42, 1
      %p149 = scmp.ne.s32.totalorder %s144, %s146
      %p150 = scmp.eq.s32.totalorder %s42, 0
      %p151 = por %p149, %p150
      %p152 = scmp.ne.s32.totalorder %s144, %s146
      %p153 = scmp.eq.s32.totalorder %s47, 1
      %p154 = por %p152, %p153
      %p155 = scmp.ne.s32.totalorder %s146, %s147
      %p156 = scmp.eq.s32.totalorder %s47, 0
      %p157 = por %p155, %p156
      %p158 = scmp.ne.s32.totalorder %s146, %s147
      %p159 = scmp.eq.s32.totalorder %s48, 1
      %p160 = por %p158, %p159
      %p162 = scmp.ne.s32.totalorder %s147, %s161
      %p163 = scmp.eq.s32.totalorder %s48, 0
      %p164 = por %p162, %p163
      %s166 = sadd.s32 %s165, 1
      %p169 = scmp.eq.s32.totalorder %s42, 1
      %p170 = scmp.ne.s32.totalorder %s165, %s167
      %p171 = scmp.eq.s32.totalorder %s42, 0
      %p172 = por %p170, %p171
      %p173 = scmp.ne.s32.totalorder %s165, %s167
      %p174 = scmp.eq.s32.totalorder %s47, 1
      %p175 = por %p173, %p174
      %p176 = scmp.ne.s32.totalorder %s167, %s168
      %p177 = scmp.eq.s32.totalorder %s47, 0
      %p178 = por %p176, %p177
      %p179 = scmp.ne.s32.totalorder %s167, %s168
      %p180 = scmp.eq.s32.totalorder %s48, 1
      %p181 = por %p179, %p180
      %p183 = scmp.ne.s32.totalorder %s168, %s182
      %p184 = scmp.eq.s32.totalorder %s48, 0
      %p185 = por %p183, %p184
      %s187 = sadd.s32 %s186, 1
      %p190 = scmp.eq.s32.totalorder %s42, 1
      %p191 = scmp.ne.s32.totalorder %s186, %s188
      %p192 = scmp.eq.s32.totalorder %s42, 0
      %p193 = por %p191, %p192
      %p194 = scmp.ne.s32.totalorder %s186, %s188
      %p195 = scmp.eq.s32.totalorder %s47, 1
      %p196 = por %p194, %p195
      %p197 = scmp.ne.s32.totalorder %s188, %s189
      %p198 = scmp.eq.s32.totalorder %s47, 0
      %p199 = por %p197, %p198
      %p200 = scmp.ne.s32.totalorder %s188, %s189
      %p201 = scmp.eq.s32.totalorder %s48, 1
      %p202 = por %p200, %p201
      %p204 = scmp.ne.s32.totalorder %s189, %s203
      %p205 = scmp.eq.s32.totalorder %s48, 0
      %p206 = por %p204, %p205
      %s208 = sadd.s32 %s207, 1
      %p211 = scmp.eq.s32.totalorder %s42, 1
      %p212 = scmp.ne.s32.totalorder %s207, %s209
      %p213 = scmp.eq.s32.totalorder %s42, 0
      %p214 = por %p212, %p213
      %p215 = scmp.ne.s32.totalorder %s207, %s209
      %p216 = scmp.eq.s32.totalorder %s47, 1
      %p217 = por %p215, %p216
      %p218 = scmp.ne.s32.totalorder %s209, %s210
      %p219 = scmp.eq.s32.totalorder %s47, 0
      %p220 = por %p218, %p219
      %p221 = scmp.ne.s32.totalorder %s209, %s210
      %p222 = scmp.eq.s32.totalorder %s48, 1
      %p223 = por %p221, %p222
      %p225 = scmp.ne.s32.totalorder %s210, %s224
      %p226 = scmp.eq.s32.totalorder %s48, 0
      %p227 = por %p225, %p226
      %s229 = sadd.s32 %s228, 1
      %p232 = scmp.eq.s32.totalorder %s42, 1
      %p233 = scmp.ne.s32.totalorder %s228, %s230
      %p234 = scmp.eq.s32.totalorder %s42, 0
      %p235 = por %p233, %p234
      %p236 = scmp.ne.s32.totalorder %s228, %s230
      %p237 = scmp.eq.s32.totalorder %s47, 1
      %p238 = por %p236, %p237
      %p239 = scmp.ne.s32.totalorder %s230, %s231
      %p240 = scmp.eq.s32.totalorder %s47, 0
      %p241 = por %p239, %p240
      %p242 = scmp.ne.s32.totalorder %s230, %s231
      %p243 = scmp.eq.s32.totalorder %s48, 1
      %p244 = por %p242, %p243
      %p246 = scmp.ne.s32.totalorder %s231, %s245
      %p247 = scmp.eq.s32.totalorder %s48, 0
      %p248 = por %p246, %p247
      %s250 = sadd.s32 %s249, 1
      %p253 = scmp.eq.s32.totalorder %s42, 1
      %p254 = scmp.ne.s32.totalorder %s249, %s251
      %p255 = scmp.eq.s32.totalorder %s42, 0
      %p256 = por %p254, %p255
      %p257 = scmp.ne.s32.totalorder %s249, %s251
      %p258 = scmp.eq.s32.totalorder %s47, 1
      %p259 = por %p257, %p258
      %p260 = scmp.ne.s32.totalorder %s251, %s252
      %p261 = scmp.eq.s32.totalorder %s47, 0
      %p262 = por %p260, %p261
      %p263 = scmp.ne.s32.totalorder %s251, %s252
      %p264 = scmp.eq.s32.totalorder %s48, 1
      %p265 = por %p263, %p264
      %p267 = scmp.ne.s32.totalorder %s252, %s266
      %p268 = scmp.eq.s32.totalorder %s48, 0
      %p269 = por %p267, %p268
      %s271 = sadd.s32 %s270, 1
      %p274 = scmp.eq.s32.totalorder %s42, 1
      %p275 = scmp.ne.s32.totalorder %s270, %s272
      %p276 = scmp.eq.s32.totalorder %s42, 0
      %p277 = por %p275, %p276
      %p278 = scmp.ne.s32.totalorder %s270, %s272
      %p279 = scmp.eq.s32.totalorder %s47, 1
      %p280 = por %p278, %p279
      %p281 = scmp.ne.s32.totalorder %s272, %s273
      %p282 = scmp.eq.s32.totalorder %s47, 0
      %p283 = por %p281, %p282
      %p284 = scmp.ne.s32.totalorder %s272, %s273
      %p285 = scmp.eq.s32.totalorder %s48, 1
      %p286 = por %p284, %p285
      %p288 = scmp.ne.s32.totalorder %s273, %s287
      %p289 = scmp.eq.s32.totalorder %s48, 0
      %p290 = por %p288, %p289
      %s292 = sadd.s32 %s291, 1
      %p295 = scmp.eq.s32.totalorder %s42, 1
      %p296 = scmp.ne.s32.totalorder %s291, %s293
      %p297 = scmp.eq.s32.totalorder %s42, 0
      %p298 = por %p296, %p297
      %p299 = scmp.ne.s32.totalorder %s291, %s293
      %p300 = scmp.eq.s32.totalorder %s47, 1
      %p301 = por %p299, %p300
      %p302 = scmp.ne.s32.totalorder %s293, %s294
      %p303 = scmp.eq.s32.totalorder %s47, 0
      %p304 = por %p302, %p303
      %p305 = scmp.ne.s32.totalorder %s293, %s294
      %p306 = scmp.eq.s32.totalorder %s48, 1
      %p307 = por %p305, %p306
      %p309 = scmp.ne.s32.totalorder %s294, %s308
      %p310 = scmp.eq.s32.totalorder %s48, 0
      %p311 = por %p309, %p310
      %s313 = sadd.s32 %s312, 1
      %p316 = scmp.eq.s32.totalorder %s42, 1
      %p317 = scmp.ne.s32.totalorder %s312, %s314
      %p318 = scmp.eq.s32.totalorder %s42, 0
      %p319 = por %p317, %p318
      %p320 = scmp.ne.s32.totalorder %s312, %s314
      %p321 = scmp.eq.s32.totalorder %s47, 1
      %p322 = por %p320, %p321
      %p323 = scmp.ne.s32.totalorder %s314, %s315
      %p324 = scmp.eq.s32.totalorder %s47, 0
      %p325 = por %p323, %p324
      %p326 = scmp.ne.s32.totalorder %s314, %s315
      %p327 = scmp.eq.s32.totalorder %s48, 1
      %p328 = por %p326, %p327
      %p330 = scmp.ne.s32.totalorder %s315, %s329
      %p331 = scmp.eq.s32.totalorder %s48, 0
      %p332 = por %p330, %p331
      %s334 = sadd.s32 %s333, 1
      %p337 = scmp.eq.s32.totalorder %s42, 1
      %p338 = scmp.ne.s32.totalorder %s333, %s335
      %p339 = scmp.eq.s32.totalorder %s42, 0
      %p340 = por %p338, %p339
      %p341 = scmp.ne.s32.totalorder %s333, %s335
      %p342 = scmp.eq.s32.totalorder %s47, 1
      %p343 = por %p341, %p342
      %p344 = scmp.ne.s32.totalorder %s335, %s336
      %p345 = scmp.eq.s32.totalorder %s47, 0
      %p346 = por %p344, %p345
      %p347 = scmp.ne.s32.totalorder %s335, %s336
      %p348 = scmp.eq.s32.totalorder %s48, 1
      %p349 = por %p347, %p348
      %p351 = scmp.ne.s32.totalorder %s336, %s350
      %p352 = scmp.eq.s32.totalorder %s48, 0
      %p353 = por %p351, %p352
      %s355 = sadd.s32 %s354, 1
      %p358 = scmp.eq.s32.totalorder %s42, 1
      %p359 = scmp.ne.s32.totalorder %s354, %s356
      %p360 = scmp.eq.s32.totalorder %s42, 0
      %p361 = por %p359, %p360
      %p362 = scmp.ne.s32.totalorder %s354, %s356
      %p363 = scmp.eq.s32.totalorder %s47, 1
      %p364 = por %p362, %p363
      %p365 = scmp.ne.s32.totalorder %s356, %s357
      %p366 = scmp.eq.s32.totalorder %s47, 0
      %p367 = por %p365, %p366
      %p368 = scmp.ne.s32.totalorder %s356, %s357
      %p369 = scmp.eq.s32.totalorder %s48, 1
      %p370 = por %p368, %p369
      %p372 = scmp.ne.s32.totalorder %s357, %s371
      %p373 = scmp.eq.s32.totalorder %s48, 0
      %p374 = por %p372, %p373
      %s376 = sadd.s32 %s375, 1
      %p379 = scmp.eq.s32.totalorder %s42, 1
      %p380 = scmp.ne.s32.totalorder %s375, %s377
      %p381 = scmp.eq.s32.totalorder %s42, 0
      %p382 = por %p380, %p381
      %p383 = scmp.ne.s32.totalorder %s375, %s377
      %p384 = scmp.eq.s32.totalorder %s47, 1
      %p385 = por %p383, %p384
      %p386 = scmp.ne.s32.totalorder %s377, %s378
      %p387 = scmp.eq.s32.totalorder %s47, 0
      %p388 = por %p386, %p387
      %p389 = scmp.ne.s32.totalorder %s377, %s378
      %p390 = scmp.eq.s32.totalorder %s48, 1
      %p391 = por %p389, %p390
      %p393 = scmp.ne.s32.totalorder %s378, %s392
      %p394 = scmp.eq.s32.totalorder %s48, 0
      %p395 = por %p393, %p394
      %s397 = sadd.s32 %s396, 1
      %p400 = scmp.eq.s32.totalorder %s42, 1
      %p401 = scmp.ne.s32.totalorder %s396, %s398
      %p402 = scmp.eq.s32.totalorder %s42, 0
      %p403 = por %p401, %p402
      %p404 = scmp.ne.s32.totalorder %s396, %s398
      %p405 = scmp.eq.s32.totalorder %s47, 1
      %p406 = por %p404, %p405
      %p407 = scmp.ne.s32.totalorder %s398, %s399
      %p408 = scmp.eq.s32.totalorder %s47, 0
      %p409 = por %p407, %p408
      %p410 = scmp.ne.s32.totalorder %s398, %s399
      %p411 = scmp.eq.s32.totalorder %s48, 1
      %p412 = por %p410, %p411
      %p414 = scmp.ne.s32.totalorder %s399, %s413
      %p415 = scmp.eq.s32.totalorder %s48, 0
      %p416 = por %p414, %p415
      %s418 = sadd.s32 %s417, 1
      %p421 = scmp.eq.s32.totalorder %s42, 1
      %p422 = scmp.ne.s32.totalorder %s417, %s419
      %p423 = scmp.eq.s32.totalorder %s42, 0
      %p424 = por %p422, %p423
      %p425 = scmp.ne.s32.totalorder %s417, %s419
      %p426 = scmp.eq.s32.totalorder %s47, 1
      %p427 = por %p425, %p426
      %p428 = scmp.ne.s32.totalorder %s419, %s420
      %p429 = scmp.eq.s32.totalorder %s47, 0
      %p430 = por %p428, %p429
      %p431 = scmp.ne.s32.totalorder %s419, %s420
      %p432 = scmp.eq.s32.totalorder %s48, 1
      %p433 = por %p431, %p432
      %p435 = scmp.ne.s32.totalorder %s420, %s434
      %p436 = scmp.eq.s32.totalorder %s48, 0
      %p437 = por %p435, %p436
      %s439 = sadd.s32 %s438, 1
      %p442 = scmp.eq.s32.totalorder %s42, 1
      %p443 = scmp.ne.s32.totalorder %s438, %s440
      %p444 = scmp.eq.s32.totalorder %s42, 0
      %p445 = por %p443, %p444
      %p446 = scmp.ne.s32.totalorder %s438, %s440
      %p447 = scmp.eq.s32.totalorder %s47, 1
      %p448 = por %p446, %p447
      %p449 = scmp.ne.s32.totalorder %s440, %s441
      %p450 = scmp.eq.s32.totalorder %s47, 0
      %p451 = por %p449, %p450
      %p452 = scmp.ne.s32.totalorder %s440, %s441
      %p453 = scmp.eq.s32.totalorder %s48, 1
      %p454 = por %p452, %p453
      %p456 = scmp.ne.s32.totalorder %s441, %s455
      %p457 = scmp.eq.s32.totalorder %s48, 0
      %p458 = por %p456, %p457
      %s460 = sadd.s32 %s459, 1
      %p463 = scmp.eq.s32.totalorder %s42, 1
      %p464 = scmp.ne.s32.totalorder %s459, %s461
      %p465 = scmp.eq.s32.totalorder %s42, 0
      %p466 = por %p464, %p465
      %p467 = scmp.ne.s32.totalorder %s459, %s461
      %p468 = scmp.eq.s32.totalorder %s47, 1
      %p469 = por %p467, %p468
      %p470 = scmp.ne.s32.totalorder %s461, %s462
      %p471 = scmp.eq.s32.totalorder %s47, 0
      %p472 = por %p470, %p471
      %p473 = scmp.ne.s32.totalorder %s461, %s462
      %p474 = scmp.eq.s32.totalorder %s48, 1
      %p475 = por %p473, %p474
      %p477 = scmp.ne.s32.totalorder %s462, %s476
      %p478 = scmp.eq.s32.totalorder %s48, 0
      %p479 = por %p477, %p478
      %s480 = ssub.s32 %s42, %s49
      %p481 = scmp.eq.s32.totalorder %s480, 0
      %s483 = sadd.s32 %s482, 1
      %s484 = scalar_select %p481, %s482, %s483
      %p487 = pneg %p481
      %p488 = scmp.eq.s32.totalorder %s42, 1
      %p489 = por %p487, %p488
      %p490 = scmp.ne.s32.totalorder %s482, %s485
      %p491 = scmp.eq.s32.totalorder %s42, 0
      %p492 = por %p490, %p491
      %p493 = scmp.ne.s32.totalorder %s482, %s485
      %p494 = scmp.eq.s32.totalorder %s47, 1
      %p495 = por %p493, %p494
      %p496 = scmp.ne.s32.totalorder %s485, %s486
      %p497 = scmp.eq.s32.totalorder %s47, 0
      %p498 = por %p496, %p497
      %p499 = scmp.ne.s32.totalorder %s485, %s486
      %p500 = scmp.eq.s32.totalorder %s48, 1
      %p501 = por %p499, %p500
      %p503 = scmp.ne.s32.totalorder %s486, %s502
      %p504 = scmp.eq.s32.totalorder %s48, 0
      %p505 = por %p503, %p504
      %p506 = scmp.le.s32.totalorder 1, %s42
      %p507 = scmp.lt.s32.totalorder %s42, 3
      %p508 = pnand %p506, %p507
      %p509 = pneg %p508
      // Predicated region
      $region9: #{tpu_custom_call.1} parent=5 // pred_check
        _
      $region10: #{tpu_custom_call.1} parent=5 // pred_check_branch
        %511 = sbr.rel (%p508) target = $region12
      $region11: #{tpu_custom_call.1} parent=5 // pred_region
        %s512 = ssub.s32 %s42, 1
        // Predicated region
        $region13: #{tpu_custom_call.1} parent=11 // pred_check
          %p513 = pneg %p115
        $region14: #{tpu_custom_call.1} parent=11 // pred_check_branch
          %515 = sbr.rel (%p513) target = $region16
        $region15: #{tpu_custom_call.1} parent=11 // pred_region
          _
        $region16: #{tpu_custom_call.1} parent=11 // pred_fallthru
          _
        // Predicated region
        $region17: #{tpu_custom_call.1} parent=11 // pred_check
          %p516 = pneg %p136
        $region18: #{tpu_custom_call.1} parent=11 // pred_check_branch
          %518 = sbr.rel (%p516) target = $region20
        $region19: #{tpu_custom_call.1} parent=11 // pred_region
          %s520 = ssub.s32 16, 16
          %521 = vsyncadd [#allocation7], %s520
          %s523 = sshll.u32 [#allocation8], 4
          %s524 = int_to_ptr.vmem [resolvable:$true] %s523
          %526 = dma.hbm_to_vmem [thread:$0]  %s3, 16, %s524, [#allocation7]
        $region20: #{tpu_custom_call.1} parent=11 // pred_fallthru
          _
        // Predicated region
        $region21: #{tpu_custom_call.1} parent=11 // pred_check
          %p527 = pneg %p157
        $region22: #{tpu_custom_call.1} parent=11 // pred_check_branch
          %529 = sbr.rel (%p527) target = $region24
        $region23: #{tpu_custom_call.1} parent=11 // pred_region
          %s531 = ssub.s32 1024, 1024
          %532 = vsyncadd [#allocation10], %s531
          %s533 = sshll.u32 [#allocation9], 4
          %s534 = int_to_ptr.vmem [resolvable:$true] %s533
          %539 = dma.hbm_to_vmem [thread:$0]  %s4, 1024, %s534, [#allocation10], 64, 64, 4
        $region24: #{tpu_custom_call.1} parent=11 // pred_fallthru
          _
        // Predicated region
        $region25: #{tpu_custom_call.1} parent=11 // pred_check
          %p540 = pneg %p178
        $region26: #{tpu_custom_call.1} parent=11 // pred_check_branch
          %542 = sbr.rel (%p540) target = $region28
        $region27: #{tpu_custom_call.1} parent=11 // pred_region
          %s544 = ssub.s32 16, 16
          %545 = vsyncadd [#allocation10], %s544
          %s547 = sshll.u32 [#allocation11], 4
          %s548 = int_to_ptr.vmem [resolvable:$true] %s547
          %550 = dma.hbm_to_vmem [thread:$0]  %s5, 16, %s548, [#allocation10]
        $region28: #{tpu_custom_call.1} parent=11 // pred_fallthru
          _
        // Predicated region
        $region29: #{tpu_custom_call.1} parent=11 // pred_check
          %p551 = pneg %p199
        $region30: #{tpu_custom_call.1} parent=11 // pred_check_branch
          %553 = sbr.rel (%p551) target = $region32
        $region31: #{tpu_custom_call.1} parent=11 // pred_region
          %s555 = ssub.s32 16, 16
          %556 = vsyncadd [#allocation13], %s555
          %s558 = sshll.u32 [#allocation12], 4
          %s559 = int_to_ptr.vmem [resolvable:$true] %s558
          %561 = dma.hbm_to_vmem [thread:$0]  %s6, 16, %s559, [#allocation13]
        $region32: #{tpu_custom_call.1} parent=11 // pred_fallthru
          _
        // Predicated region
        $region33: #{tpu_custom_call.1} parent=11 // pred_check
          %p562 = pneg %p220
        $region34: #{tpu_custom_call.1} parent=11 // pred_check_branch
          %564 = sbr.rel (%p562) target = $region36
        $region35: #{tpu_custom_call.1} parent=11 // pred_region
          %s566 = ssub.s32 16, 16
          %567 = vsyncadd [#allocation13], %s566
          %s569 = sshll.u32 [#allocation14], 4
          %s570 = int_to_ptr.vmem [resolvable:$true] %s569
          %572 = dma.hbm_to_vmem [thread:$0]  %s7, 16, %s570, [#allocation13]
        $region36: #{tpu_custom_call.1} parent=11 // pred_fallthru
          _
        // Predicated region
        $region37: #{tpu_custom_call.1} parent=11 // pred_check
          %p573 = pneg %p241
        $region38: #{tpu_custom_call.1} parent=11 // pred_check_branch
          %575 = sbr.rel (%p573) target = $region40
        $region39: #{tpu_custom_call.1} parent=11 // pred_region
          %s577 = ssub.s32 16, 16
          %578 = vsyncadd [#allocation16], %s577
          %s580 = sshll.u32 [#allocation15], 4
          %s581 = int_to_ptr.vmem [resolvable:$true] %s580
          %583 = dma.hbm_to_vmem [thread:$0]  %s8, 16, %s581, [#allocation16]
        $region40: #{tpu_custom_call.1} parent=11 // pred_fallthru
          _
        // Predicated region
        $region41: #{tpu_custom_call.1} parent=11 // pred_check
          %p584 = pneg %p262
        $region42: #{tpu_custom_call.1} parent=11 // pred_check_branch
          %586 = sbr.rel (%p584) target = $region44
        $region43: #{tpu_custom_call.1} parent=11 // pred_region
          %s588 = ssub.s32 16, 16
          %589 = vsyncadd [#allocation16], %s588
          %s591 = sshll.u32 [#allocation17], 4
          %s592 = int_to_ptr.vmem [resolvable:$true] %s591
          %594 = dma.hbm_to_vmem [thread:$0]  %s9, 16, %s592, [#allocation16]
        $region44: #{tpu_custom_call.1} parent=11 // pred_fallthru
          _
        // Predicated region
        $region45: #{tpu_custom_call.1} parent=11 // pred_check
          %p595 = pneg %p283
        $region46: #{tpu_custom_call.1} parent=11 // pred_check_branch
          %597 = sbr.rel (%p595) target = $region48
        $region47: #{tpu_custom_call.1} parent=11 // pred_region
          %s599 = ssub.s32 1024, 1024
          %600 = vsyncadd [#allocation19], %s599
          %s601 = sshll.u32 [#allocation18], 4
          %s602 = int_to_ptr.vmem [resolvable:$true] %s601
          %607 = dma.hbm_to_vmem [thread:$0]  %s10, 1024, %s602, [#allocation19], 64, 64, 4
        $region48: #{tpu_custom_call.1} parent=11 // pred_fallthru
          _
        // Predicated region
        $region49: #{tpu_custom_call.1} parent=11 // pred_check
          %p608 = pneg %p304
        $region50: #{tpu_custom_call.1} parent=11 // pred_check_branch
          %610 = sbr.rel (%p608) target = $region52
        $region51: #{tpu_custom_call.1} parent=11 // pred_region
          %s612 = ssub.s32 16, 16
          %613 = vsyncadd [#allocation19], %s612
          %s615 = sshll.u32 [#allocation20], 4
          %s616 = int_to_ptr.vmem [resolvable:$true] %s615
          %618 = dma.hbm_to_vmem [thread:$0]  %s11, 16, %s616, [#allocation19]
        $region52: #{tpu_custom_call.1} parent=11 // pred_fallthru
          _
        // Predicated region
        $region53: #{tpu_custom_call.1} parent=11 // pred_check
          %p619 = pneg %p325
        $region54: #{tpu_custom_call.1} parent=11 // pred_check_branch
          %621 = sbr.rel (%p619) target = $region56
        $region55: #{tpu_custom_call.1} parent=11 // pred_region
          %s623 = ssub.s32 3072, 3072
          %624 = vsyncadd [#allocation22], %s623
          %s625 = sshll.u32 [#allocation21], 4
          %s626 = int_to_ptr.vmem [resolvable:$true] %s625
          %631 = dma.hbm_to_vmem [thread:$0]  %s12, 3072, %s626, [#allocation22], 192, 192, 12
        $region56: #{tpu_custom_call.1} parent=11 // pred_fallthru
          _
        // Predicated region
        $region57: #{tpu_custom_call.1} parent=11 // pred_check
          %p632 = pneg %p346
        $region58: #{tpu_custom_call.1} parent=11 // pred_check_branch
          %634 = sbr.rel (%p632) target = $region60
        $region59: #{tpu_custom_call.1} parent=11 // pred_region
          _
        $region60: #{tpu_custom_call.1} parent=11 // pred_fallthru
          _
        // Predicated region
        $region61: #{tpu_custom_call.1} parent=11 // pred_check
          %p635 = pneg %p367
        $region62: #{tpu_custom_call.1} parent=11 // pred_check_branch
          %637 = sbr.rel (%p635) target = $region64
        $region63: #{tpu_custom_call.1} parent=11 // pred_region
          %s639 = ssub.s32 1024, 1024
          %640 = vsyncadd [#allocation22], %s639
          %s641 = sshll.u32 [#allocation23], 4
          %s642 = int_to_ptr.vmem [resolvable:$true] %s641
          %647 = dma.hbm_to_vmem [thread:$0]  %s14, 1024, %s642, [#allocation22], 64, 64, 4
        $region64: #{tpu_custom_call.1} parent=11 // pred_fallthru
          _
        // Predicated region
        $region65: #{tpu_custom_call.1} parent=11 // pred_check
          %p648 = pneg %p388
        $region66: #{tpu_custom_call.1} parent=11 // pred_check_branch
          %650 = sbr.rel (%p648) target = $region68
        $region67: #{tpu_custom_call.1} parent=11 // pred_region
          %s652 = ssub.s32 16, 16
          %653 = vsyncadd [#allocation25], %s652
          %s655 = sshll.u32 [#allocation24], 4
          %s656 = int_to_ptr.vmem [resolvable:$true] %s655
          %658 = dma.hbm_to_vmem [thread:$0]  %s15, 16, %s656, [#allocation25]
        $region68: #{tpu_custom_call.1} parent=11 // pred_fallthru
          _
        // Predicated region
        $region69: #{tpu_custom_call.1} parent=11 // pred_check
          %p659 = pneg %p409
        $region70: #{tpu_custom_call.1} parent=11 // pred_check_branch
          %661 = sbr.rel (%p659) target = $region72
        $region71: #{tpu_custom_call.1} parent=11 // pred_region
          %s663 = ssub.s32 16, 16
          %664 = vsyncadd [#allocation25], %s663
          %s666 = sshll.u32 [#allocation26], 4
          %s667 = int_to_ptr.vmem [resolvable:$true] %s666
          %669 = dma.hbm_to_vmem [thread:$0]  %s16, 16, %s667, [#allocation25]
        $region72: #{tpu_custom_call.1} parent=11 // pred_fallthru
          _
        // Predicated region
        $region73: #{tpu_custom_call.1} parent=11 // pred_check
          %p670 = pneg %p430
        $region74: #{tpu_custom_call.1} parent=11 // pred_check_branch
          %672 = sbr.rel (%p670) target = $region76
        $region75: #{tpu_custom_call.1} parent=11 // pred_region
          %s674 = ssub.s32 16, 16
          %675 = vsyncadd [#allocation28], %s674
          %s677 = sshll.u32 [#allocation27], 4
          %s678 = int_to_ptr.vmem [resolvable:$true] %s677
          %680 = dma.hbm_to_vmem [thread:$0]  %s17, 16, %s678, [#allocation28]
        $region76: #{tpu_custom_call.1} parent=11 // pred_fallthru
          _
        // Predicated region
        $region77: #{tpu_custom_call.1} parent=11 // pred_check
          %p681 = pneg %p451
        $region78: #{tpu_custom_call.1} parent=11 // pred_check_branch
          %683 = sbr.rel (%p681) target = $region80
        $region79: #{tpu_custom_call.1} parent=11 // pred_region
          _
        $region80: #{tpu_custom_call.1} parent=11 // pred_fallthru
          _
        // Predicated region
        $region81: #{tpu_custom_call.1} parent=11 // pred_check
          %p684 = pneg %p472
        $region82: #{tpu_custom_call.1} parent=11 // pred_check_branch
          %686 = sbr.rel (%p684) target = $region84
        $region83: #{tpu_custom_call.1} parent=11 // pred_region
          _
        $region84: #{tpu_custom_call.1} parent=11 // pred_fallthru
          _
      $region12: #{tpu_custom_call.1} parent=5 // pred_fallthru
        _
      %p687 = scmp.lt.s32.totalorder %s42, 2
      // Predicated region
      $region85: #{tpu_custom_call.1} parent=5 // pred_check
        %p688 = pneg %p687
      $region86: #{tpu_custom_call.1} parent=5 // pred_check_branch
        %690 = sbr.rel (%p688) target = $region88
      $region87: #{tpu_custom_call.1} parent=5 // pred_region
        // Predicated region
        $region89: #{tpu_custom_call.1} parent=87 // pred_check
          %p691 = pneg %p62
        $region90: #{tpu_custom_call.1} parent=87 // pred_check_branch
          %693 = sbr.rel (%p691) target = $region92
        $region91: #{tpu_custom_call.1} parent=87 // pred_region
          %s694 = sand.u32 %s52, 1
          %s695 = scalar_lea.sflag [#allocation4], %s694
          %s696 = sand.u32 %s52, 1
          %s697 = smul.addr %s696, 16
          %s698 = scalar_lea.vmem [#allocation3], %s697
          %s700 = ssub.s32 256, 256
          %701 = vsyncadd %s695, %s700
          %s702 = smul.addr %s42, 2
          %s703 = smul.addr %s702, 128
          %s704 = scalar_lea.hbm %s0, %s703
          %s705 = sshll.u32 %s698, 4
          %s706 = int_to_ptr.vmem [resolvable:$true] %s705
          %711 = dma.hbm_to_vmem [thread:$0]  %s704, 256, %s706, %s695, 128, 128, 8
        $region92: #{tpu_custom_call.1} parent=87 // pred_fallthru
          _
        // Predicated region
        $region93: #{tpu_custom_call.1} parent=87 // pred_check
          %p712 = pneg %p88
        $region94: #{tpu_custom_call.1} parent=87 // pred_check_branch
          %714 = sbr.rel (%p712) target = $region96
        $region95: #{tpu_custom_call.1} parent=87 // pred_region
          %s715 = sand.u32 %s42, 1
          %s716 = scalar_lea.sflag [#allocation7], %s715
          %s717 = sand.u32 %s78, 1
          %s718 = smul.addr %s717, 32
          %s719 = scalar_lea.vmem [#allocation6], %s718
          %s721 = ssub.s32 512, 512
          %722 = vsyncadd %s716, %s721
          %s723 = smul.addr %s42, 4
          %s724 = smul.addr %s723, 128
          %s725 = scalar_lea.hbm %s1, %s724
          %s726 = sshll.u32 %s719, 4
          %s727 = int_to_ptr.vmem [resolvable:$true] %s726
          %732 = dma.hbm_to_vmem [thread:$0]  %s725, 512, %s727, %s716, 128, 128, 8
        $region96: #{tpu_custom_call.1} parent=87 // pred_fallthru
          _
      $region88: #{tpu_custom_call.1} parent=5 // pred_fallthru
        _
      %p733 = scmp.le.s32.totalorder 1, %s42
      %p734 = scmp.lt.s32.totalorder %s42, 3
      %p735 = pnand %p733, %p734
      %p736 = pneg %p735
      // Predicated region
      $region97: #{tpu_custom_call.1} parent=5 // pred_check
        _
      $region98: #{tpu_custom_call.1} parent=5 // pred_check_branch
        %738 = sbr.rel (%p735) target = $region100
      $region99: #{tpu_custom_call.1} parent=5 // pred_region
        %s739 = ssub.s32 %s42, 1
        %s740 = sand.u32 %s55, 1
        %s741 = scalar_lea.sflag [#allocation4], %s740
        %s742 = sand.u32 %s55, 1
        %s743 = smul.addr %s742, 16
        %s744 = scalar_lea.vmem [#allocation3], %s743
        // Predicated region
        $region101: #{tpu_custom_call.1} parent=99 // pred_check
          %p745 = pneg %p68
        $region102: #{tpu_custom_call.1} parent=99 // pred_check_branch
          %747 = sbr.rel (%p745) target = $region104
        $region103: #{tpu_custom_call.1} parent=99 // pred_region
          %748 = dma.done %s741, 256
        $region104: #{tpu_custom_call.1} parent=99 // pred_fallthru
          _
        %s749 = sand.u32 %s47, 1
        %s750 = scalar_lea.sflag [#allocation7], %s749
        %s751 = sand.u32 %s81, 1
        %s752 = smul.addr %s751, 32
        %s753 = scalar_lea.vmem [#allocation6], %s752
        // Predicated region
        $region105: #{tpu_custom_call.1} parent=99 // pred_check
          %p754 = pneg %p94
        $region106: #{tpu_custom_call.1} parent=99 // pred_check_branch
          %756 = sbr.rel (%p754) target = $region108
        $region107: #{tpu_custom_call.1} parent=99 // pred_region
          %757 = dma.done %s750, 512
        $region108: #{tpu_custom_call.1} parent=99 // pred_fallthru
          _
        // Predicated region
        $region109: #{tpu_custom_call.1} parent=99 // pred_check
          %p758 = pneg %p136
        $region110: #{tpu_custom_call.1} parent=99 // pred_check_branch
          %760 = sbr.rel (%p758) target = $region112
        $region111: #{tpu_custom_call.1} parent=99 // pred_region
          %761 = dma.done [#allocation7], 16
        $region112: #{tpu_custom_call.1} parent=99 // pred_fallthru
          _
        // Predicated region
        $region113: #{tpu_custom_call.1} parent=99 // pred_check
          %p762 = pneg %p157
        $region114: #{tpu_custom_call.1} parent=99 // pred_check_branch
          %764 = sbr.rel (%p762) target = $region116
        $region115: #{tpu_custom_call.1} parent=99 // pred_region
          %765 = dma.done [#allocation10], 1024
        $region116: #{tpu_custom_call.1} parent=99 // pred_fallthru
          _
        // Predicated region
        $region117: #{tpu_custom_call.1} parent=99 // pred_check
          %p766 = pneg %p178
        $region118: #{tpu_custom_call.1} parent=99 // pred_check_branch
          %768 = sbr.rel (%p766) target = $region120
        $region119: #{tpu_custom_call.1} parent=99 // pred_region
          %769 = dma.done [#allocation10], 16
        $region120: #{tpu_custom_call.1} parent=99 // pred_fallthru
          _
        // Predicated region
        $region121: #{tpu_custom_call.1} parent=99 // pred_check
          %p770 = pneg %p199
        $region122: #{tpu_custom_call.1} parent=99 // pred_check_branch
          %772 = sbr.rel (%p770) target = $region124
        $region123: #{tpu_custom_call.1} parent=99 // pred_region
          %773 = dma.done [#allocation13], 16
        $region124: #{tpu_custom_call.1} parent=99 // pred_fallthru
          _
        // Predicated region
        $region125: #{tpu_custom_call.1} parent=99 // pred_check
          %p774 = pneg %p220
        $region126: #{tpu_custom_call.1} parent=99 // pred_check_branch
          %776 = sbr.rel (%p774) target = $region128
        $region127: #{tpu_custom_call.1} parent=99 // pred_region
          %777 = dma.done [#allocation13], 16
        $region128: #{tpu_custom_call.1} parent=99 // pred_fallthru
          _
        // Predicated region
        $region129: #{tpu_custom_call.1} parent=99 // pred_check
          %p778 = pneg %p241
        $region130: #{tpu_custom_call.1} parent=99 // pred_check_branch
          %780 = sbr.rel (%p778) target = $region132
        $region131: #{tpu_custom_call.1} parent=99 // pred_region
          %781 = dma.done [#allocation16], 16
        $region132: #{tpu_custom_call.1} parent=99 // pred_fallthru
          _
        // Predicated region
        $region133: #{tpu_custom_call.1} parent=99 // pred_check
          %p782 = pneg %p262
        $region134: #{tpu_custom_call.1} parent=99 // pred_check_branch
          %784 = sbr.rel (%p782) target = $region136
        $region135: #{tpu_custom_call.1} parent=99 // pred_region
          %785 = dma.done [#allocation16], 16
        $region136: #{tpu_custom_call.1} parent=99 // pred_fallthru
          _
        // Predicated region
        $region137: #{tpu_custom_call.1} parent=99 // pred_check
          %p786 = pneg %p283
        $region138: #{tpu_custom_call.1} parent=99 // pred_check_branch
          %788 = sbr.rel (%p786) target = $region140
        $region139: #{tpu_custom_call.1} parent=99 // pred_region
          %789 = dma.done [#allocation19], 1024
        $region140: #{tpu_custom_call.1} parent=99 // pred_fallthru
          _
        // Predicated region
        $region141: #{tpu_custom_call.1} parent=99 // pred_check
          %p790 = pneg %p304
        $region142: #{tpu_custom_call.1} parent=99 // pred_check_branch
          %792 = sbr.rel (%p790) target = $region144
        $region143: #{tpu_custom_call.1} parent=99 // pred_region
          %793 = dma.done [#allocation19], 16
        $region144: #{tpu_custom_call.1} parent=99 // pred_fallthru
          _
        // Predicated region
        $region145: #{tpu_custom_call.1} parent=99 // pred_check
          %p794 = pneg %p325
        $region146: #{tpu_custom_call.1} parent=99 // pred_check_branch
          %796 = sbr.rel (%p794) target = $region148
        $region147: #{tpu_custom_call.1} parent=99 // pred_region
          %797 = dma.done [#allocation22], 3072
        $region148: #{tpu_custom_call.1} parent=99 // pred_fallthru
          _
        // Predicated region
        $region149: #{tpu_custom_call.1} parent=99 // pred_check
          %p798 = pneg %p367
        $region150: #{tpu_custom_call.1} parent=99 // pred_check_branch
          %800 = sbr.rel (%p798) target = $region152
        $region151: #{tpu_custom_call.1} parent=99 // pred_region
          %801 = dma.done [#allocation22], 1024
        $region152: #{tpu_custom_call.1} parent=99 // pred_fallthru
          _
        // Predicated region
        $region153: #{tpu_custom_call.1} parent=99 // pred_check
          %p802 = pneg %p388
        $region154: #{tpu_custom_call.1} parent=99 // pred_check_branch
          %804 = sbr.rel (%p802) target = $region156
        $region155: #{tpu_custom_call.1} parent=99 // pred_region
          %805 = dma.done [#allocation25], 16
        $region156: #{tpu_custom_call.1} parent=99 // pred_fallthru
          _
        // Predicated region
        $region157: #{tpu_custom_call.1} parent=99 // pred_check
          %p806 = pneg %p409
        $region158: #{tpu_custom_call.1} parent=99 // pred_check_branch
          %808 = sbr.rel (%p806) target = $region160
        $region159: #{tpu_custom_call.1} parent=99 // pred_region
          %809 = dma.done [#allocation25], 16
        $region160: #{tpu_custom_call.1} parent=99 // pred_fallthru
          _
        // Predicated region
        $region161: #{tpu_custom_call.1} parent=99 // pred_check
          %p810 = pneg %p430
        $region162: #{tpu_custom_call.1} parent=99 // pred_check_branch
          %812 = sbr.rel (%p810) target = $region164
        $region163: #{tpu_custom_call.1} parent=99 // pred_region
          %813 = dma.done [#allocation28], 16
        $region164: #{tpu_custom_call.1} parent=99 // pred_fallthru
          _
        %s814 = sand.u32 %s55, 1
        %s815 = scalar_lea.sflag [#allocation4], %s814
        %s816 = sand.u32 %s55, 1
        %s817 = smul.addr %s816, 16
        %s818 = scalar_lea.vmem [#allocation3], %s817
        %p819 = pneg %p68
        %p820 = pneg %p65
        %s821 = sand.u32 %s47, 1
        %s822 = scalar_lea.sflag [#allocation7], %s821
        %s823 = sand.u32 %s81, 1
        %s824 = smul.addr %s823, 32
        %s825 = scalar_lea.vmem [#allocation6], %s824
        %p826 = pneg %p94
        %p827 = pneg %p91
        %p828 = pneg %p115
        %p829 = pneg %p112
        %p830 = pneg %p136
        %p831 = pneg %p133
        %p832 = pneg %p157
        %p833 = pneg %p154
        %p834 = pneg %p178
        %p835 = pneg %p175
        %p836 = pneg %p199
        %p837 = pneg %p196
        %p838 = pneg %p220
        %p839 = pneg %p217
        %p840 = pneg %p241
        %p841 = pneg %p238
        %p842 = pneg %p262
        %p843 = pneg %p259
        %p844 = pneg %p283
        %p845 = pneg %p280
        %p846 = pneg %p304
        %p847 = pneg %p301
        %p848 = pneg %p325
        %p849 = pneg %p322
        %p850 = pneg %p346
        %p851 = pneg %p343
        %p852 = pneg %p367
        %p853 = pneg %p364
        %p854 = pneg %p388
        %p855 = pneg %p385
        %p856 = pneg %p409
        %p857 = pneg %p406
        %p858 = pneg %p430
        %p859 = pneg %p427
        %p860 = pneg %p451
        %p861 = pneg %p448
        %p862 = pneg %p472
        %p863 = pneg %p469
        %p864 = pneg %p498
        %p865 = pneg %p495
        %s866 = sand.u32 %s485, 1
        %s867 = scalar_lea.sflag [#allocation5], %s866
        %s868 = sand.u32 %s485, 1
        %s869 = smul.addr %s868, 16
        %s870 = scalar_lea.vmem [#allocation29], %s869
        %v872 = vld [vmem:[%s744] sm:$0xff]
        %v873 = vld [vmem:[%s744 + $0x8] sm:$0xff]
        %v874 = vld [vmem:[%s753] sm:$0xff]
        %v875 = vld [vmem:[%s753 + $0x8] sm:$0xff]
        %v876 = vld [vmem:[%s753 + $0x10] sm:$0xff]
        %v877 = vld [vmem:[%s753 + $0x18] sm:$0xff]
        %v878 = vld [vmem:[%s2] sm:$0x1]
        %v879 = vld [vmem:[#allocation8] sm:$0x1]
        %880 = vadd.xlane.f32.xlu0 %v874
        %v881 = vpop.xlane.xlu0 %880
        %882 = vadd.xlane.f32.xlu0 %v875
        %v883 = vpop.xlane.xlu0 %882
        %884 = vadd.xlane.f32.xlu0 %v876
        %v885 = vpop.xlane.xlu0 %884
        %886 = vadd.xlane.f32.xlu0 %v877
        %v887 = vpop.xlane.xlu0 %886
        %v888 = vrcp.pop 128.0
        %v889 = vmul.f32 %v881, %v888
        %v890 = vmul.f32 %v883, %v888
        %v891 = vmul.f32 %v885, %v888
        %v892 = vmul.f32 %v887, %v888
        %v893 = vsub.f32 %v874, %v889
        %v894 = vsub.f32 %v875, %v890
        %v895 = vsub.f32 %v876, %v891
        %v896 = vsub.f32 %v877, %v892
        %v897 = vmul.f32 %v893, %v893
        %v898 = vmul.f32 %v894, %v894
        %v899 = vmul.f32 %v895, %v895
        %v900 = vmul.f32 %v896, %v896
        %901 = vadd.xlane.f32.xlu0 %v897
        %v902 = vpop.xlane.xlu0 %901
        %903 = vadd.xlane.f32.xlu0 %v898
        %v904 = vpop.xlane.xlu0 %903
        %905 = vadd.xlane.f32.xlu0 %v899
        %v906 = vpop.xlane.xlu0 %905
        %907 = vadd.xlane.f32.xlu0 %v900
        %v908 = vpop.xlane.xlu0 %907
        %v909 = vmul.f32 %v902, %v888
        %v910 = vmul.f32 %v904, %v888
        %v911 = vmul.f32 %v906, %v888
        %v912 = vmul.f32 %v908, %v888
        %v913 = vadd.f32 %v909, 1e-05
        %v914 = vadd.f32 %v910, 1e-05
        %v915 = vadd.f32 %v911, 1e-05
        %v916 = vadd.f32 %v912, 1e-05
        %v917 = vrsqrt.pop %v913
        %v918 = vrsqrt.pop %v914
        %v919 = vrsqrt.pop %v915
        %v920 = vrsqrt.pop %v916
        %v921 = vmul.f32 %v893, %v917
        %v922 = vmul.f32 %v894, %v918
        %v923 = vmul.f32 %v895, %v919
        %v924 = vmul.f32 %v896, %v920
        %v926 = vlaneseq
        %v927 = vshrl.u32 %v926, 7
        %v928 = vsub.s32 0, %v927
        %v929 = vrot.slane %v878, %v928
        %v931 = vmul.f32 %v921, %v929
        %v932 = vmul.f32 %v922, %v929
        %v933 = vmul.f32 %v923, %v929
        %v934 = vmul.f32 %v924, %v929
        %v936 = vlaneseq
        %v937 = vshrl.u32 %v936, 7
        %v938 = vsub.s32 0, %v937
        %v939 = vrot.slane %v879, %v938
        %v941 = vadd.f32 %v931, %v939
        %v942 = vadd.f32 %v932, %v939
        %v943 = vadd.f32 %v933, %v939
        %v944 = vadd.f32 %v934, %v939
        %v945 = vpack.c.bf16 %v942, %v941
        %v946 = vpack.c.bf16 %v944, %v943
        %v947 = vld [vmem:[#allocation9] sm:$0xf]
        %v948 = vld [vmem:[#allocation9 + $0x4] sm:$0xf]
        %v949 = vld [vmem:[#allocation9 + $0x8] sm:$0xf]
        %v950 = vld [vmem:[#allocation9 + $0xc] sm:$0xf]
        %v951 = vld [vmem:[#allocation9 + $0x10] sm:$0xf]
        %v952 = vld [vmem:[#allocation9 + $0x14] sm:$0xf]
        %v953 = vld [vmem:[#allocation9 + $0x18] sm:$0xf]
        %v954 = vld [vmem:[#allocation9 + $0x1c] sm:$0xf]
        %v955 = vld [vmem:[#allocation9 + $0x20] sm:$0xf]
        %v956 = vld [vmem:[#allocation9 + $0x24] sm:$0xf]
        %v957 = vld [vmem:[#allocation9 + $0x28] sm:$0xf]
        %v958 = vld [vmem:[#allocation9 + $0x2c] sm:$0xf]
        %v959 = vld [vmem:[#allocation9 + $0x30] sm:$0xf]
        %v960 = vld [vmem:[#allocation9 + $0x34] sm:$0xf]
        %v961 = vld [vmem:[#allocation9 + $0x38] sm:$0xf]
        %v962 = vld [vmem:[#allocation9 + $0x3c] sm:$0xf]
        %v963 = vld [vmem:[#allocation11] sm:$0x1]
        %v965 = vlaneseq
        %v966 = vshrl.u32 %v965, 7
        %v967 = vsub.s32 0, %v966
        %v968 = vrot.slane %v963, %v967
        %v986 = vunpack.c.l.b16 %v947
        %v987 = vunpack.c.l.b16 %v948
        %v988 = vunpack.c.l.b16 %v949
        %v989 = vunpack.c.l.b16 %v950
        %v990 = vunpack.c.l.b16 %v951
        %v991 = vunpack.c.l.b16 %v952
        %v992 = vunpack.c.l.b16 %v953
        %v993 = vunpack.c.l.b16 %v954
        %v994 = vunpack.c.l.b16 %v955
        %v995 = vunpack.c.l.b16 %v956
        %v996 = vunpack.c.l.b16 %v957
        %v997 = vunpack.c.l.b16 %v958
        %v998 = vunpack.c.l.b16 %v959
        %v999 = vunpack.c.l.b16 %v960
        %v1000 = vunpack.c.l.b16 %v961
        %v1001 = vunpack.c.l.b16 %v962
        %v1002 = vpack.c.b16 %v987, %v986
        %v1003 = vpack.c.b16 %v989, %v988
        %v1004 = vpack.c.b16 %v991, %v990
        %v1005 = vpack.c.b16 %v993, %v992
        %v1006 = vpack.c.b16 %v995, %v994
        %v1007 = vpack.c.b16 %v997, %v996
        %v1008 = vpack.c.b16 %v999, %v998
        %v1009 = vpack.c.b16 %v1001, %v1000
        %1018 = vmatprep.subr.bf16.mxu0 0
        %1019 = vmatpush1.bf16.msra.mxu0 %v1002
        %1020 = vmatprep.subr.bf16.mxu0 0
        %1021 = vmatpush1.bf16.msra.mxu0 %v1003
        %1022 = vmatprep.subr.bf16.mxu0 0
        %1023 = vmatpush1.bf16.msra.mxu0 %v1004
        %1024 = vmatprep.subr.bf16.mxu0 0
        %1025 = vmatpush1.bf16.msra.mxu0 %v1005
        %1026 = vmatprep.subr.bf16.mxu0 0
        %1027 = vmatpush1.bf16.msra.mxu0 %v1006
        %1028 = vmatprep.subr.bf16.mxu0 0
        %1029 = vmatpush1.bf16.msra.mxu0 %v1007
        %1030 = vmatprep.subr.bf16.mxu0 0
        %1031 = vmatpush1.bf16.msra.mxu0 %v1008
        %1032 = vmatprep.subr.bf16.mxu0 0
        %1033 = vmatpush1.bf16.msra.mxu0 %v1009
        %1034 = vmatprep.subr.bf16.mxu0 0
        %1035 = vmatpush1.bf16.msra.mxu0 0
        %1036 = vmatprep.subr.bf16.mxu0 0
        %1037 = vmatpush1.bf16.msra.mxu0 0
        %1038 = vmatprep.subr.bf16.mxu0 0
        %1039 = vmatpush1.bf16.msra.mxu0 0
        %1040 = vmatprep.subr.bf16.mxu0 0
        %1041 = vmatpush1.bf16.msra.mxu0 0
        %1042 = vmatprep.subr.bf16.mxu0 0
        %1043 = vmatpush1.bf16.msra.mxu0 0
        %1044 = vmatprep.subr.bf16.mxu0 0
        %1045 = vmatpush1.bf16.msra.mxu0 0
        %1046 = vmatprep.subr.bf16.mxu0 0
        %1047 = vmatpush1.bf16.msra.mxu0 0
        %1048 = vmatprep.subr.bf16.mxu0 0
        %1049 = vmatpush1.bf16.msra.mxu0 0
        %1050 = vmatprep.mubr.bf16.mxu0 0
        %1051 = vmatmul.mubr.bf16.gmra.mrb[0].mxu0 %v945
        %v1052 = vpop.f32.mrb[0].mxu0
        %v1053 = vadd.f32 %v968, %v1052
        %v1054 = vpop.f32.mrb[0].mxu0
        %v1055 = vpop.f32.mrb[0].mxu0
        %v1056 = vadd.f32 %v968, %v1055
        %v1057 = vpop.f32.mrb[0].mxu0
        %1058 = vmatprep.mubr.bf16.mxu0 0
        %1059 = vmatmul.mubr.bf16.gmra.mrb[0].mxu0 %v946
        %v1060 = vpop.f32.mrb[0].mxu0
        %v1061 = vadd.f32 %v968, %v1060
        %v1062 = vpop.f32.mrb[0].mxu0
        %v1063 = vpop.f32.mrb[0].mxu0
        %v1064 = vadd.f32 %v968, %v1063
        %v1065 = vpop.f32.mrb[0].mxu0
        %1066 = vdwg.mxu0
        %v1067 = vld [vmem:[#allocation12] sm:$0x1]
        %v1068 = vld [vmem:[#allocation14] sm:$0x1]
        %1069 = vadd.xlane.f32.xlu0 %v1053
        %v1070 = vpop.xlane.xlu0 %1069
        %1071 = vadd.xlane.f32.xlu0 %v1056
        %v1072 = vpop.xlane.xlu0 %1071
        %1073 = vadd.xlane.f32.xlu0 %v1061
        %v1074 = vpop.xlane.xlu0 %1073
        %1075 = vadd.xlane.f32.xlu0 %v1064
        %v1076 = vpop.xlane.xlu0 %1075
        %v1077 = vmul.f32 %v1070, %v888
        %v1078 = vmul.f32 %v1072, %v888
        %v1079 = vmul.f32 %v1074, %v888
        %v1080 = vmul.f32 %v1076, %v888
        %v1081 = vsub.f32 %v1053, %v1077
        %v1082 = vsub.f32 %v1056, %v1078
        %v1083 = vsub.f32 %v1061, %v1079
        %v1084 = vsub.f32 %v1064, %v1080
        %v1085 = vmul.f32 %v1081, %v1081
        %v1086 = vmul.f32 %v1082, %v1082
        %v1087 = vmul.f32 %v1083, %v1083
        %v1088 = vmul.f32 %v1084, %v1084
        %1089 = vadd.xlane.f32.xlu0 %v1085
        %v1090 = vpop.xlane.xlu0 %1089
        %1091 = vadd.xlane.f32.xlu0 %v1086
        %v1092 = vpop.xlane.xlu0 %1091
        %1093 = vadd.xlane.f32.xlu0 %v1087
        %v1094 = vpop.xlane.xlu0 %1093
        %1095 = vadd.xlane.f32.xlu0 %v1088
        %v1096 = vpop.xlane.xlu0 %1095
        %v1097 = vmul.f32 %v1090, %v888
        %v1098 = vmul.f32 %v1092, %v888
        %v1099 = vmul.f32 %v1094, %v888
        %v1100 = vmul.f32 %v1096, %v888
        %v1101 = vadd.f32 %v1097, 1e-05
        %v1102 = vadd.f32 %v1098, 1e-05
        %v1103 = vadd.f32 %v1099, 1e-05
        %v1104 = vadd.f32 %v1100, 1e-05
        %v1105 = vrsqrt.pop %v1101
        %v1106 = vrsqrt.pop %v1102
        %v1107 = vrsqrt.pop %v1103
        %v1108 = vrsqrt.pop %v1104
        %v1109 = vmul.f32 %v1081, %v1105
        %v1110 = vmul.f32 %v1082, %v1106
        %v1111 = vmul.f32 %v1083, %v1107
        %v1112 = vmul.f32 %v1084, %v1108
        %v1114 = vlaneseq
        %v1115 = vshrl.u32 %v1114, 7
        %v1116 = vsub.s32 0, %v1115
        %v1117 = vrot.slane %v1067, %v1116
        %v1119 = vmul.f32 %v1109, %v1117
        %v1120 = vmul.f32 %v1110, %v1117
        %v1121 = vmul.f32 %v1111, %v1117
        %v1122 = vmul.f32 %v1112, %v1117
        %v1124 = vlaneseq
        %v1125 = vshrl.u32 %v1124, 7
        %v1126 = vsub.s32 0, %v1125
        %v1127 = vrot.slane %v1068, %v1126
        %v1129 = vadd.f32 %v1119, %v1127
        %v1130 = vadd.f32 %v1120, %v1127
        %v1131 = vadd.f32 %v1121, %v1127
        %v1132 = vadd.f32 %v1122, %v1127
        %v1133 = vpack.c.bf16 %v1130, %v1129
        %v1134 = vpack.c.bf16 %v1132, %v1131
        %v1135 = vld [vmem:[#allocation15] sm:$0x1]
        %v1136 = vld [vmem:[#allocation17] sm:$0x1]
        %1137 = vadd.xlane.f32.xlu0 %v872
        %v1138 = vpop.xlane.xlu0 %1137
        %1139 = vadd.xlane.f32.xlu0 %v873
        %v1140 = vpop.xlane.xlu0 %1139
        %v1141 = vmul.f32 %v1138, %v888
        %v1142 = vmul.f32 %v1140, %v888
        %v1143 = vsub.f32 %v872, %v1141
        %v1144 = vsub.f32 %v873, %v1142
        %v1145 = vmul.f32 %v1143, %v1143
        %v1146 = vmul.f32 %v1144, %v1144
        %1147 = vadd.xlane.f32.xlu0 %v1145
        %v1148 = vpop.xlane.xlu0 %1147
        %1149 = vadd.xlane.f32.xlu0 %v1146
        %v1150 = vpop.xlane.xlu0 %1149
        %v1151 = vmul.f32 %v1148, %v888
        %v1152 = vmul.f32 %v1150, %v888
        %v1153 = vadd.f32 %v1151, 1e-05
        %v1154 = vadd.f32 %v1152, 1e-05
        %v1155 = vrsqrt.pop %v1153
        %v1156 = vrsqrt.pop %v1154
        %v1157 = vmul.f32 %v1143, %v1155
        %v1158 = vmul.f32 %v1144, %v1156
        %v1160 = vlaneseq
        %v1161 = vshrl.u32 %v1160, 7
        %v1162 = vsub.s32 0, %v1161
        %v1163 = vrot.slane %v1135, %v1162
        %v1165 = vmul.f32 %v1157, %v1163
        %v1166 = vmul.f32 %v1158, %v1163
        %v1168 = vlaneseq
        %v1169 = vshrl.u32 %v1168, 7
        %v1170 = vsub.s32 0, %v1169
        %v1171 = vrot.slane %v1136, %v1170
        %v1173 = vadd.f32 %v1165, %v1171
        %v1174 = vadd.f32 %v1166, %v1171
        %v1175 = vpack.c.bf16 %v1174, %v1173
        %v1176 = vld [vmem:[#allocation18] sm:$0xf]
        %v1177 = vld [vmem:[#allocation18 + $0x4] sm:$0xf]
        %v1178 = vld [vmem:[#allocation18 + $0x8] sm:$0xf]
        %v1179 = vld [vmem:[#allocation18 + $0xc] sm:$0xf]
        %v1180 = vld [vmem:[#allocation18 + $0x10] sm:$0xf]
        %v1181 = vld [vmem:[#allocation18 + $0x14] sm:$0xf]
        %v1182 = vld [vmem:[#allocation18 + $0x18] sm:$0xf]
        %v1183 = vld [vmem:[#allocation18 + $0x1c] sm:$0xf]
        %v1184 = vld [vmem:[#allocation18 + $0x20] sm:$0xf]
        %v1185 = vld [vmem:[#allocation18 + $0x24] sm:$0xf]
        %v1186 = vld [vmem:[#allocation18 + $0x28] sm:$0xf]
        %v1187 = vld [vmem:[#allocation18 + $0x2c] sm:$0xf]
        %v1188 = vld [vmem:[#allocation18 + $0x30] sm:$0xf]
        %v1189 = vld [vmem:[#allocation18 + $0x34] sm:$0xf]
        %v1190 = vld [vmem:[#allocation18 + $0x38] sm:$0xf]
        %v1191 = vld [vmem:[#allocation18 + $0x3c] sm:$0xf]
        %v1192 = vld [vmem:[#allocation20] sm:$0x1]
        %v1194 = vlaneseq
        %v1195 = vshrl.u32 %v1194, 7
        %v1196 = vsub.s32 0, %v1195
        %v1197 = vrot.slane %v1192, %v1196
        %v1215 = vunpack.c.l.b16 %v1176
        %v1216 = vunpack.c.l.b16 %v1177
        %v1217 = vunpack.c.l.b16 %v1178
        %v1218 = vunpack.c.l.b16 %v1179
        %v1219 = vunpack.c.l.b16 %v1180
        %v1220 = vunpack.c.l.b16 %v1181
        %v1221 = vunpack.c.l.b16 %v1182
        %v1222 = vunpack.c.l.b16 %v1183
        %v1223 = vunpack.c.l.b16 %v1184
        %v1224 = vunpack.c.l.b16 %v1185
        %v1225 = vunpack.c.l.b16 %v1186
        %v1226 = vunpack.c.l.b16 %v1187
        %v1227 = vunpack.c.l.b16 %v1188
        %v1228 = vunpack.c.l.b16 %v1189
        %v1229 = vunpack.c.l.b16 %v1190
        %v1230 = vunpack.c.l.b16 %v1191
        %v1231 = vpack.c.b16 %v1216, %v1215
        %v1232 = vpack.c.b16 %v1218, %v1217
        %v1233 = vpack.c.b16 %v1220, %v1219
        %v1234 = vpack.c.b16 %v1222, %v1221
        %v1235 = vpack.c.b16 %v1224, %v1223
        %v1236 = vpack.c.b16 %v1226, %v1225
        %v1237 = vpack.c.b16 %v1228, %v1227
        %v1238 = vpack.c.b16 %v1230, %v1229
        %1247 = vmatprep.subr.bf16.mxu0 0
        %1248 = vmatpush1.bf16.msra.mxu0 %v1231
        %1249 = vmatprep.subr.bf16.mxu0 0
        %1250 = vmatpush1.bf16.msra.mxu0 %v1232
        %1251 = vmatprep.subr.bf16.mxu0 0
        %1252 = vmatpush1.bf16.msra.mxu0 %v1233
        %1253 = vmatprep.subr.bf16.mxu0 0
        %1254 = vmatpush1.bf16.msra.mxu0 %v1234
        %1255 = vmatprep.subr.bf16.mxu0 0
        %1256 = vmatpush1.bf16.msra.mxu0 %v1235
        %1257 = vmatprep.subr.bf16.mxu0 0
        %1258 = vmatpush1.bf16.msra.mxu0 %v1236
        %1259 = vmatprep.subr.bf16.mxu0 0
        %1260 = vmatpush1.bf16.msra.mxu0 %v1237
        %1261 = vmatprep.subr.bf16.mxu0 0
        %1262 = vmatpush1.bf16.msra.mxu0 %v1238
        %1263 = vmatprep.subr.bf16.mxu0 0
        %1264 = vmatpush1.bf16.msra.mxu0 0
        %1265 = vmatprep.subr.bf16.mxu0 0
        %1266 = vmatpush1.bf16.msra.mxu0 0
        %1267 = vmatprep.subr.bf16.mxu0 0
        %1268 = vmatpush1.bf16.msra.mxu0 0
        %1269 = vmatprep.subr.bf16.mxu0 0
        %1270 = vmatpush1.bf16.msra.mxu0 0
        %1271 = vmatprep.subr.bf16.mxu0 0
        %1272 = vmatpush1.bf16.msra.mxu0 0
        %1273 = vmatprep.subr.bf16.mxu0 0
        %1274 = vmatpush1.bf16.msra.mxu0 0
        %1275 = vmatprep.subr.bf16.mxu0 0
        %1276 = vmatpush1.bf16.msra.mxu0 0
        %1277 = vmatprep.subr.bf16.mxu0 0
        %1278 = vmatpush1.bf16.msra.mxu0 0
        %1279 = vmatprep.mubr.bf16.mxu0 0
        %1280 = vmatmul.mubr.bf16.gmra.mrb[0].mxu0 %v1175
        %v1281 = vpop.f32.mrb[0].mxu0
        %v1282 = vadd.f32 %v1197, %v1281
        %v1283 = vpop.f32.mrb[0].mxu0
        %v1284 = vpop.f32.mrb[0].mxu0
        %v1285 = vadd.f32 %v1197, %v1284
        %v1286 = vpop.f32.mrb[0].mxu0
        %1287 = vdwg.mxu0
        %v1288 = vpack.c.bf16 %v1285, %v1282
        %v1289 = vld [vmem:[#allocation21] sm:$0xf]
        %v1290 = vld [vmem:[#allocation21 + $0xc] sm:$0xf]
        %v1291 = vld [vmem:[#allocation21 + $0x18] sm:$0xf]
        %v1292 = vld [vmem:[#allocation21 + $0x24] sm:$0xf]
        %v1293 = vld [vmem:[#allocation21 + $0x30] sm:$0xf]
        %v1294 = vld [vmem:[#allocation21 + $0x3c] sm:$0xf]
        %v1295 = vld [vmem:[#allocation21 + $0x48] sm:$0xf]
        %v1296 = vld [vmem:[#allocation21 + $0x54] sm:$0xf]
        %v1297 = vld [vmem:[#allocation21 + $0x60] sm:$0xf]
        %v1298 = vld [vmem:[#allocation21 + $0x6c] sm:$0xf]
        %v1299 = vld [vmem:[#allocation21 + $0x78] sm:$0xf]
        %v1300 = vld [vmem:[#allocation21 + $0x84] sm:$0xf]
        %v1301 = vld [vmem:[#allocation21 + $0x90] sm:$0xf]
        %v1302 = vld [vmem:[#allocation21 + $0x9c] sm:$0xf]
        %v1303 = vld [vmem:[#allocation21 + $0xa8] sm:$0xf]
        %v1304 = vld [vmem:[#allocation21 + $0xb4] sm:$0xf]
        %v1305 = vld [vmem:[%s13] sm:$0x1]
        %v1307 = vlaneseq
        %v1308 = vshrl.u32 %v1307, 7
        %v1309 = vsub.s32 0, %v1308
        %v1310 = vrot.slane %v1305, %v1309
        %v1328 = vunpack.c.l.b16 %v1289
        %v1329 = vunpack.c.l.b16 %v1290
        %v1330 = vunpack.c.l.b16 %v1291
        %v1331 = vunpack.c.l.b16 %v1292
        %v1332 = vunpack.c.l.b16 %v1293
        %v1333 = vunpack.c.l.b16 %v1294
        %v1334 = vunpack.c.l.b16 %v1295
        %v1335 = vunpack.c.l.b16 %v1296
        %v1336 = vunpack.c.l.b16 %v1297
        %v1337 = vunpack.c.l.b16 %v1298
        %v1338 = vunpack.c.l.b16 %v1299
        %v1339 = vunpack.c.l.b16 %v1300
        %v1340 = vunpack.c.l.b16 %v1301
        %v1341 = vunpack.c.l.b16 %v1302
        %v1342 = vunpack.c.l.b16 %v1303
        %v1343 = vunpack.c.l.b16 %v1304
        %v1344 = vpack.c.b16 %v1329, %v1328
        %v1345 = vpack.c.b16 %v1331, %v1330
        %v1346 = vpack.c.b16 %v1333, %v1332
        %v1347 = vpack.c.b16 %v1335, %v1334
        %v1348 = vpack.c.b16 %v1337, %v1336
        %v1349 = vpack.c.b16 %v1339, %v1338
        %v1350 = vpack.c.b16 %v1341, %v1340
        %v1351 = vpack.c.b16 %v1343, %v1342
        %1360 = vmatprep.subr.bf16.mxu0 0
        %1361 = vmatpush1.bf16.msra.mxu0 %v1344
        %1362 = vmatprep.subr.bf16.mxu0 0
        %1363 = vmatpush1.bf16.msra.mxu0 %v1345
        %1364 = vmatprep.subr.bf16.mxu0 0
        %1365 = vmatpush1.bf16.msra.mxu0 %v1346
        %1366 = vmatprep.subr.bf16.mxu0 0
        %1367 = vmatpush1.bf16.msra.mxu0 %v1347
        %1368 = vmatprep.subr.bf16.mxu0 0
        %1369 = vmatpush1.bf16.msra.mxu0 %v1348
        %1370 = vmatprep.subr.bf16.mxu0 0
        %1371 = vmatpush1.bf16.msra.mxu0 %v1349
        %1372 = vmatprep.subr.bf16.mxu0 0
        %1373 = vmatpush1.bf16.msra.mxu0 %v1350
        %1374 = vmatprep.subr.bf16.mxu0 0
        %1375 = vmatpush1.bf16.msra.mxu0 %v1351
        %1376 = vmatprep.subr.bf16.mxu0 0
        %1377 = vmatpush1.bf16.msra.mxu0 0
        %1378 = vmatprep.subr.bf16.mxu0 0
        %1379 = vmatpush1.bf16.msra.mxu0 0
        %1380 = vmatprep.subr.bf16.mxu0 0
        %1381 = vmatpush1.bf16.msra.mxu0 0
        %1382 = vmatprep.subr.bf16.mxu0 0
        %1383 = vmatpush1.bf16.msra.mxu0 0
        %1384 = vmatprep.subr.bf16.mxu0 0
        %1385 = vmatpush1.bf16.msra.mxu0 0
        %1386 = vmatprep.subr.bf16.mxu0 0
        %1387 = vmatpush1.bf16.msra.mxu0 0
        %1388 = vmatprep.subr.bf16.mxu0 0
        %1389 = vmatpush1.bf16.msra.mxu0 0
        %1390 = vmatprep.subr.bf16.mxu0 0
        %1391 = vmatpush1.bf16.msra.mxu0 0
        %1392 = vmatprep.mubr.bf16.mxu0 0
        %1393 = vmatmul.mubr.bf16.gmra.mrb[0].mxu0 %v1288
        %v1394 = vpop.f32.mrb[0].mxu0
        %v1395 = vadd.f32 %v1310, %v1394
        %v1396 = vpop.f32.mrb[0].mxu0
        %v1397 = vpop.f32.mrb[0].mxu0
        %v1398 = vadd.f32 %v1310, %v1397
        %v1399 = vpop.f32.mrb[0].mxu0
        %1400 = vdwg.mxu0
        %v1401 = vmul.f32 %v1395, 0.25
        %v1402 = vmul.f32 %v1398, 0.25
        %v1403 = vld [vmem:[#allocation21 + $0x4] sm:$0xff]
        %v1404 = vld [vmem:[#allocation21 + $0x10] sm:$0xff]
        %v1405 = vld [vmem:[#allocation21 + $0x1c] sm:$0xff]
        %v1406 = vld [vmem:[#allocation21 + $0x28] sm:$0xff]
        %v1407 = vld [vmem:[#allocation21 + $0x34] sm:$0xff]
        %v1408 = vld [vmem:[#allocation21 + $0x40] sm:$0xff]
        %v1409 = vld [vmem:[#allocation21 + $0x4c] sm:$0xff]
        %v1410 = vld [vmem:[#allocation21 + $0x58] sm:$0xff]
        %v1411 = vld [vmem:[#allocation21 + $0x64] sm:$0xff]
        %v1412 = vld [vmem:[#allocation21 + $0x70] sm:$0xff]
        %v1413 = vld [vmem:[#allocation21 + $0x7c] sm:$0xff]
        %v1414 = vld [vmem:[#allocation21 + $0x88] sm:$0xff]
        %v1415 = vld [vmem:[#allocation21 + $0x94] sm:$0xff]
        %v1416 = vld [vmem:[#allocation21 + $0xa0] sm:$0xff]
        %v1417 = vld [vmem:[#allocation21 + $0xac] sm:$0xff]
        %v1418 = vld [vmem:[#allocation21 + $0xb8] sm:$0xff]
        %v1419 = vld [vmem:[%s13 + $0x1] sm:$0x3]
        %v1421 = vlaneseq
        %v1422 = vshrl.u32 %v1421, 7
        %v1423 = vsub.s32 0, %v1422
        %v1424 = vrot.slane %v1419, %v1423
        %v1425 = vlaneseq
        %v1426 = vshrl.u32 %v1425, 7
        %v1427 = vsub.s32 1, %v1426
        %v1428 = vrot.slane %v1419, %v1427
        %v1447 = vunpack.c.l.b16 %v1403
        %v1448 = vunpack.c.h.b16 %v1403
        %v1449 = vunpack.c.l.b16 %v1404
        %v1450 = vunpack.c.h.b16 %v1404
        %v1451 = vunpack.c.l.b16 %v1405
        %v1452 = vunpack.c.h.b16 %v1405
        %v1453 = vunpack.c.l.b16 %v1406
        %v1454 = vunpack.c.h.b16 %v1406
        %v1455 = vunpack.c.l.b16 %v1407
        %v1456 = vunpack.c.h.b16 %v1407
        %v1457 = vunpack.c.l.b16 %v1408
        %v1458 = vunpack.c.h.b16 %v1408
        %v1459 = vunpack.c.l.b16 %v1409
        %v1460 = vunpack.c.h.b16 %v1409
        %v1461 = vunpack.c.l.b16 %v1410
        %v1462 = vunpack.c.h.b16 %v1410
        %v1463 = vunpack.c.l.b16 %v1411
        %v1464 = vunpack.c.h.b16 %v1411
        %v1465 = vunpack.c.l.b16 %v1412
        %v1466 = vunpack.c.h.b16 %v1412
        %v1467 = vunpack.c.l.b16 %v1413
        %v1468 = vunpack.c.h.b16 %v1413
        %v1469 = vunpack.c.l.b16 %v1414
        %v1470 = vunpack.c.h.b16 %v1414
        %v1471 = vunpack.c.l.b16 %v1415
        %v1472 = vunpack.c.h.b16 %v1415
        %v1473 = vunpack.c.l.b16 %v1416
        %v1474 = vunpack.c.h.b16 %v1416
        %v1475 = vunpack.c.l.b16 %v1417
        %v1476 = vunpack.c.h.b16 %v1417
        %v1477 = vunpack.c.l.b16 %v1418
        %v1478 = vunpack.c.h.b16 %v1418
        %v1479 = vpack.c.b16 %v1449, %v1447
        %v1480 = vpack.c.b16 %v1450, %v1448
        %v1481 = vpack.c.b16 %v1453, %v1451
        %v1482 = vpack.c.b16 %v1454, %v1452
        %v1483 = vpack.c.b16 %v1457, %v1455
        %v1484 = vpack.c.b16 %v1458, %v1456
        %v1485 = vpack.c.b16 %v1461, %v1459
        %v1486 = vpack.c.b16 %v1462, %v1460
        %v1487 = vpack.c.b16 %v1465, %v1463
        %v1488 = vpack.c.b16 %v1466, %v1464
        %v1489 = vpack.c.b16 %v1469, %v1467
        %v1490 = vpack.c.b16 %v1470, %v1468
        %v1491 = vpack.c.b16 %v1473, %v1471
        %v1492 = vpack.c.b16 %v1474, %v1472
        %v1493 = vpack.c.b16 %v1477, %v1475
        %v1494 = vpack.c.b16 %v1478, %v1476
        %1511 = vmatprep.subr.bf16.mxu0 %v1480
        %1512 = vmatpush1.bf16.msra.mxu0 %v1479
        %1513 = vmatprep.subr.bf16.mxu0 %v1482
        %1514 = vmatpush1.bf16.msra.mxu0 %v1481
        %1515 = vmatprep.subr.bf16.mxu0 %v1484
        %1516 = vmatpush1.bf16.msra.mxu0 %v1483
        %1517 = vmatprep.subr.bf16.mxu0 %v1486
        %1518 = vmatpush1.bf16.msra.mxu0 %v1485
        %1519 = vmatprep.subr.bf16.mxu0 %v1488
        %1520 = vmatpush1.bf16.msra.mxu0 %v1487
        %1521 = vmatprep.subr.bf16.mxu0 %v1490
        %1522 = vmatpush1.bf16.msra.mxu0 %v1489
        %1523 = vmatprep.subr.bf16.mxu0 %v1492
        %1524 = vmatpush1.bf16.msra.mxu0 %v1491
        %1525 = vmatprep.subr.bf16.mxu0 %v1494
        %1526 = vmatpush1.bf16.msra.mxu0 %v1493
        %1527 = vmatprep.subr.bf16.mxu0 0
        %1528 = vmatpush1.bf16.msra.mxu0 0
        %1529 = vmatprep.subr.bf16.mxu0 0
        %1530 = vmatpush1.bf16.msra.mxu0 0
        %1531 = vmatprep.subr.bf16.mxu0 0
        %1532 = vmatpush1.bf16.msra.mxu0 0
        %1533 = vmatprep.subr.bf16.mxu0 0
        %1534 = vmatpush1.bf16.msra.mxu0 0
        %1535 = vmatprep.subr.bf16.mxu0 0
        %1536 = vmatpush1.bf16.msra.mxu0 0
        %1537 = vmatprep.subr.bf16.mxu0 0
        %1538 = vmatpush1.bf16.msra.mxu0 0
        %1539 = vmatprep.subr.bf16.mxu0 0
        %1540 = vmatpush1.bf16.msra.mxu0 0
        %1541 = vmatprep.subr.bf16.mxu0 0
        %1542 = vmatpush1.bf16.msra.mxu0 0
        %1543 = vmatprep.mubr.bf16.mxu0 0
        %1544 = vmatmul.mubr.bf16.gmra.mrb[0].mxu0 %v1133
        %v1545 = vpop.f32.mrb[0].mxu0
        %v1546 = vadd.f32 %v1424, %v1545
        %v1547 = vpop.f32.mrb[0].mxu0
        %v1548 = vadd.f32 %v1428, %v1547
        %v1549 = vpop.f32.mrb[0].mxu0
        %v1550 = vadd.f32 %v1424, %v1549
        %v1551 = vpop.f32.mrb[0].mxu0
        %v1552 = vadd.f32 %v1428, %v1551
        %1553 = vmatprep.mubr.bf16.mxu0 0
        %1554 = vmatmul.mubr.bf16.gmra.mrb[0].mxu0 %v1134
        %v1555 = vpop.f32.mrb[0].mxu0
        %v1556 = vadd.f32 %v1424, %v1555
        %v1557 = vpop.f32.mrb[0].mxu0
        %v1558 = vadd.f32 %v1428, %v1557
        %v1559 = vpop.f32.mrb[0].mxu0
        %v1560 = vadd.f32 %v1424, %v1559
        %v1561 = vpop.f32.mrb[0].mxu0
        %v1562 = vadd.f32 %v1428, %v1561
        %1563 = vdwg.mxu0
        %v1564 = vpack.c.bf16 %v1550, %v1546
        %v1565 = vpack.c.bf16 %v1552, %v1548
        %v1566 = vpack.c.bf16 %v1560, %v1556
        %v1567 = vpack.c.bf16 %v1562, %v1558
        %v1568 = vpack.c.bf16 %v1402, %v1401
        %vm1569 = vcmask 130048
        %v1571 = vsel %vm1569, %v1568, 0
        %v1574 = vsel %vm1569, %v1564, 0
        %v1577 = vsel %vm1569, %v1566, 0
        %1579 = vmatprep.subr.bf16.mxu0 0
        %1580 = vmatpush1.bf16.xpose.msra.mxu0 %v1574
        %1581 = vmatprep.subr.bf16.mxu0 0
        %1582 = vmatpush1.bf16.xpose.msra.mxu0 %v1577
        %1583 = vmatprep.subr.bf16.mxu0 0
        %1584 = vmatpush1.bf16.xpose.msra.mxu0 0
        %1585 = vmatprep.subr.bf16.mxu0 0
        %1586 = vmatpush1.bf16.xpose.msra.mxu0 0
        %1587 = vmatprep.subr.bf16.mxu0 0
        %1588 = vmatpush1.bf16.xpose.msra.mxu0 0
        %1589 = vmatprep.subr.bf16.mxu0 0
        %1590 = vmatpush1.bf16.xpose.msra.mxu0 0
        %1591 = vmatprep.subr.bf16.mxu0 0
        %1592 = vmatpush1.bf16.xpose.msra.mxu0 0
        %1593 = vmatprep.subr.bf16.mxu0 0
        %1594 = vmatpush1.bf16.xpose.msra.mxu0 0
        %1595 = vmatprep.subr.bf16.mxu0 0
        %1596 = vmatpush1.bf16.xpose.msra.mxu0 0
        %1597 = vmatprep.subr.bf16.mxu0 0
        %1598 = vmatpush1.bf16.xpose.msra.mxu0 0
        %1599 = vmatprep.subr.bf16.mxu0 0
        %1600 = vmatpush1.bf16.xpose.msra.mxu0 0
        %1601 = vmatprep.subr.bf16.mxu0 0
        %1602 = vmatpush1.bf16.xpose.msra.mxu0 0
        %1603 = vmatprep.subr.bf16.mxu0 0
        %1604 = vmatpush1.bf16.xpose.msra.mxu0 0
        %1605 = vmatprep.subr.bf16.mxu0 0
        %1606 = vmatpush1.bf16.xpose.msra.mxu0 0
        %1607 = vmatprep.subr.bf16.mxu0 0
        %1608 = vmatpush1.bf16.xpose.msra.mxu0 0
        %1609 = vmatprep.subr.bf16.mxu0 0
        %1610 = vmatpush1.bf16.xpose.msra.mxu0 0
        %1611 = vmatprep.mubr.bf16.mxu0 0
        %1612 = vmatmul.mubr.bf16.gmra.mrb[0].mxu0 %v1571
        %v1613 = vpop.f32.mrb[0].mxu0
        %v1614 = vadd.f32 0.0, %v1613
        %v1615 = vpop.f32.mrb[0].mxu0
        %v1616 = vpop.f32.mrb[0].mxu0
        %v1617 = vadd.f32 0.0, %v1616
        %v1618 = vpop.f32.mrb[0].mxu0
        %1619 = vdwg.mxu0
        %vm1620 = vcmask 261120
        %v1621 = vsel %vm1620, %v1614, -inf
        %1622 = vmax.xlane.f32.xlu0 %v1621
        %v1623 = vpop.xlane.xlu0 %1622
        %v1624 = vsel %vm1620, %v1617, -inf
        %1625 = vmax.xlane.f32.xlu0 %v1624
        %v1626 = vpop.xlane.xlu0 %1625
        %v1627 = vsub.f32 %v1614, %v1623
        %v1628 = vsub.f32 %v1617, %v1626
        %v1629 = vmul.f32 %v1627, 1.442695
        %v1630 = vpow.pop %v1629
        %v1631 = vmul.f32 %v1628, 1.442695
        %v1632 = vpow.pop %v1631
        %v1633 = vsel %vm1620, %v1630, 0.0
        %1634 = vadd.xlane.f32.xlu0 %v1633
        %v1635 = vpop.xlane.xlu0 %1634
        %v1636 = vsel %vm1620, %v1632, 0.0
        %1637 = vadd.xlane.f32.xlu0 %v1636
        %v1638 = vpop.xlane.xlu0 %1637
        %v1639 = vrcp.pop %v1635
        %v1640 = vmul.f32 %v1630, %v1639
        %v1641 = vrcp.pop %v1638
        %v1642 = vmul.f32 %v1632, %v1641
        %v1643 = vpack.c.bf16 %v1642, %v1640
        %v1645 = vsel %vm1620, %v1643, 0
        %1647 = vmatprep.subr.bf16.mxu0 0
        %1648 = vmatpush1.bf16.msra.mxu0 %v1565
        %1649 = vmatprep.subr.bf16.mxu0 0
        %1650 = vmatpush1.bf16.msra.mxu0 %v1567
        %1651 = vmatprep.subr.bf16.mxu0 0
        %1652 = vmatpush1.bf16.msra.mxu0 0
        %1653 = vmatprep.subr.bf16.mxu0 0
        %1654 = vmatpush1.bf16.msra.mxu0 0
        %1655 = vmatprep.subr.bf16.mxu0 0
        %1656 = vmatpush1.bf16.msra.mxu0 0
        %1657 = vmatprep.subr.bf16.mxu0 0
        %1658 = vmatpush1.bf16.msra.mxu0 0
        %1659 = vmatprep.subr.bf16.mxu0 0
        %1660 = vmatpush1.bf16.msra.mxu0 0
        %1661 = vmatprep.subr.bf16.mxu0 0
        %1662 = vmatpush1.bf16.msra.mxu0 0
        %1663 = vmatprep.subr.bf16.mxu0 0
        %1664 = vmatpush1.bf16.msra.mxu0 0
        %1665 = vmatprep.subr.bf16.mxu0 0
        %1666 = vmatpush1.bf16.msra.mxu0 0
        %1667 = vmatprep.subr.bf16.mxu0 0
        %1668 = vmatpush1.bf16.msra.mxu0 0
        %1669 = vmatprep.subr.bf16.mxu0 0
        %1670 = vmatpush1.bf16.msra.mxu0 0
        %1671 = vmatprep.subr.bf16.mxu0 0
        %1672 = vmatpush1.bf16.msra.mxu0 0
        %1673 = vmatprep.subr.bf16.mxu0 0
        %1674 = vmatpush1.bf16.msra.mxu0 0
        %1675 = vmatprep.subr.bf16.mxu0 0
        %1676 = vmatpush1.bf16.msra.mxu0 0
        %1677 = vmatprep.subr.bf16.mxu0 0
        %1678 = vmatpush1.bf16.msra.mxu0 0
        %1679 = vmatprep.mubr.bf16.mxu0 0
        %1680 = vmatmul.mubr.bf16.gmra.mrb[0].mxu0 %v1645
        %v1681 = vpop.f32.mrb[0].mxu0
        %v1682 = vadd.f32 0.0, %v1681
        %v1683 = vpop.f32.mrb[0].mxu0
        %v1684 = vpop.f32.mrb[0].mxu0
        %v1685 = vadd.f32 0.0, %v1684
        %v1686 = vpop.f32.mrb[0].mxu0
        %1687 = vdwg.mxu0
        %v1688 = vpack.c.bf16 %v1685, %v1682
        %1689 = vst.msk [vmem:[#allocation2] sm:$0xff] %vm1569, %v1688
        %1691 = vrot.lane.b32.xlu0 %v1568, 112
        %v1692 = vpop.permute.xlu0 %1691
        %1695 = vrot.lane.b32.xlu0 %v1564, 112
        %v1696 = vpop.permute.xlu0 %1695
        %1697 = vrot.lane.b32.xlu0 %v1566, 112
        %v1698 = vpop.permute.xlu0 %1697
        %v1700 = vsel %vm1569, %v1692, 0
        %v1703 = vsel %vm1569, %v1696, 0
        %v1706 = vsel %vm1569, %v1698, 0
        %1708 = vmatprep.subr.bf16.mxu0 0
        %1709 = vmatpush1.bf16.xpose.msra.mxu0 %v1703
        %1710 = vmatprep.subr.bf16.mxu0 0
        %1711 = vmatpush1.bf16.xpose.msra.mxu0 %v1706
        %1712 = vmatprep.subr.bf16.mxu0 0
        %1713 = vmatpush1.bf16.xpose.msra.mxu0 0
        %1714 = vmatprep.subr.bf16.mxu0 0
        %1715 = vmatpush1.bf16.xpose.msra.mxu0 0
        %1716 = vmatprep.subr.bf16.mxu0 0
        %1717 = vmatpush1.bf16.xpose.msra.mxu0 0
        %1718 = vmatprep.subr.bf16.mxu0 0
        %1719 = vmatpush1.bf16.xpose.msra.mxu0 0
        %1720 = vmatprep.subr.bf16.mxu0 0
        %1721 = vmatpush1.bf16.xpose.msra.mxu0 0
        %1722 = vmatprep.subr.bf16.mxu0 0
        %1723 = vmatpush1.bf16.xpose.msra.mxu0 0
        %1724 = vmatprep.subr.bf16.mxu0 0
        %1725 = vmatpush1.bf16.xpose.msra.mxu0 0
        %1726 = vmatprep.subr.bf16.mxu0 0
        %1727 = vmatpush1.bf16.xpose.msra.mxu0 0
        %1728 = vmatprep.subr.bf16.mxu0 0
        %1729 = vmatpush1.bf16.xpose.msra.mxu0 0
        %1730 = vmatprep.subr.bf16.mxu0 0
        %1731 = vmatpush1.bf16.xpose.msra.mxu0 0
        %1732 = vmatprep.subr.bf16.mxu0 0
        %1733 = vmatpush1.bf16.xpose.msra.mxu0 0
        %1734 = vmatprep.subr.bf16.mxu0 0
        %1735 = vmatpush1.bf16.xpose.msra.mxu0 0
        %1736 = vmatprep.subr.bf16.mxu0 0
        %1737 = vmatpush1.bf16.xpose.msra.mxu0 0
        %1738 = vmatprep.subr.bf16.mxu0 0
        %1739 = vmatpush1.bf16.xpose.msra.mxu0 0
        %1740 = vmatprep.mubr.bf16.mxu0 0
        %1741 = vmatmul.mubr.bf16.gmra.mrb[0].mxu0 %v1700
        %v1742 = vpop.f32.mrb[0].mxu0
        %v1743 = vadd.f32 0.0, %v1742
        %v1744 = vpop.f32.mrb[0].mxu0
        %v1745 = vpop.f32.mrb[0].mxu0
        %v1746 = vadd.f32 0.0, %v1745
        %v1747 = vpop.f32.mrb[0].mxu0
        %1748 = vdwg.mxu0
        %v1749 = vsel %vm1620, %v1743, -inf
        %1750 = vmax.xlane.f32.xlu0 %v1749
        %v1751 = vpop.xlane.xlu0 %1750
        %v1752 = vsel %vm1620, %v1746, -inf
        %1753 = vmax.xlane.f32.xlu0 %v1752
        %v1754 = vpop.xlane.xlu0 %1753
        %v1755 = vsub.f32 %v1743, %v1751
        %v1756 = vsub.f32 %v1746, %v1754
        %v1757 = vmul.f32 %v1755, 1.442695
        %v1758 = vpow.pop %v1757
        %v1759 = vmul.f32 %v1756, 1.442695
        %v1760 = vpow.pop %v1759
        %v1761 = vsel %vm1620, %v1758, 0.0
        %1762 = vadd.xlane.f32.xlu0 %v1761
        %v1763 = vpop.xlane.xlu0 %1762
        %v1764 = vsel %vm1620, %v1760, 0.0
        %1765 = vadd.xlane.f32.xlu0 %v1764
        %v1766 = vpop.xlane.xlu0 %1765
        %v1767 = vrcp.pop %v1763
        %v1768 = vmul.f32 %v1758, %v1767
        %v1769 = vrcp.pop %v1766
        %v1770 = vmul.f32 %v1760, %v1769
        %v1771 = vpack.c.bf16 %v1770, %v1768
        %1774 = vrot.lane.b32.xlu0 %v1565, 112
        %v1775 = vpop.permute.xlu0 %1774
        %1776 = vrot.lane.b32.xlu0 %v1567, 112
        %v1777 = vpop.permute.xlu0 %1776
        %v1781 = vsel %vm1620, %v1771, 0
        %1783 = vmatprep.subr.bf16.mxu0 0
        %1784 = vmatpush1.bf16.msra.mxu0 %v1775
        %1785 = vmatprep.subr.bf16.mxu0 0
        %1786 = vmatpush1.bf16.msra.mxu0 %v1777
        %1787 = vmatprep.subr.bf16.mxu0 0
        %1788 = vmatpush1.bf16.msra.mxu0 0
        %1789 = vmatprep.subr.bf16.mxu0 0
        %1790 = vmatpush1.bf16.msra.mxu0 0
        %1791 = vmatprep.subr.bf16.mxu0 0
        %1792 = vmatpush1.bf16.msra.mxu0 0
        %1793 = vmatprep.subr.bf16.mxu0 0
        %1794 = vmatpush1.bf16.msra.mxu0 0
        %1795 = vmatprep.subr.bf16.mxu0 0
        %1796 = vmatpush1.bf16.msra.mxu0 0
        %1797 = vmatprep.subr.bf16.mxu0 0
        %1798 = vmatpush1.bf16.msra.mxu0 0
        %1799 = vmatprep.subr.bf16.mxu0 0
        %1800 = vmatpush1.bf16.msra.mxu0 0
        %1801 = vmatprep.subr.bf16.mxu0 0
        %1802 = vmatpush1.bf16.msra.mxu0 0
        %1803 = vmatprep.subr.bf16.mxu0 0
        %1804 = vmatpush1.bf16.msra.mxu0 0
        %1805 = vmatprep.subr.bf16.mxu0 0
        %1806 = vmatpush1.bf16.msra.mxu0 0
        %1807 = vmatprep.subr.bf16.mxu0 0
        %1808 = vmatpush1.bf16.msra.mxu0 0
        %1809 = vmatprep.subr.bf16.mxu0 0
        %1810 = vmatpush1.bf16.msra.mxu0 0
        %1811 = vmatprep.subr.bf16.mxu0 0
        %1812 = vmatpush1.bf16.msra.mxu0 0
        %1813 = vmatprep.subr.bf16.mxu0 0
        %1814 = vmatpush1.bf16.msra.mxu0 0
        %1815 = vmatprep.mubr.bf16.mxu0 0
        %1816 = vmatmul.mubr.bf16.gmra.mrb[0].mxu0 %v1781
        %v1817 = vpop.f32.mrb[0].mxu0
        %v1818 = vadd.f32 0.0, %v1817
        %v1819 = vpop.f32.mrb[0].mxu0
        %v1820 = vpop.f32.mrb[0].mxu0
        %v1821 = vadd.f32 0.0, %v1820
        %v1822 = vpop.f32.mrb[0].mxu0
        %1823 = vdwg.mxu0
        %v1824 = vpack.c.bf16 %v1821, %v1818
        %1826 = vrot.lane.b32.xlu0 %v1824, 16
        %v1827 = vpop.permute.xlu0 %1826
        %vm1829 = vcmask 261248
        %1830 = vst.msk [vmem:[#allocation2] sm:$0xff] %vm1829, %v1827
        %1831 = vrot.lane.b32.xlu0 %v1568, 96
        %v1832 = vpop.permute.xlu0 %1831
        %1833 = vrot.lane.b32.xlu0 %v1564, 96
        %v1834 = vpop.permute.xlu0 %1833
        %1835 = vrot.lane.b32.xlu0 %v1566, 96
        %v1836 = vpop.permute.xlu0 %1835
        %v1838 = vsel %vm1569, %v1832, 0
        %v1841 = vsel %vm1569, %v1834, 0
        %v1844 = vsel %vm1569, %v1836, 0
        %1846 = vmatprep.subr.bf16.mxu0 0
        %1847 = vmatpush1.bf16.xpose.msra.mxu0 %v1841
        %1848 = vmatprep.subr.bf16.mxu0 0
        %1849 = vmatpush1.bf16.xpose.msra.mxu0 %v1844
        %1850 = vmatprep.subr.bf16.mxu0 0
        %1851 = vmatpush1.bf16.xpose.msra.mxu0 0
        %1852 = vmatprep.subr.bf16.mxu0 0
        %1853 = vmatpush1.bf16.xpose.msra.mxu0 0
        %1854 = vmatprep.subr.bf16.mxu0 0
        %1855 = vmatpush1.bf16.xpose.msra.mxu0 0
        %1856 = vmatprep.subr.bf16.mxu0 0
        %1857 = vmatpush1.bf16.xpose.msra.mxu0 0
        %1858 = vmatprep.subr.bf16.mxu0 0
        %1859 = vmatpush1.bf16.xpose.msra.mxu0 0
        %1860 = vmatprep.subr.bf16.mxu0 0
        %1861 = vmatpush1.bf16.xpose.msra.mxu0 0
        %1862 = vmatprep.subr.bf16.mxu0 0
        %1863 = vmatpush1.bf16.xpose.msra.mxu0 0
        %1864 = vmatprep.subr.bf16.mxu0 0
        %1865 = vmatpush1.bf16.xpose.msra.mxu0 0
        %1866 = vmatprep.subr.bf16.mxu0 0
        %1867 = vmatpush1.bf16.xpose.msra.mxu0 0
        %1868 = vmatprep.subr.bf16.mxu0 0
        %1869 = vmatpush1.bf16.xpose.msra.mxu0 0
        %1870 = vmatprep.subr.bf16.mxu0 0
        %1871 = vmatpush1.bf16.xpose.msra.mxu0 0
        %1872 = vmatprep.subr.bf16.mxu0 0
        %1873 = vmatpush1.bf16.xpose.msra.mxu0 0
        %1874 = vmatprep.subr.bf16.mxu0 0
        %1875 = vmatpush1.bf16.xpose.msra.mxu0 0
        %1876 = vmatprep.subr.bf16.mxu0 0
        %1877 = vmatpush1.bf16.xpose.msra.mxu0 0
        %1878 = vmatprep.mubr.bf16.mxu0 0
        %1879 = vmatmul.mubr.bf16.gmra.mrb[0].mxu0 %v1838
        %v1880 = vpop.f32.mrb[0].mxu0
        %v1881 = vadd.f32 0.0, %v1880
        %v1882 = vpop.f32.mrb[0].mxu0
        %v1883 = vpop.f32.mrb[0].mxu0
        %v1884 = vadd.f32 0.0, %v1883
        %v1885 = vpop.f32.mrb[0].mxu0
        %1886 = vdwg.mxu0
        %v1887 = vsel %vm1620, %v1881, -inf
        %1888 = vmax.xlane.f32.xlu0 %v1887
        %v1889 = vpop.xlane.xlu0 %1888
        %v1890 = vsel %vm1620, %v1884, -inf
        %1891 = vmax.xlane.f32.xlu0 %v1890
        %v1892 = vpop.xlane.xlu0 %1891
        %v1893 = vsub.f32 %v1881, %v1889
        %v1894 = vsub.f32 %v1884, %v1892
        %v1895 = vmul.f32 %v1893, 1.442695
        %v1896 = vpow.pop %v1895
        %v1897 = vmul.f32 %v1894, 1.442695
        %v1898 = vpow.pop %v1897
        %v1899 = vsel %vm1620, %v1896, 0.0
        %1900 = vadd.xlane.f32.xlu0 %v1899
        %v1901 = vpop.xlane.xlu0 %1900
        %v1902 = vsel %vm1620, %v1898, 0.0
        %1903 = vadd.xlane.f32.xlu0 %v1902
        %v1904 = vpop.xlane.xlu0 %1903
        %v1905 = vrcp.pop %v1901
        %v1906 = vmul.f32 %v1896, %v1905
        %v1907 = vrcp.pop %v1904
        %v1908 = vmul.f32 %v1898, %v1907
        %v1909 = vpack.c.bf16 %v1908, %v1906
        %1910 = vrot.lane.b32.xlu0 %v1565, 96
        %v1911 = vpop.permute.xlu0 %1910
        %1912 = vrot.lane.b32.xlu0 %v1567, 96
        %v1913 = vpop.permute.xlu0 %1912
        %v1917 = vsel %vm1620, %v1909, 0
        %1919 = vmatprep.subr.bf16.mxu0 0
        %1920 = vmatpush1.bf16.msra.mxu0 %v1911
        %1921 = vmatprep.subr.bf16.mxu0 0
        %1922 = vmatpush1.bf16.msra.mxu0 %v1913
        %1923 = vmatprep.subr.bf16.mxu0 0
        %1924 = vmatpush1.bf16.msra.mxu0 0
        %1925 = vmatprep.subr.bf16.mxu0 0
        %1926 = vmatpush1.bf16.msra.mxu0 0
        %1927 = vmatprep.subr.bf16.mxu0 0
        %1928 = vmatpush1.bf16.msra.mxu0 0
        %1929 = vmatprep.subr.bf16.mxu0 0
        %1930 = vmatpush1.bf16.msra.mxu0 0
        %1931 = vmatprep.subr.bf16.mxu0 0
        %1932 = vmatpush1.bf16.msra.mxu0 0
        %1933 = vmatprep.subr.bf16.mxu0 0
        %1934 = vmatpush1.bf16.msra.mxu0 0
        %1935 = vmatprep.subr.bf16.mxu0 0
        %1936 = vmatpush1.bf16.msra.mxu0 0
        %1937 = vmatprep.subr.bf16.mxu0 0
        %1938 = vmatpush1.bf16.msra.mxu0 0
        %1939 = vmatprep.subr.bf16.mxu0 0
        %1940 = vmatpush1.bf16.msra.mxu0 0
        %1941 = vmatprep.subr.bf16.mxu0 0
        %1942 = vmatpush1.bf16.msra.mxu0 0
        %1943 = vmatprep.subr.bf16.mxu0 0
        %1944 = vmatpush1.bf16.msra.mxu0 0
        %1945 = vmatprep.subr.bf16.mxu0 0
        %1946 = vmatpush1.bf16.msra.mxu0 0
        %1947 = vmatprep.subr.bf16.mxu0 0
        %1948 = vmatpush1.bf16.msra.mxu0 0
        %1949 = vmatprep.subr.bf16.mxu0 0
        %1950 = vmatpush1.bf16.msra.mxu0 0
        %1951 = vmatprep.mubr.bf16.mxu0 0
        %1952 = vmatmul.mubr.bf16.gmra.mrb[0].mxu0 %v1917
        %v1953 = vpop.f32.mrb[0].mxu0
        %v1954 = vadd.f32 0.0, %v1953
        %v1955 = vpop.f32.mrb[0].mxu0
        %v1956 = vpop.f32.mrb[0].mxu0
        %v1957 = vadd.f32 0.0, %v1956
        %v1958 = vpop.f32.mrb[0].mxu0
        %1959 = vdwg.mxu0
        %v1960 = vpack.c.bf16 %v1957, %v1954
        %1962 = vrot.lane.b32.xlu0 %v1960, 32
        %v1963 = vpop.permute.xlu0 %1962
        %vm1965 = vcmask 392448
        %1966 = vst.msk [vmem:[#allocation2] sm:$0xff] %vm1965, %v1963
        %1967 = vrot.lane.b32.xlu0 %v1568, 80
        %v1968 = vpop.permute.xlu0 %1967
        %1969 = vrot.lane.b32.xlu0 %v1564, 80
        %v1970 = vpop.permute.xlu0 %1969
        %1971 = vrot.lane.b32.xlu0 %v1566, 80
        %v1972 = vpop.permute.xlu0 %1971
        %v1974 = vsel %vm1569, %v1968, 0
        %v1977 = vsel %vm1569, %v1970, 0
        %v1980 = vsel %vm1569, %v1972, 0
        %1982 = vmatprep.subr.bf16.mxu0 0
        %1983 = vmatpush1.bf16.xpose.msra.mxu0 %v1977
        %1984 = vmatprep.subr.bf16.mxu0 0
        %1985 = vmatpush1.bf16.xpose.msra.mxu0 %v1980
        %1986 = vmatprep.subr.bf16.mxu0 0
        %1987 = vmatpush1.bf16.xpose.msra.mxu0 0
        %1988 = vmatprep.subr.bf16.mxu0 0
        %1989 = vmatpush1.bf16.xpose.msra.mxu0 0
        %1990 = vmatprep.subr.bf16.mxu0 0
        %1991 = vmatpush1.bf16.xpose.msra.mxu0 0
        %1992 = vmatprep.subr.bf16.mxu0 0
        %1993 = vmatpush1.bf16.xpose.msra.mxu0 0
        %1994 = vmatprep.subr.bf16.mxu0 0
        %1995 = vmatpush1.bf16.xpose.msra.mxu0 0
        %1996 = vmatprep.subr.bf16.mxu0 0
        %1997 = vmatpush1.bf16.xpose.msra.mxu0 0
        %1998 = vmatprep.subr.bf16.mxu0 0
        %1999 = vmatpush1.bf16.xpose.msra.mxu0 0
        %2000 = vmatprep.subr.bf16.mxu0 0
        %2001 = vmatpush1.bf16.xpose.msra.mxu0 0
        %2002 = vmatprep.subr.bf16.mxu0 0
        %2003 = vmatpush1.bf16.xpose.msra.mxu0 0
        %2004 = vmatprep.subr.bf16.mxu0 0
        %2005 = vmatpush1.bf16.xpose.msra.mxu0 0
        %2006 = vmatprep.subr.bf16.mxu0 0
        %2007 = vmatpush1.bf16.xpose.msra.mxu0 0
        %2008 = vmatprep.subr.bf16.mxu0 0
        %2009 = vmatpush1.bf16.xpose.msra.mxu0 0
        %2010 = vmatprep.subr.bf16.mxu0 0
        %2011 = vmatpush1.bf16.xpose.msra.mxu0 0
        %2012 = vmatprep.subr.bf16.mxu0 0
        %2013 = vmatpush1.bf16.xpose.msra.mxu0 0
        %2014 = vmatprep.mubr.bf16.mxu0 0
        %2015 = vmatmul.mubr.bf16.gmra.mrb[0].mxu0 %v1974
        %v2016 = vpop.f32.mrb[0].mxu0
        %v2017 = vadd.f32 0.0, %v2016
        %v2018 = vpop.f32.mrb[0].mxu0
        %v2019 = vpop.f32.mrb[0].mxu0
        %v2020 = vadd.f32 0.0, %v2019
        %v2021 = vpop.f32.mrb[0].mxu0
        %2022 = vdwg.mxu0
        %v2023 = vsel %vm1620, %v2017, -inf
        %2024 = vmax.xlane.f32.xlu0 %v2023
        %v2025 = vpop.xlane.xlu0 %2024
        %v2026 = vsel %vm1620, %v2020, -inf
        %2027 = vmax.xlane.f32.xlu0 %v2026
        %v2028 = vpop.xlane.xlu0 %2027
        %v2029 = vsub.f32 %v2017, %v2025
        %v2030 = vsub.f32 %v2020, %v2028
        %v2031 = vmul.f32 %v2029, 1.442695
        %v2032 = vpow.pop %v2031
        %v2033 = vmul.f32 %v2030, 1.442695
        %v2034 = vpow.pop %v2033
        %v2035 = vsel %vm1620, %v2032, 0.0
        %2036 = vadd.xlane.f32.xlu0 %v2035
        %v2037 = vpop.xlane.xlu0 %2036
        %v2038 = vsel %vm1620, %v2034, 0.0
        %2039 = vadd.xlane.f32.xlu0 %v2038
        %v2040 = vpop.xlane.xlu0 %2039
        %v2041 = vrcp.pop %v2037
        %v2042 = vmul.f32 %v2032, %v2041
        %v2043 = vrcp.pop %v2040
        %v2044 = vmul.f32 %v2034, %v2043
        %v2045 = vpack.c.bf16 %v2044, %v2042
        %2046 = vrot.lane.b32.xlu0 %v1565, 80
        %v2047 = vpop.permute.xlu0 %2046
        %2048 = vrot.lane.b32.xlu0 %v1567, 80
        %v2049 = vpop.permute.xlu0 %2048
        %v2053 = vsel %vm1620, %v2045, 0
        %2055 = vmatprep.subr.bf16.mxu0 0
        %2056 = vmatpush1.bf16.msra.mxu0 %v2047
        %2057 = vmatprep.subr.bf16.mxu0 0
        %2058 = vmatpush1.bf16.msra.mxu0 %v2049
        %2059 = vmatprep.subr.bf16.mxu0 0
        %2060 = vmatpush1.bf16.msra.mxu0 0
        %2061 = vmatprep.subr.bf16.mxu0 0
        %2062 = vmatpush1.bf16.msra.mxu0 0
        %2063 = vmatprep.subr.bf16.mxu0 0
        %2064 = vmatpush1.bf16.msra.mxu0 0
        %2065 = vmatprep.subr.bf16.mxu0 0
        %2066 = vmatpush1.bf16.msra.mxu0 0
        %2067 = vmatprep.subr.bf16.mxu0 0
        %2068 = vmatpush1.bf16.msra.mxu0 0
        %2069 = vmatprep.subr.bf16.mxu0 0
        %2070 = vmatpush1.bf16.msra.mxu0 0
        %2071 = vmatprep.subr.bf16.mxu0 0
        %2072 = vmatpush1.bf16.msra.mxu0 0
        %2073 = vmatprep.subr.bf16.mxu0 0
        %2074 = vmatpush1.bf16.msra.mxu0 0
        %2075 = vmatprep.subr.bf16.mxu0 0
        %2076 = vmatpush1.bf16.msra.mxu0 0
        %2077 = vmatprep.subr.bf16.mxu0 0
        %2078 = vmatpush1.bf16.msra.mxu0 0
        %2079 = vmatprep.subr.bf16.mxu0 0
        %2080 = vmatpush1.bf16.msra.mxu0 0
        %2081 = vmatprep.subr.bf16.mxu0 0
        %2082 = vmatpush1.bf16.msra.mxu0 0
        %2083 = vmatprep.subr.bf16.mxu0 0
        %2084 = vmatpush1.bf16.msra.mxu0 0
        %2085 = vmatprep.subr.bf16.mxu0 0
        %2086 = vmatpush1.bf16.msra.mxu0 0
        %2087 = vmatprep.mubr.bf16.mxu0 0
        %2088 = vmatmul.mubr.bf16.gmra.mrb[0].mxu0 %v2053
        %v2089 = vpop.f32.mrb[0].mxu0
        %v2090 = vadd.f32 0.0, %v2089
        %v2091 = vpop.f32.mrb[0].mxu0
        %v2092 = vpop.f32.mrb[0].mxu0
        %v2093 = vadd.f32 0.0, %v2092
        %v2094 = vpop.f32.mrb[0].mxu0
        %2095 = vdwg.mxu0
        %v2096 = vpack.c.bf16 %v2093, %v2090
        %2098 = vrot.lane.b32.xlu0 %v2096, 48
        %v2099 = vpop.permute.xlu0 %2098
        %vm2101 = vcmask 523648
        %2102 = vst.msk [vmem:[#allocation2] sm:$0xff] %vm2101, %v2099
        %2103 = vrot.lane.b32.xlu0 %v1568, 64
        %v2104 = vpop.permute.xlu0 %2103
        %2105 = vrot.lane.b32.xlu0 %v1564, 64
        %v2106 = vpop.permute.xlu0 %2105
        %2107 = vrot.lane.b32.xlu0 %v1566, 64
        %v2108 = vpop.permute.xlu0 %2107
        %v2110 = vsel %vm1569, %v2104, 0
        %v2113 = vsel %vm1569, %v2106, 0
        %v2116 = vsel %vm1569, %v2108, 0
        %2118 = vmatprep.subr.bf16.mxu0 0
        %2119 = vmatpush1.bf16.xpose.msra.mxu0 %v2113
        %2120 = vmatprep.subr.bf16.mxu0 0
        %2121 = vmatpush1.bf16.xpose.msra.mxu0 %v2116
        %2122 = vmatprep.subr.bf16.mxu0 0
        %2123 = vmatpush1.bf16.xpose.msra.mxu0 0
        %2124 = vmatprep.subr.bf16.mxu0 0
        %2125 = vmatpush1.bf16.xpose.msra.mxu0 0
        %2126 = vmatprep.subr.bf16.mxu0 0
        %2127 = vmatpush1.bf16.xpose.msra.mxu0 0
        %2128 = vmatprep.subr.bf16.mxu0 0
        %2129 = vmatpush1.bf16.xpose.msra.mxu0 0
        %2130 = vmatprep.subr.bf16.mxu0 0
        %2131 = vmatpush1.bf16.xpose.msra.mxu0 0
        %2132 = vmatprep.subr.bf16.mxu0 0
        %2133 = vmatpush1.bf16.xpose.msra.mxu0 0
        %2134 = vmatprep.subr.bf16.mxu0 0
        %2135 = vmatpush1.bf16.xpose.msra.mxu0 0
        %2136 = vmatprep.subr.bf16.mxu0 0
        %2137 = vmatpush1.bf16.xpose.msra.mxu0 0
        %2138 = vmatprep.subr.bf16.mxu0 0
        %2139 = vmatpush1.bf16.xpose.msra.mxu0 0
        %2140 = vmatprep.subr.bf16.mxu0 0
        %2141 = vmatpush1.bf16.xpose.msra.mxu0 0
        %2142 = vmatprep.subr.bf16.mxu0 0
        %2143 = vmatpush1.bf16.xpose.msra.mxu0 0
        %2144 = vmatprep.subr.bf16.mxu0 0
        %2145 = vmatpush1.bf16.xpose.msra.mxu0 0
        %2146 = vmatprep.subr.bf16.mxu0 0
        %2147 = vmatpush1.bf16.xpose.msra.mxu0 0
        %2148 = vmatprep.subr.bf16.mxu0 0
        %2149 = vmatpush1.bf16.xpose.msra.mxu0 0
        %2150 = vmatprep.mubr.bf16.mxu0 0
        %2151 = vmatmul.mubr.bf16.gmra.mrb[0].mxu0 %v2110
        %v2152 = vpop.f32.mrb[0].mxu0
        %v2153 = vadd.f32 0.0, %v2152
        %v2154 = vpop.f32.mrb[0].mxu0
        %v2155 = vpop.f32.mrb[0].mxu0
        %v2156 = vadd.f32 0.0, %v2155
        %v2157 = vpop.f32.mrb[0].mxu0
        %2158 = vdwg.mxu0
        %v2159 = vsel %vm1620, %v2153, -inf
        %2160 = vmax.xlane.f32.xlu0 %v2159
        %v2161 = vpop.xlane.xlu0 %2160
        %v2162 = vsel %vm1620, %v2156, -inf
        %2163 = vmax.xlane.f32.xlu0 %v2162
        %v2164 = vpop.xlane.xlu0 %2163
        %v2165 = vsub.f32 %v2153, %v2161
        %v2166 = vsub.f32 %v2156, %v2164
        %v2167 = vmul.f32 %v2165, 1.442695
        %v2168 = vpow.pop %v2167
        %v2169 = vmul.f32 %v2166, 1.442695
        %v2170 = vpow.pop %v2169
        %v2171 = vsel %vm1620, %v2168, 0.0
        %2172 = vadd.xlane.f32.xlu0 %v2171
        %v2173 = vpop.xlane.xlu0 %2172
        %v2174 = vsel %vm1620, %v2170, 0.0
        %2175 = vadd.xlane.f32.xlu0 %v2174
        %v2176 = vpop.xlane.xlu0 %2175
        %v2177 = vrcp.pop %v2173
        %v2178 = vmul.f32 %v2168, %v2177
        %v2179 = vrcp.pop %v2176
        %v2180 = vmul.f32 %v2170, %v2179
        %v2181 = vpack.c.bf16 %v2180, %v2178
        %2182 = vrot.lane.b32.xlu0 %v1565, 64
        %v2183 = vpop.permute.xlu0 %2182
        %2184 = vrot.lane.b32.xlu0 %v1567, 64
        %v2185 = vpop.permute.xlu0 %2184
        %v2189 = vsel %vm1620, %v2181, 0
        %2191 = vmatprep.subr.bf16.mxu0 0
        %2192 = vmatpush1.bf16.msra.mxu0 %v2183
        %2193 = vmatprep.subr.bf16.mxu0 0
        %2194 = vmatpush1.bf16.msra.mxu0 %v2185
        %2195 = vmatprep.subr.bf16.mxu0 0
        %2196 = vmatpush1.bf16.msra.mxu0 0
        %2197 = vmatprep.subr.bf16.mxu0 0
        %2198 = vmatpush1.bf16.msra.mxu0 0
        %2199 = vmatprep.subr.bf16.mxu0 0
        %2200 = vmatpush1.bf16.msra.mxu0 0
        %2201 = vmatprep.subr.bf16.mxu0 0
        %2202 = vmatpush1.bf16.msra.mxu0 0
        %2203 = vmatprep.subr.bf16.mxu0 0
        %2204 = vmatpush1.bf16.msra.mxu0 0
        %2205 = vmatprep.subr.bf16.mxu0 0
        %2206 = vmatpush1.bf16.msra.mxu0 0
        %2207 = vmatprep.subr.bf16.mxu0 0
        %2208 = vmatpush1.bf16.msra.mxu0 0
        %2209 = vmatprep.subr.bf16.mxu0 0
        %2210 = vmatpush1.bf16.msra.mxu0 0
        %2211 = vmatprep.subr.bf16.mxu0 0
        %2212 = vmatpush1.bf16.msra.mxu0 0
        %2213 = vmatprep.subr.bf16.mxu0 0
        %2214 = vmatpush1.bf16.msra.mxu0 0
        %2215 = vmatprep.subr.bf16.mxu0 0
        %2216 = vmatpush1.bf16.msra.mxu0 0
        %2217 = vmatprep.subr.bf16.mxu0 0
        %2218 = vmatpush1.bf16.msra.mxu0 0
        %2219 = vmatprep.subr.bf16.mxu0 0
        %2220 = vmatpush1.bf16.msra.mxu0 0
        %2221 = vmatprep.subr.bf16.mxu0 0
        %2222 = vmatpush1.bf16.msra.mxu0 0
        %2223 = vmatprep.mubr.bf16.mxu0 0
        %2224 = vmatmul.mubr.bf16.gmra.mrb[0].mxu0 %v2189
        %v2225 = vpop.f32.mrb[0].mxu0
        %v2226 = vadd.f32 0.0, %v2225
        %v2227 = vpop.f32.mrb[0].mxu0
        %v2228 = vpop.f32.mrb[0].mxu0
        %v2229 = vadd.f32 0.0, %v2228
        %v2230 = vpop.f32.mrb[0].mxu0
        %2231 = vdwg.mxu0
        %v2232 = vpack.c.bf16 %v2229, %v2226
        %2234 = vrot.lane.b32.xlu0 %v2232, 64
        %v2235 = vpop.permute.xlu0 %2234
        %vm2237 = vcmask 654848
        %2238 = vst.msk [vmem:[#allocation2] sm:$0xff] %vm2237, %v2235
        %2239 = vrot.lane.b32.xlu0 %v1568, 48
        %v2240 = vpop.permute.xlu0 %2239
        %2241 = vrot.lane.b32.xlu0 %v1564, 48
        %v2242 = vpop.permute.xlu0 %2241
        %2243 = vrot.lane.b32.xlu0 %v1566, 48
        %v2244 = vpop.permute.xlu0 %2243
        %v2246 = vsel %vm1569, %v2240, 0
        %v2249 = vsel %vm1569, %v2242, 0
        %v2252 = vsel %vm1569, %v2244, 0
        %2254 = vmatprep.subr.bf16.mxu0 0
        %2255 = vmatpush1.bf16.xpose.msra.mxu0 %v2249
        %2256 = vmatprep.subr.bf16.mxu0 0
        %2257 = vmatpush1.bf16.xpose.msra.mxu0 %v2252
        %2258 = vmatprep.subr.bf16.mxu0 0
        %2259 = vmatpush1.bf16.xpose.msra.mxu0 0
        %2260 = vmatprep.subr.bf16.mxu0 0
        %2261 = vmatpush1.bf16.xpose.msra.mxu0 0
        %2262 = vmatprep.subr.bf16.mxu0 0
        %2263 = vmatpush1.bf16.xpose.msra.mxu0 0
        %2264 = vmatprep.subr.bf16.mxu0 0
        %2265 = vmatpush1.bf16.xpose.msra.mxu0 0
        %2266 = vmatprep.subr.bf16.mxu0 0
        %2267 = vmatpush1.bf16.xpose.msra.mxu0 0
        %2268 = vmatprep.subr.bf16.mxu0 0
        %2269 = vmatpush1.bf16.xpose.msra.mxu0 0
        %2270 = vmatprep.subr.bf16.mxu0 0
        %2271 = vmatpush1.bf16.xpose.msra.mxu0 0
        %2272 = vmatprep.subr.bf16.mxu0 0
        %2273 = vmatpush1.bf16.xpose.msra.mxu0 0
        %2274 = vmatprep.subr.bf16.mxu0 0
        %2275 = vmatpush1.bf16.xpose.msra.mxu0 0
        %2276 = vmatprep.subr.bf16.mxu0 0
        %2277 = vmatpush1.bf16.xpose.msra.mxu0 0
        %2278 = vmatprep.subr.bf16.mxu0 0
        %2279 = vmatpush1.bf16.xpose.msra.mxu0 0
        %2280 = vmatprep.subr.bf16.mxu0 0
        %2281 = vmatpush1.bf16.xpose.msra.mxu0 0
        %2282 = vmatprep.subr.bf16.mxu0 0
        %2283 = vmatpush1.bf16.xpose.msra.mxu0 0
        %2284 = vmatprep.subr.bf16.mxu0 0
        %2285 = vmatpush1.bf16.xpose.msra.mxu0 0
        %2286 = vmatprep.mubr.bf16.mxu0 0
        %2287 = vmatmul.mubr.bf16.gmra.mrb[0].mxu0 %v2246
        %v2288 = vpop.f32.mrb[0].mxu0
        %v2289 = vadd.f32 0.0, %v2288
        %v2290 = vpop.f32.mrb[0].mxu0
        %v2291 = vpop.f32.mrb[0].mxu0
        %v2292 = vadd.f32 0.0, %v2291
        %v2293 = vpop.f32.mrb[0].mxu0
        %2294 = vdwg.mxu0
        %v2295 = vsel %vm1620, %v2289, -inf
        %2296 = vmax.xlane.f32.xlu0 %v2295
        %v2297 = vpop.xlane.xlu0 %2296
        %v2298 = vsel %vm1620, %v2292, -inf
        %2299 = vmax.xlane.f32.xlu0 %v2298
        %v2300 = vpop.xlane.xlu0 %2299
        %v2301 = vsub.f32 %v2289, %v2297
        %v2302 = vsub.f32 %v2292, %v2300
        %v2303 = vmul.f32 %v2301, 1.442695
        %v2304 = vpow.pop %v2303
        %v2305 = vmul.f32 %v2302, 1.442695
        %v2306 = vpow.pop %v2305
        %v2307 = vsel %vm1620, %v2304, 0.0
        %2308 = vadd.xlane.f32.xlu0 %v2307
        %v2309 = vpop.xlane.xlu0 %2308
        %v2310 = vsel %vm1620, %v2306, 0.0
        %2311 = vadd.xlane.f32.xlu0 %v2310
        %v2312 = vpop.xlane.xlu0 %2311
        %v2313 = vrcp.pop %v2309
        %v2314 = vmul.f32 %v2304, %v2313
        %v2315 = vrcp.pop %v2312
        %v2316 = vmul.f32 %v2306, %v2315
        %v2317 = vpack.c.bf16 %v2316, %v2314
        %2318 = vrot.lane.b32.xlu0 %v1565, 48
        %v2319 = vpop.permute.xlu0 %2318
        %2320 = vrot.lane.b32.xlu0 %v1567, 48
        %v2321 = vpop.permute.xlu0 %2320
        %v2325 = vsel %vm1620, %v2317, 0
        %2327 = vmatprep.subr.bf16.mxu0 0
        %2328 = vmatpush1.bf16.msra.mxu0 %v2319
        %2329 = vmatprep.subr.bf16.mxu0 0
        %2330 = vmatpush1.bf16.msra.mxu0 %v2321
        %2331 = vmatprep.subr.bf16.mxu0 0
        %2332 = vmatpush1.bf16.msra.mxu0 0
        %2333 = vmatprep.subr.bf16.mxu0 0
        %2334 = vmatpush1.bf16.msra.mxu0 0
        %2335 = vmatprep.subr.bf16.mxu0 0
        %2336 = vmatpush1.bf16.msra.mxu0 0
        %2337 = vmatprep.subr.bf16.mxu0 0
        %2338 = vmatpush1.bf16.msra.mxu0 0
        %2339 = vmatprep.subr.bf16.mxu0 0
        %2340 = vmatpush1.bf16.msra.mxu0 0
        %2341 = vmatprep.subr.bf16.mxu0 0
        %2342 = vmatpush1.bf16.msra.mxu0 0
        %2343 = vmatprep.subr.bf16.mxu0 0
        %2344 = vmatpush1.bf16.msra.mxu0 0
        %2345 = vmatprep.subr.bf16.mxu0 0
        %2346 = vmatpush1.bf16.msra.mxu0 0
        %2347 = vmatprep.subr.bf16.mxu0 0
        %2348 = vmatpush1.bf16.msra.mxu0 0
        %2349 = vmatprep.subr.bf16.mxu0 0
        %2350 = vmatpush1.bf16.msra.mxu0 0
        %2351 = vmatprep.subr.bf16.mxu0 0
        %2352 = vmatpush1.bf16.msra.mxu0 0
        %2353 = vmatprep.subr.bf16.mxu0 0
        %2354 = vmatpush1.bf16.msra.mxu0 0
        %2355 = vmatprep.subr.bf16.mxu0 0
        %2356 = vmatpush1.bf16.msra.mxu0 0
        %2357 = vmatprep.subr.bf16.mxu0 0
        %2358 = vmatpush1.bf16.msra.mxu0 0
        %2359 = vmatprep.mubr.bf16.mxu0 0
        %2360 = vmatmul.mubr.bf16.gmra.mrb[0].mxu0 %v2325
        %v2361 = vpop.f32.mrb[0].mxu0
        %v2362 = vadd.f32 0.0, %v2361
        %v2363 = vpop.f32.mrb[0].mxu0
        %v2364 = vpop.f32.mrb[0].mxu0
        %v2365 = vadd.f32 0.0, %v2364
        %v2366 = vpop.f32.mrb[0].mxu0
        %2367 = vdwg.mxu0
        %v2368 = vpack.c.bf16 %v2365, %v2362
        %2370 = vrot.lane.b32.xlu0 %v2368, 80
        %v2371 = vpop.permute.xlu0 %2370
        %vm2373 = vcmask 786048
        %2374 = vst.msk [vmem:[#allocation2] sm:$0xff] %vm2373, %v2371
        %2375 = vrot.lane.b32.xlu0 %v1568, 32
        %v2376 = vpop.permute.xlu0 %2375
        %2377 = vrot.lane.b32.xlu0 %v1564, 32
        %v2378 = vpop.permute.xlu0 %2377
        %2379 = vrot.lane.b32.xlu0 %v1566, 32
        %v2380 = vpop.permute.xlu0 %2379
        %v2382 = vsel %vm1569, %v2376, 0
        %v2385 = vsel %vm1569, %v2378, 0
        %v2388 = vsel %vm1569, %v2380, 0
        %2390 = vmatprep.subr.bf16.mxu0 0
        %2391 = vmatpush1.bf16.xpose.msra.mxu0 %v2385
        %2392 = vmatprep.subr.bf16.mxu0 0
        %2393 = vmatpush1.bf16.xpose.msra.mxu0 %v2388
        %2394 = vmatprep.subr.bf16.mxu0 0
        %2395 = vmatpush1.bf16.xpose.msra.mxu0 0
        %2396 = vmatprep.subr.bf16.mxu0 0
        %2397 = vmatpush1.bf16.xpose.msra.mxu0 0
        %2398 = vmatprep.subr.bf16.mxu0 0
        %2399 = vmatpush1.bf16.xpose.msra.mxu0 0
        %2400 = vmatprep.subr.bf16.mxu0 0
        %2401 = vmatpush1.bf16.xpose.msra.mxu0 0
        %2402 = vmatprep.subr.bf16.mxu0 0
        %2403 = vmatpush1.bf16.xpose.msra.mxu0 0
        %2404 = vmatprep.subr.bf16.mxu0 0
        %2405 = vmatpush1.bf16.xpose.msra.mxu0 0
        %2406 = vmatprep.subr.bf16.mxu0 0
        %2407 = vmatpush1.bf16.xpose.msra.mxu0 0
        %2408 = vmatprep.subr.bf16.mxu0 0
        %2409 = vmatpush1.bf16.xpose.msra.mxu0 0
        %2410 = vmatprep.subr.bf16.mxu0 0
        %2411 = vmatpush1.bf16.xpose.msra.mxu0 0
        %2412 = vmatprep.subr.bf16.mxu0 0
        %2413 = vmatpush1.bf16.xpose.msra.mxu0 0
        %2414 = vmatprep.subr.bf16.mxu0 0
        %2415 = vmatpush1.bf16.xpose.msra.mxu0 0
        %2416 = vmatprep.subr.bf16.mxu0 0
        %2417 = vmatpush1.bf16.xpose.msra.mxu0 0
        %2418 = vmatprep.subr.bf16.mxu0 0
        %2419 = vmatpush1.bf16.xpose.msra.mxu0 0
        %2420 = vmatprep.subr.bf16.mxu0 0
        %2421 = vmatpush1.bf16.xpose.msra.mxu0 0
        %2422 = vmatprep.mubr.bf16.mxu0 0
        %2423 = vmatmul.mubr.bf16.gmra.mrb[0].mxu0 %v2382
        %v2424 = vpop.f32.mrb[0].mxu0
        %v2425 = vadd.f32 0.0, %v2424
        %v2426 = vpop.f32.mrb[0].mxu0
        %v2427 = vpop.f32.mrb[0].mxu0
        %v2428 = vadd.f32 0.0, %v2427
        %v2429 = vpop.f32.mrb[0].mxu0
        %2430 = vdwg.mxu0
        %v2431 = vsel %vm1620, %v2425, -inf
        %2432 = vmax.xlane.f32.xlu0 %v2431
        %v2433 = vpop.xlane.xlu0 %2432
        %v2434 = vsel %vm1620, %v2428, -inf
        %2435 = vmax.xlane.f32.xlu0 %v2434
        %v2436 = vpop.xlane.xlu0 %2435
        %v2437 = vsub.f32 %v2425, %v2433
        %v2438 = vsub.f32 %v2428, %v2436
        %v2439 = vmul.f32 %v2437, 1.442695
        %v2440 = vpow.pop %v2439
        %v2441 = vmul.f32 %v2438, 1.442695
        %v2442 = vpow.pop %v2441
        %v2443 = vsel %vm1620, %v2440, 0.0
        %2444 = vadd.xlane.f32.xlu0 %v2443
        %v2445 = vpop.xlane.xlu0 %2444
        %v2446 = vsel %vm1620, %v2442, 0.0
        %2447 = vadd.xlane.f32.xlu0 %v2446
        %v2448 = vpop.xlane.xlu0 %2447
        %v2449 = vrcp.pop %v2445
        %v2450 = vmul.f32 %v2440, %v2449
        %v2451 = vrcp.pop %v2448
        %v2452 = vmul.f32 %v2442, %v2451
        %v2453 = vpack.c.bf16 %v2452, %v2450
        %2454 = vrot.lane.b32.xlu0 %v1565, 32
        %v2455 = vpop.permute.xlu0 %2454
        %2456 = vrot.lane.b32.xlu0 %v1567, 32
        %v2457 = vpop.permute.xlu0 %2456
        %v2461 = vsel %vm1620, %v2453, 0
        %2463 = vmatprep.subr.bf16.mxu0 0
        %2464 = vmatpush1.bf16.msra.mxu0 %v2455
        %2465 = vmatprep.subr.bf16.mxu0 0
        %2466 = vmatpush1.bf16.msra.mxu0 %v2457
        %2467 = vmatprep.subr.bf16.mxu0 0
        %2468 = vmatpush1.bf16.msra.mxu0 0
        %2469 = vmatprep.subr.bf16.mxu0 0
        %2470 = vmatpush1.bf16.msra.mxu0 0
        %2471 = vmatprep.subr.bf16.mxu0 0
        %2472 = vmatpush1.bf16.msra.mxu0 0
        %2473 = vmatprep.subr.bf16.mxu0 0
        %2474 = vmatpush1.bf16.msra.mxu0 0
        %2475 = vmatprep.subr.bf16.mxu0 0
        %2476 = vmatpush1.bf16.msra.mxu0 0
        %2477 = vmatprep.subr.bf16.mxu0 0
        %2478 = vmatpush1.bf16.msra.mxu0 0
        %2479 = vmatprep.subr.bf16.mxu0 0
        %2480 = vmatpush1.bf16.msra.mxu0 0
        %2481 = vmatprep.subr.bf16.mxu0 0
        %2482 = vmatpush1.bf16.msra.mxu0 0
        %2483 = vmatprep.subr.bf16.mxu0 0
        %2484 = vmatpush1.bf16.msra.mxu0 0
        %2485 = vmatprep.subr.bf16.mxu0 0
        %2486 = vmatpush1.bf16.msra.mxu0 0
        %2487 = vmatprep.subr.bf16.mxu0 0
        %2488 = vmatpush1.bf16.msra.mxu0 0
        %2489 = vmatprep.subr.bf16.mxu0 0
        %2490 = vmatpush1.bf16.msra.mxu0 0
        %2491 = vmatprep.subr.bf16.mxu0 0
        %2492 = vmatpush1.bf16.msra.mxu0 0
        %2493 = vmatprep.subr.bf16.mxu0 0
        %2494 = vmatpush1.bf16.msra.mxu0 0
        %2495 = vmatprep.mubr.bf16.mxu0 0
        %2496 = vmatmul.mubr.bf16.gmra.mrb[0].mxu0 %v2461
        %v2497 = vpop.f32.mrb[0].mxu0
        %v2498 = vadd.f32 0.0, %v2497
        %v2499 = vpop.f32.mrb[0].mxu0
        %v2500 = vpop.f32.mrb[0].mxu0
        %v2501 = vadd.f32 0.0, %v2500
        %v2502 = vpop.f32.mrb[0].mxu0
        %2503 = vdwg.mxu0
        %v2504 = vpack.c.bf16 %v2501, %v2498
        %2506 = vrot.lane.b32.xlu0 %v2504, 96
        %v2507 = vpop.permute.xlu0 %2506
        %vm2509 = vcmask 917248
        %2510 = vst.msk [vmem:[#allocation2] sm:$0xff] %vm2509, %v2507
        %2511 = vrot.lane.b32.xlu0 %v1568, 16
        %v2512 = vpop.permute.xlu0 %2511
        %2513 = vrot.lane.b32.xlu0 %v1564, 16
        %v2514 = vpop.permute.xlu0 %2513
        %2515 = vrot.lane.b32.xlu0 %v1566, 16
        %v2516 = vpop.permute.xlu0 %2515
        %v2518 = vsel %vm1569, %v2512, 0
        %v2521 = vsel %vm1569, %v2514, 0
        %v2524 = vsel %vm1569, %v2516, 0
        %2526 = vmatprep.subr.bf16.mxu0 0
        %2527 = vmatpush1.bf16.xpose.msra.mxu0 %v2521
        %2528 = vmatprep.subr.bf16.mxu0 0
        %2529 = vmatpush1.bf16.xpose.msra.mxu0 %v2524
        %2530 = vmatprep.subr.bf16.mxu0 0
        %2531 = vmatpush1.bf16.xpose.msra.mxu0 0
        %2532 = vmatprep.subr.bf16.mxu0 0
        %2533 = vmatpush1.bf16.xpose.msra.mxu0 0
        %2534 = vmatprep.subr.bf16.mxu0 0
        %2535 = vmatpush1.bf16.xpose.msra.mxu0 0
        %2536 = vmatprep.subr.bf16.mxu0 0
        %2537 = vmatpush1.bf16.xpose.msra.mxu0 0
        %2538 = vmatprep.subr.bf16.mxu0 0
        %2539 = vmatpush1.bf16.xpose.msra.mxu0 0
        %2540 = vmatprep.subr.bf16.mxu0 0
        %2541 = vmatpush1.bf16.xpose.msra.mxu0 0
        %2542 = vmatprep.subr.bf16.mxu0 0
        %2543 = vmatpush1.bf16.xpose.msra.mxu0 0
        %2544 = vmatprep.subr.bf16.mxu0 0
        %2545 = vmatpush1.bf16.xpose.msra.mxu0 0
        %2546 = vmatprep.subr.bf16.mxu0 0
        %2547 = vmatpush1.bf16.xpose.msra.mxu0 0
        %2548 = vmatprep.subr.bf16.mxu0 0
        %2549 = vmatpush1.bf16.xpose.msra.mxu0 0
        %2550 = vmatprep.subr.bf16.mxu0 0
        %2551 = vmatpush1.bf16.xpose.msra.mxu0 0
        %2552 = vmatprep.subr.bf16.mxu0 0
        %2553 = vmatpush1.bf16.xpose.msra.mxu0 0
        %2554 = vmatprep.subr.bf16.mxu0 0
        %2555 = vmatpush1.bf16.xpose.msra.mxu0 0
        %2556 = vmatprep.subr.bf16.mxu0 0
        %2557 = vmatpush1.bf16.xpose.msra.mxu0 0
        %2558 = vmatprep.mubr.bf16.mxu0 0
        %2559 = vmatmul.mubr.bf16.gmra.mrb[0].mxu0 %v2518
        %v2560 = vpop.f32.mrb[0].mxu0
        %v2561 = vadd.f32 0.0, %v2560
        %v2562 = vpop.f32.mrb[0].mxu0
        %v2563 = vpop.f32.mrb[0].mxu0
        %v2564 = vadd.f32 0.0, %v2563
        %v2565 = vpop.f32.mrb[0].mxu0
        %2566 = vdwg.mxu0
        %v2567 = vsel %vm1620, %v2561, -inf
        %2568 = vmax.xlane.f32.xlu0 %v2567
        %v2569 = vpop.xlane.xlu0 %2568
        %v2570 = vsel %vm1620, %v2564, -inf
        %2571 = vmax.xlane.f32.xlu0 %v2570
        %v2572 = vpop.xlane.xlu0 %2571
        %v2573 = vsub.f32 %v2561, %v2569
        %v2574 = vsub.f32 %v2564, %v2572
        %v2575 = vmul.f32 %v2573, 1.442695
        %v2576 = vpow.pop %v2575
        %v2577 = vmul.f32 %v2574, 1.442695
        %v2578 = vpow.pop %v2577
        %v2579 = vsel %vm1620, %v2576, 0.0
        %2580 = vadd.xlane.f32.xlu0 %v2579
        %v2581 = vpop.xlane.xlu0 %2580
        %v2582 = vsel %vm1620, %v2578, 0.0
        %2583 = vadd.xlane.f32.xlu0 %v2582
        %v2584 = vpop.xlane.xlu0 %2583
        %v2585 = vrcp.pop %v2581
        %v2586 = vmul.f32 %v2576, %v2585
        %v2587 = vrcp.pop %v2584
        %v2588 = vmul.f32 %v2578, %v2587
        %v2589 = vpack.c.bf16 %v2588, %v2586
        %2590 = vrot.lane.b32.xlu0 %v1565, 16
        %v2591 = vpop.permute.xlu0 %2590
        %2592 = vrot.lane.b32.xlu0 %v1567, 16
        %v2593 = vpop.permute.xlu0 %2592
        %v2597 = vsel %vm1620, %v2589, 0
        %2599 = vmatprep.subr.bf16.mxu0 0
        %2600 = vmatpush1.bf16.msra.mxu0 %v2591
        %2601 = vmatprep.subr.bf16.mxu0 0
        %2602 = vmatpush1.bf16.msra.mxu0 %v2593
        %2603 = vmatprep.subr.bf16.mxu0 0
        %2604 = vmatpush1.bf16.msra.mxu0 0
        %2605 = vmatprep.subr.bf16.mxu0 0
        %2606 = vmatpush1.bf16.msra.mxu0 0
        %2607 = vmatprep.subr.bf16.mxu0 0
        %2608 = vmatpush1.bf16.msra.mxu0 0
        %2609 = vmatprep.subr.bf16.mxu0 0
        %2610 = vmatpush1.bf16.msra.mxu0 0
        %2611 = vmatprep.subr.bf16.mxu0 0
        %2612 = vmatpush1.bf16.msra.mxu0 0
        %2613 = vmatprep.subr.bf16.mxu0 0
        %2614 = vmatpush1.bf16.msra.mxu0 0
        %2615 = vmatprep.subr.bf16.mxu0 0
        %2616 = vmatpush1.bf16.msra.mxu0 0
        %2617 = vmatprep.subr.bf16.mxu0 0
        %2618 = vmatpush1.bf16.msra.mxu0 0
        %2619 = vmatprep.subr.bf16.mxu0 0
        %2620 = vmatpush1.bf16.msra.mxu0 0
        %2621 = vmatprep.subr.bf16.mxu0 0
        %2622 = vmatpush1.bf16.msra.mxu0 0
        %2623 = vmatprep.subr.bf16.mxu0 0
        %2624 = vmatpush1.bf16.msra.mxu0 0
        %2625 = vmatprep.subr.bf16.mxu0 0
        %2626 = vmatpush1.bf16.msra.mxu0 0
        %2627 = vmatprep.subr.bf16.mxu0 0
        %2628 = vmatpush1.bf16.msra.mxu0 0
        %2629 = vmatprep.subr.bf16.mxu0 0
        %2630 = vmatpush1.bf16.msra.mxu0 0
        %2631 = vmatprep.mubr.bf16.mxu0 0
        %2632 = vmatmul.mubr.bf16.gmra.mrb[0].mxu0 %v2597
        %v2633 = vpop.f32.mrb[0].mxu0
        %v2634 = vadd.f32 0.0, %v2633
        %v2635 = vpop.f32.mrb[0].mxu0
        %v2636 = vpop.f32.mrb[0].mxu0
        %v2637 = vadd.f32 0.0, %v2636
        %v2638 = vpop.f32.mrb[0].mxu0
        %2639 = vdwg.mxu0
        %v2640 = vpack.c.bf16 %v2637, %v2634
        %2642 = vrot.lane.b32.xlu0 %v2640, 112
        %v2643 = vpop.permute.xlu0 %2642
        %vm2645 = vcmask 1048448
        %2646 = vst.msk [vmem:[#allocation2] sm:$0xff] %vm2645, %v2643
        %v2647 = vld [vmem:[#allocation2] sm:$0xff]
        %v2648 = vld [vmem:[#allocation23] sm:$0xf]
        %v2649 = vld [vmem:[#allocation23 + $0x4] sm:$0xf]
        %v2650 = vld [vmem:[#allocation23 + $0x8] sm:$0xf]
        %v2651 = vld [vmem:[#allocation23 + $0xc] sm:$0xf]
        %v2652 = vld [vmem:[#allocation23 + $0x10] sm:$0xf]
        %v2653 = vld [vmem:[#allocation23 + $0x14] sm:$0xf]
        %v2654 = vld [vmem:[#allocation23 + $0x18] sm:$0xf]
        %v2655 = vld [vmem:[#allocation23 + $0x1c] sm:$0xf]
        %v2656 = vld [vmem:[#allocation23 + $0x20] sm:$0xf]
        %v2657 = vld [vmem:[#allocation23 + $0x24] sm:$0xf]
        %v2658 = vld [vmem:[#allocation23 + $0x28] sm:$0xf]
        %v2659 = vld [vmem:[#allocation23 + $0x2c] sm:$0xf]
        %v2660 = vld [vmem:[#allocation23 + $0x30] sm:$0xf]
        %v2661 = vld [vmem:[#allocation23 + $0x34] sm:$0xf]
        %v2662 = vld [vmem:[#allocation23 + $0x38] sm:$0xf]
        %v2663 = vld [vmem:[#allocation23 + $0x3c] sm:$0xf]
        %v2664 = vld [vmem:[#allocation24] sm:$0x1]
        %v2666 = vlaneseq
        %v2667 = vshrl.u32 %v2666, 7
        %v2668 = vsub.s32 0, %v2667
        %v2669 = vrot.slane %v2664, %v2668
        %v2687 = vunpack.c.l.b16 %v2648
        %v2688 = vunpack.c.l.b16 %v2649
        %v2689 = vunpack.c.l.b16 %v2650
        %v2690 = vunpack.c.l.b16 %v2651
        %v2691 = vunpack.c.l.b16 %v2652
        %v2692 = vunpack.c.l.b16 %v2653
        %v2693 = vunpack.c.l.b16 %v2654
        %v2694 = vunpack.c.l.b16 %v2655
        %v2695 = vunpack.c.l.b16 %v2656
        %v2696 = vunpack.c.l.b16 %v2657
        %v2697 = vunpack.c.l.b16 %v2658
        %v2698 = vunpack.c.l.b16 %v2659
        %v2699 = vunpack.c.l.b16 %v2660
        %v2700 = vunpack.c.l.b16 %v2661
        %v2701 = vunpack.c.l.b16 %v2662
        %v2702 = vunpack.c.l.b16 %v2663
        %v2703 = vpack.c.b16 %v2688, %v2687
        %v2704 = vpack.c.b16 %v2690, %v2689
        %v2705 = vpack.c.b16 %v2692, %v2691
        %v2706 = vpack.c.b16 %v2694, %v2693
        %v2707 = vpack.c.b16 %v2696, %v2695
        %v2708 = vpack.c.b16 %v2698, %v2697
        %v2709 = vpack.c.b16 %v2700, %v2699
        %v2710 = vpack.c.b16 %v2702, %v2701
        %2719 = vmatprep.subr.bf16.mxu0 0
        %2720 = vmatpush1.bf16.msra.mxu0 %v2703
        %2721 = vmatprep.subr.bf16.mxu0 0
        %2722 = vmatpush1.bf16.msra.mxu0 %v2704
        %2723 = vmatprep.subr.bf16.mxu0 0
        %2724 = vmatpush1.bf16.msra.mxu0 %v2705
        %2725 = vmatprep.subr.bf16.mxu0 0
        %2726 = vmatpush1.bf16.msra.mxu0 %v2706
        %2727 = vmatprep.subr.bf16.mxu0 0
        %2728 = vmatpush1.bf16.msra.mxu0 %v2707
        %2729 = vmatprep.subr.bf16.mxu0 0
        %2730 = vmatpush1.bf16.msra.mxu0 %v2708
        %2731 = vmatprep.subr.bf16.mxu0 0
        %2732 = vmatpush1.bf16.msra.mxu0 %v2709
        %2733 = vmatprep.subr.bf16.mxu0 0
        %2734 = vmatpush1.bf16.msra.mxu0 %v2710
        %2735 = vmatprep.subr.bf16.mxu0 0
        %2736 = vmatpush1.bf16.msra.mxu0 0
        %2737 = vmatprep.subr.bf16.mxu0 0
        %2738 = vmatpush1.bf16.msra.mxu0 0
        %2739 = vmatprep.subr.bf16.mxu0 0
        %2740 = vmatpush1.bf16.msra.mxu0 0
        %2741 = vmatprep.subr.bf16.mxu0 0
        %2742 = vmatpush1.bf16.msra.mxu0 0
        %2743 = vmatprep.subr.bf16.mxu0 0
        %2744 = vmatpush1.bf16.msra.mxu0 0
        %2745 = vmatprep.subr.bf16.mxu0 0
        %2746 = vmatpush1.bf16.msra.mxu0 0
        %2747 = vmatprep.subr.bf16.mxu0 0
        %2748 = vmatpush1.bf16.msra.mxu0 0
        %2749 = vmatprep.subr.bf16.mxu0 0
        %2750 = vmatpush1.bf16.msra.mxu0 0
        %2751 = vmatprep.mubr.bf16.mxu0 0
        %2752 = vmatmul.mubr.bf16.gmra.mrb[0].mxu0 %v2647
        %v2753 = vpop.f32.mrb[0].mxu0
        %v2754 = vadd.f32 %v2669, %v2753
        %v2755 = vpop.f32.mrb[0].mxu0
        %v2756 = vpop.f32.mrb[0].mxu0
        %v2757 = vadd.f32 %v2669, %v2756
        %v2758 = vpop.f32.mrb[0].mxu0
        %2759 = vdwg.mxu0
        %v2760 = vld [vmem:[#allocation26] sm:$0x1]
        %v2761 = vld [vmem:[#allocation27] sm:$0x1]
        %2762 = vadd.xlane.f32.xlu0 %v2754
        %v2763 = vpop.xlane.xlu0 %2762
        %2764 = vadd.xlane.f32.xlu0 %v2757
        %v2765 = vpop.xlane.xlu0 %2764
        %v2766 = vmul.f32 %v2763, %v888
        %v2767 = vmul.f32 %v2765, %v888
        %v2768 = vsub.f32 %v2754, %v2766
        %v2769 = vsub.f32 %v2757, %v2767
        %v2770 = vmul.f32 %v2768, %v2768
        %v2771 = vmul.f32 %v2769, %v2769
        %2772 = vadd.xlane.f32.xlu0 %v2770
        %v2773 = vpop.xlane.xlu0 %2772
        %2774 = vadd.xlane.f32.xlu0 %v2771
        %v2775 = vpop.xlane.xlu0 %2774
        %v2776 = vmul.f32 %v2773, %v888
        %v2777 = vmul.f32 %v2775, %v888
        %v2778 = vadd.f32 %v2776, 1e-05
        %v2779 = vadd.f32 %v2777, 1e-05
        %v2780 = vrsqrt.pop %v2778
        %v2781 = vrsqrt.pop %v2779
        %v2782 = vmul.f32 %v2768, %v2780
        %v2783 = vmul.f32 %v2769, %v2781
        %v2785 = vlaneseq
        %v2786 = vshrl.u32 %v2785, 7
        %v2787 = vsub.s32 0, %v2786
        %v2788 = vrot.slane %v2760, %v2787
        %v2790 = vmul.f32 %v2782, %v2788
        %v2791 = vmul.f32 %v2783, %v2788
        %v2793 = vlaneseq
        %v2794 = vshrl.u32 %v2793, 7
        %v2795 = vsub.s32 0, %v2794
        %v2796 = vrot.slane %v2761, %v2795
        %v2798 = vadd.f32 %v2790, %v2796
        %v2799 = vadd.f32 %v2791, %v2796
        %v2800 = vpack.c.bf16 %v2799, %v2798
        %v2801 = vld [vmem:[%s18] sm:$0xf]
        %v2802 = vld [vmem:[%s18 + $0x4] sm:$0xf]
        %v2803 = vld [vmem:[%s18 + $0x8] sm:$0xf]
        %v2804 = vld [vmem:[%s18 + $0xc] sm:$0xf]
        %v2805 = vld [vmem:[%s18 + $0x10] sm:$0xf]
        %v2806 = vld [vmem:[%s18 + $0x14] sm:$0xf]
        %v2807 = vld [vmem:[%s18 + $0x18] sm:$0xf]
        %v2808 = vld [vmem:[%s18 + $0x1c] sm:$0xf]
        %v2809 = vld [vmem:[%s18 + $0x20] sm:$0xf]
        %v2810 = vld [vmem:[%s18 + $0x24] sm:$0xf]
        %v2811 = vld [vmem:[%s18 + $0x28] sm:$0xf]
        %v2812 = vld [vmem:[%s18 + $0x2c] sm:$0xf]
        %v2813 = vld [vmem:[%s18 + $0x30] sm:$0xf]
        %v2814 = vld [vmem:[%s18 + $0x34] sm:$0xf]
        %v2815 = vld [vmem:[%s18 + $0x38] sm:$0xf]
        %v2816 = vld [vmem:[%s18 + $0x3c] sm:$0xf]
        %v2817 = vld [vmem:[%s19] sm:$0x1]
        %v2819 = vlaneseq
        %v2820 = vshrl.u32 %v2819, 7
        %v2821 = vsub.s32 0, %v2820
        %v2822 = vrot.slane %v2817, %v2821
        %v2840 = vunpack.c.l.b16 %v2801
        %v2841 = vunpack.c.l.b16 %v2802
        %v2842 = vunpack.c.l.b16 %v2803
        %v2843 = vunpack.c.l.b16 %v2804
        %v2844 = vunpack.c.l.b16 %v2805
        %v2845 = vunpack.c.l.b16 %v2806
        %v2846 = vunpack.c.l.b16 %v2807
        %v2847 = vunpack.c.l.b16 %v2808
        %v2848 = vunpack.c.l.b16 %v2809
        %v2849 = vunpack.c.l.b16 %v2810
        %v2850 = vunpack.c.l.b16 %v2811
        %v2851 = vunpack.c.l.b16 %v2812
        %v2852 = vunpack.c.l.b16 %v2813
        %v2853 = vunpack.c.l.b16 %v2814
        %v2854 = vunpack.c.l.b16 %v2815
        %v2855 = vunpack.c.l.b16 %v2816
        %v2856 = vpack.c.b16 %v2841, %v2840
        %v2857 = vpack.c.b16 %v2843, %v2842
        %v2858 = vpack.c.b16 %v2845, %v2844
        %v2859 = vpack.c.b16 %v2847, %v2846
        %v2860 = vpack.c.b16 %v2849, %v2848
        %v2861 = vpack.c.b16 %v2851, %v2850
        %v2862 = vpack.c.b16 %v2853, %v2852
        %v2863 = vpack.c.b16 %v2855, %v2854
        %2872 = vmatprep.subr.bf16.mxu0 0
        %2873 = vmatpush1.bf16.msra.mxu0 %v2856
        %2874 = vmatprep.subr.bf16.mxu0 0
        %2875 = vmatpush1.bf16.msra.mxu0 %v2857
        %2876 = vmatprep.subr.bf16.mxu0 0
        %2877 = vmatpush1.bf16.msra.mxu0 %v2858
        %2878 = vmatprep.subr.bf16.mxu0 0
        %2879 = vmatpush1.bf16.msra.mxu0 %v2859
        %2880 = vmatprep.subr.bf16.mxu0 0
        %2881 = vmatpush1.bf16.msra.mxu0 %v2860
        %2882 = vmatprep.subr.bf16.mxu0 0
        %2883 = vmatpush1.bf16.msra.mxu0 %v2861
        %2884 = vmatprep.subr.bf16.mxu0 0
        %2885 = vmatpush1.bf16.msra.mxu0 %v2862
        %2886 = vmatprep.subr.bf16.mxu0 0
        %2887 = vmatpush1.bf16.msra.mxu0 %v2863
        %2888 = vmatprep.subr.bf16.mxu0 0
        %2889 = vmatpush1.bf16.msra.mxu0 0
        %2890 = vmatprep.subr.bf16.mxu0 0
        %2891 = vmatpush1.bf16.msra.mxu0 0
        %2892 = vmatprep.subr.bf16.mxu0 0
        %2893 = vmatpush1.bf16.msra.mxu0 0
        %2894 = vmatprep.subr.bf16.mxu0 0
        %2895 = vmatpush1.bf16.msra.mxu0 0
        %2896 = vmatprep.subr.bf16.mxu0 0
        %2897 = vmatpush1.bf16.msra.mxu0 0
        %2898 = vmatprep.subr.bf16.mxu0 0
        %2899 = vmatpush1.bf16.msra.mxu0 0
        %2900 = vmatprep.subr.bf16.mxu0 0
        %2901 = vmatpush1.bf16.msra.mxu0 0
        %2902 = vmatprep.subr.bf16.mxu0 0
        %2903 = vmatpush1.bf16.msra.mxu0 0
        %2904 = vmatprep.mubr.bf16.mxu0 0
        %2905 = vmatmul.mubr.bf16.gmra.mrb[0].mxu0 %v2800
        %v2906 = vpop.f32.mrb[0].mxu0
        %v2907 = vadd.f32 %v2822, %v2906
        %v2908 = vpop.f32.mrb[0].mxu0
        %v2909 = vpop.f32.mrb[0].mxu0
        %v2910 = vadd.f32 %v2822, %v2909
        %v2911 = vpop.f32.mrb[0].mxu0
        %2912 = vdwg.mxu0
        %2913 = vst [vmem:[%s870] sm:$0xff] %v2907
        %2914 = vst [vmem:[%s870 + $0x8] sm:$0xff] %v2910
        %s2915 = sand.u32 %s485, 1
        %s2916 = scalar_lea.sflag [#allocation5], %s2915
        %s2917 = sand.u32 %s485, 1
        %s2918 = smul.addr %s2917, 16
        %s2919 = scalar_lea.vmem [#allocation29], %s2918
        // Predicated region
        $region165: #{tpu_custom_call.1} parent=99 // pred_check
          %p2920 = pneg %p495
        $region166: #{tpu_custom_call.1} parent=99 // pred_check_branch
          %2922 = sbr.rel (%p2920) target = $region168
        $region167: #{tpu_custom_call.1} parent=99 // pred_region
          %s2924 = ssub.s32 256, 256
          %2925 = vsyncadd %s2916, %s2924
          %s2926 = smul.addr %s47, 2
          %s2927 = smul.addr %s2926, 128
          %s2928 = scalar_lea.hbm %s20, %s2927
          %s2929 = sshll.u32 %s2919, 4
          %s2930 = int_to_ptr.vmem [resolvable:$true] %s2929
          %2935 = dma.vmem_to_hbm [thread:$0]  %s2930, 256, %s2928, %s2916, 128, 128, 8
        $region168: #{tpu_custom_call.1} parent=99 // pred_fallthru
          _
      $region100: #{tpu_custom_call.1} parent=5 // pred_fallthru
        _
      %p2936 = scmp.le.s32.totalorder 2, %s42
      // Predicated region
      $region169: #{tpu_custom_call.1} parent=5 // pred_check
        %p2937 = pneg %p2936
      $region170: #{tpu_custom_call.1} parent=5 // pred_check_branch
        %2939 = sbr.rel (%p2937) target = $region172
      $region171: #{tpu_custom_call.1} parent=5 // pred_region
        %s2940 = ssub.s32 %s42, 2
        // Predicated region
        $region173: #{tpu_custom_call.1} parent=171 // pred_check
          %p2941 = pneg %p501
        $region174: #{tpu_custom_call.1} parent=171 // pred_check_branch
          %2943 = sbr.rel (%p2941) target = $region176
        $region175: #{tpu_custom_call.1} parent=171 // pred_region
          %s2944 = sand.u32 %s486, 1
          %s2945 = scalar_lea.sflag [#allocation5], %s2944
          %s2946 = sand.u32 %s486, 1
          %s2947 = smul.addr %s2946, 16
          %s2948 = scalar_lea.vmem [#allocation29], %s2947
          %2949 = dma.done %s2945, 256
        $region176: #{tpu_custom_call.1} parent=171 // pred_fallthru
          _
      $region172: #{tpu_custom_call.1} parent=5 // pred_fallthru
        _
    $region6: #{tpu_custom_call.1} parent=1 // loop_footer
      %s46 = sadd.s32 1, %s42
    $region7: #{tpu_custom_call.1} parent=1 // loop_footer_branch
      %41 = sbr.rel target = $region3
    $region8: #{tpu_custom_call.1} parent=1 // loop_exit
      _
    %2950 = vsyncpa [#allocation4], 1
    %s2951 = scalar_lea.sflag [#allocation4], 1
    %2952 = vsyncpa %s2951, 1
    %2953 = vsyncpa [#allocation7], 1
    %s2954 = scalar_lea.sflag [#allocation7], 1
    %2955 = vsyncpa %s2954, 1
    %2956 = vsyncpa [#allocation10], 1
    %2957 = vsyncpa [#allocation13], 1
    %2958 = vsyncpa [#allocation16], 1
    %2959 = vsyncpa [#allocation19], 1
    %2960 = vsyncpa [#allocation22], 1
    %2961 = vsyncpa [#allocation25], 1
    %2962 = vsyncpa [#allocation28], 1
    %2963 = vsyncpa [#allocation5], 1
    %s2964 = scalar_lea.sflag [#allocation5], 1
    %2965 = vsyncpa %s2964, 1

</llo_original>
